<compile_context>
chip_gen: v5e
topology: v5e:2x2
jax: 0.10.0
libtpu: 0.0.40
codegen_flags: <defaults>
</compile_context>

<pallas_src>
import functools

import jax
import jax.numpy as jnp
from jax import lax
from jax.experimental import pallas as pl
from jax.experimental.pallas import tpu as pltpu


# ----------------------------- Pallas kernel ------------------------------

def _caco_encoders_kernel(patches_ref, convwt_ref, convb_ref,
                          w1_ref, g1_ref, b1_ref,
                          w2_ref, g2_ref, b2_ref,
                          w3_ref, out_ref, acc_ref, *, inv_hw):
    """Grid = (encoder e, image i, spatial lane-tile t [innermost, arbitrary]).

    Per t-step: conv (transposed im2col matmul) + bias + ReLU on a lane-dense
    (9C, T) patch tile per batch row, with global-average-pool partial sums
    accumulated into acc_ref (dim_mlp, B).  On the last t-step: 3-layer MLP
    with per-image BatchNorm + L2 normalize -> (B, dim) output block.
    """
    f32 = jnp.float32
    t = pl.program_id(2)

    @pl.when(t == 0)
    def _():
        acc_ref[...] = jnp.zeros_like(acc_ref)

    wt = convwt_ref[...]                       # (dim_mlp, 9C) bf16
    bias = convb_ref[...]                      # (dim_mlp, 1)  f32
    batch = patches_ref.shape[0]
    cols = []
    for b in range(batch):                     # static unroll; B is small
        x_b = patches_ref[b]                   # (9C, T) bf16, T lane-dense
        s = jnp.dot(wt, x_b, preferred_element_type=f32)   # MXU -> (dim_mlp, T)
        s = jnp.maximum(s + bias, 0.0)                      # VALU: bias + ReLU
        cols.append(jnp.sum(s, axis=1, keepdims=True))      # XLU lane reduce
    acc_ref[...] += jnp.concatenate(cols, axis=1)            # (dim_mlp, B)

    @pl.when(t == pl.num_programs(2) - 1)
    def _():
        feat = acc_ref[...].T * inv_hw         # (B, dim_mlp) f32; tiny transpose, once per image

        def bn_relu(h, gamma, beta):
            # BatchNorm1d training mode: biased batch var, eps=1e-5.
            # Two-pass (mean-subtracted) variance to avoid cancellation.
            mean = jnp.mean(h, axis=0, keepdims=True)
            c = h - mean
            var = jnp.mean(c * c, axis=0, keepdims=True)
            return jnp.maximum(c * lax.rsqrt(var + 1e-5) * gamma + beta, 0.0)

        h1 = bn_relu(jnp.dot(feat.astype(jnp.bfloat16), w1_ref[...],
                             preferred_element_type=f32),
                     g1_ref[...], b1_ref[...])
        h2 = bn_relu(jnp.dot(h1.astype(jnp.bfloat16), w2_ref[...],
                             preferred_element_type=f32),
                     g2_ref[...], b2_ref[...])
        z = jnp.dot(h2.astype(jnp.bfloat16), w3_ref[...],
                    preferred_element_type=f32)               # (B, dim) f32

        # F.normalize(dim=1): x / max(||x||, 1e-12) == x * rsqrt(max(ss, 1e-24))
        ss = jnp.sum(z * z, axis=1, keepdims=True)
        out_ref[...] = z * lax.rsqrt(jnp.maximum(ss, 1e-24))


# ------------------------------- helpers ----------------------------------

def _im2col_3x3_t(x_nchw):
    """3x3 / stride 1 / pad 1 patches, TRANSPOSED: (B,C,H,W) -> (B, 9*C, H*W).

    Row order along the 9*C axis is (tap, channel) with tap = 3*dy + dx,
    matching conv_w's (9*C, dim_mlp) row layout.  H*W is the minor (lane) dim.
    """
    B, C, H, W = x_nchw.shape
    xp = jnp.pad(x_nchw, ((0, 0), (0, 0), (1, 1), (1, 1)))
    taps = [xp[:, :, dy:dy + H, dx:dx + W] for dy in range(3) for dx in range(3)]
    pat = jnp.stack(taps, axis=1)                 # (B, 9, C, H, W)
    return pat.reshape(B, 9 * C, H * W)


def _device_kind():
    try:
        return jax.devices()[0].device_kind.lower()
    except Exception:
        return ""


def _is_v7x():
    kind = _device_kind()
    return ("v7" in kind) or ("7x" in kind)


def _vmem_budget_bytes():
    """Physical per-TensorCore VMEM to budget tiles against."""
    try:
        cap = getattr(pltpu.get_tpu_info(), "vmem_capacity_bytes", 0)
        if cap:
            return int(cap)
    except Exception:
        pass
    kind = _device_kind()
    if ("v7" in kind) or ("7x" in kind):
        return 64 * 2 ** 20
    if ("v5" in kind) or ("v6" in kind):
        return 128 * 2 ** 20
    return 64 * 2 ** 20           # conservative fallback


def _spatial_tile(hw, batch, c, dim_mlp, budget_bytes):
    """Largest multiple-of-128 divisor of hw that fits the VMEM budget.

    Budget uses PADDED sizes: double-buffered patch block
    (batch * pad16(9C) * T bf16) plus ~3x the (dim_mlp, T) f32 conv temps.
    Falls back to a single full-HW (lane-padded) block when hw is not a
    multiple of 128 -- still correct, just less efficient.
    """
    if hw <= 128 or hw % 128 != 0:
        return hw
    sub = ((9 * c + 15) // 16) * 16
    per_lane = 2 * batch * sub * 2 + 3 * dim_mlp * 4
    max_t = max(128, (budget_bytes // 3) // per_lane)
    t = min(hw, (max_t // 128) * 128)
    while hw % t != 0:
        t -= 128
    return max(t, 128)


# ------------------------------- wrappers ---------------------------------

def encoders_forward(stacked_params, im_a, im_b):
    """Run BOTH encoders (params stacked on a leading size-2 axis) on BOTH
    images in one pallas_call.  Returns (2 encoders, 2 images, B, dim).
    BatchNorm statistics are per (encoder, image), matching four independent
    PyTorch encoder calls.
    """
    B, C, H, W = im_a.shape
    hw = H * W
    kc = 9 * C
    bf16 = jnp.bfloat16

    # Lane-dense transposed im2col: (2 images, B, 9C, HW) bf16.
    patches = jnp.stack([_im2col_3x3_t(im_a), _im2col_3x3_t(im_b)],
                        axis=0).astype(bf16)

    dim_mlp = stacked_params["conv_w"].shape[2]
    dim = stacked_params["w3"].shape[2]

    conv_wt = jnp.swapaxes(stacked_params["conv_w"], 1, 2).astype(bf16)  # (2, dim_mlp, 9C)
    conv_b = stacked_params["conv_b"].reshape(2, dim_mlp, 1)             # f32
    w1 = stacked_params["w1"].astype(bf16)                               # (2, dim_mlp, mlp)
    w2 = stacked_params["w2"].astype(bf16)                               # (2, mlp, mlp)
    w3 = stacked_params["w3"].astype(bf16)                               # (2, mlp, dim)
    g1 = stacked_params["g1"].reshape(2, 1, -1)
    b1 = stacked_params["b1"].reshape(2, 1, -1)
    g2 = stacked_params["g2"].reshape(2, 1, -1)
    b2 = stacked_params["b2"].reshape(2, 1, -1)

    budget = _vmem_budget_bytes()
    tile = _spatial_tile(hw, B, C, dim_mlp, budget)
    n_t = hw // tile
    vmem_limit = int(min(budget * 3 // 4, 96 * 2 ** 20))

    if _is_v7x():
        # Engage both v7x TensorCores: one encoder per core.
        dim_sem = (pltpu.CORE_PARALLEL, pltpu.PARALLEL, pltpu.ARBITRARY)
    else:
        dim_sem = ("parallel", "parallel", "arbitrary")

    def enc_spec(arr):
        nd = arr.ndim - 1
        return pl.BlockSpec((None,) + arr.shape[1:],
                            lambda e, i, t, _n=nd: (e,) + (0,) * _n)

    out = pl.pallas_call(
        functools.partial(_caco_encoders_kernel, inv_hw=1.0 / hw),
        out_shape=jax.ShapeDtypeStruct((2, 2, B, dim), jnp.float32),
        grid=(2, 2, n_t),
        in_specs=[
            # one image's lane-dense patch tile per step
            pl.BlockSpec((None, B, kc, tile), lambda e, i, t: (i, 0, 0, t)),
            enc_spec(conv_wt), enc_spec(conv_b),
            enc_spec(w1), enc_spec(g1), enc_spec(b1),
            enc_spec(w2), enc_spec(g2), enc_spec(b2),
            enc_spec(w3),
        ],
        out_specs=pl.BlockSpec((None, None, B, dim), lambda e, i, t: (e, i, 0, 0)),
        scratch_shapes=[pltpu.VMEM((dim_mlp, B), jnp.float32)],
        compiler_params=pltpu.CompilerParams(
            dimension_semantics=dim_sem,
            vmem_limit_bytes=vmem_limit),
    )(patches, conv_wt, conv_b, w1, g1, b1, w2, g2, b2, w3)

    return out


def momentum_update(params_q, params_k, m):
    """param_k <- m * param_k + (1 - m) * param_q (memory-bound EMA; left to XLA)."""
    return jax.tree_util.tree_map(lambda q, k: k * m + q * (1.0 - m),
                                  params_q, params_k)


def caco_forward_sym(params_q, params_k, im_q, im_k, moco_momentum):
    """CaCo.forward(run_type=0): returns (q_pred, k_pred, q, k), new key params."""
    # Momentum update first (no_grad in PyTorch).  encoder_q outputs do not
    # depend on encoder_k params, so fusing all four passes afterwards is
    # equivalent to the PyTorch ordering.
    params_k_new = momentum_update(params_q, params_k, moco_momentum)
    stacked = jax.tree_util.tree_map(lambda a, b: jnp.stack([a, b], axis=0),
                                     params_q, params_k_new)
    out = encoders_forward(stacked, im_q, im_k)        # (encoder, image, B, dim)
    q_pred, k_pred = out[0, 0], out[0, 1]
    q = lax.stop_gradient(out[1, 0])                   # detach() in PyTorch
    k = lax.stop_gradient(out[1, 1])
    return (q_pred, k_pred, q, k), params_k_new

# TODO(synk): self.mu / self.log_sigma linears and reparameterize() are never
# used in CaCo.forward, so they are not implemented here.


# ------------------------------ param setup -------------------------------

def init_params(key, n_bands, dim_mlp, mlp_dim, dim):
    ks = jax.random.split(key, 5)
    scale = 0.05
    return {
        "conv_w": scale * jax.random.normal(ks[0], (9 * n_bands, dim_mlp), jnp.float32),
        "conv_b": scale * jax.random.normal(ks[1], (dim_mlp,), jnp.float32),
        "w1": scale * jax.random.normal(ks[2], (dim_mlp, mlp_dim), jnp.float32),
        "g1": jnp.ones((mlp_dim,), jnp.float32),
        "b1": jnp.zeros((mlp_dim,), jnp.float32),
        "w2": scale * jax.random.normal(ks[3], (mlp_dim, mlp_dim), jnp.float32),
        "g2": jnp.ones((mlp_dim,), jnp.float32),
        "b2": jnp.zeros((mlp_dim,), jnp.float32),
        "w3": scale * jax.random.normal(ks[4], (mlp_dim, dim), jnp.float32),
    }


# ------------------------- pure-JAX reference (test) ----------------------

def _encoder_reference(params, im):
    """Plain-jnp reference of the same (bf16-matmul) encoder math."""
    bf16 = jnp.bfloat16
    pat = _im2col_3x3_t(im).astype(bf16)                    # (B, 9C, HW)
    conv = jnp.einsum("bkt,kd->btd", pat, params["conv_w"].astype(bf16),
                      preferred_element_type=jnp.float32)    # (B, HW, dim_mlp)
    conv = jnp.maximum(conv + params["conv_b"].reshape(1, 1, -1), 0.0)
    feat = conv.mean(axis=1)                                 # (B, dim_mlp)

    def bn_relu(h, gamma, beta):
        mean = jnp.mean(h, axis=0, keepdims=True)
        var = jnp.mean((h - mean) ** 2, axis=0, keepdims=True)
        return jnp.maximum((h - mean) / jnp.sqrt(var + 1e-5) * gamma + beta, 0.0)

    h1 = bn_relu(jnp.dot(feat.astype(bf16), params["w1"].astype(bf16),
                         preferred_element_type=jnp.float32),
                 params["g1"], params["b1"])
    h2 = bn_relu(jnp.dot(h1.astype(bf16), params["w2"].astype(bf16),
                         preferred_element_type=jnp.float32),
                 params["g2"], params["b2"])
    z = jnp.dot(h2.astype(bf16), params["w3"].astype(bf16),
                preferred_element_type=jnp.float32)
    n = jnp.maximum(jnp.linalg.norm(z, axis=1, keepdims=True), 1e-12)
    return z / n


# ---------------------------------- main -----------------------------------

if __name__ == "__main__":
    B, N_BANDS, H, W = 8, 1, 16, 16
    DIM_MLP, MLP_DIM, DIM = 128, 128, 128   # backbone feat dim, args.mlp_dim, dim
    MOCO_M = 0.999

    key = jax.random.PRNGKey(0)
    kp, kq, kk = jax.random.split(key, 3)

    params_q = init_params(kp, N_BANDS, DIM_MLP, MLP_DIM, DIM)
    # encoder_k params are copied from encoder_q in __init__
    params_k = jax.tree_util.tree_map(lambda a: a, params_q)

    im_q = jax.random.normal(kq, (B, N_BANDS, H, W), jnp.float32)   # NCHW like PyTorch
    im_k = jax.random.normal(kk, (B, N_BANDS, H, W), jnp.float32)

    fwd = jax.jit(functools.partial(caco_forward_sym, moco_momentum=MOCO_M))
    (q_pred, k_pred, q, k), params_k_new = fwd(params_q, params_k, im_q, im_k)
    jax.block_until_ready((q_pred, k_pred, q, k, params_k_new))

    # shapes
    assert q_pred.shape == (B, DIM) and k_pred.shape == (B, DIM)
    assert q.shape == (B, DIM) and k.shape == (B, DIM)
    # outputs are finite, rows are unit-norm
    for o in (q_pred, k_pred, q, k):
        assert bool(jnp.all(jnp.isfinite(o)))
        assert bool(jnp.allclose(jnp.linalg.norm(o, axis=1), 1.0, atol=1e-4))
    # momentum EMA of identical params is (numerically) the identity
    assert bool(jnp.allclose(params_k_new["w1"], params_q["w1"], atol=1e-5))
    # encoder_k == encoder_q initially, so key outputs match query outputs
    assert bool(jnp.allclose(q, q_pred, atol=1e-2))
    assert bool(jnp.allclose(k, k_pred, atol=1e-2))
    # Pallas kernel matches the plain-jnp reference of the same math
    assert bool(jnp.allclose(q_pred, _encoder_reference(params_q, im_q), atol=1e-2))
    assert bool(jnp.allclose(k_pred, _encoder_reference(params_q, im_k), atol=1e-2))

    print("KERNEL_OK")
</pallas_src>

<mosaic_0001>
module attributes {stable_mosaic.version = 11 : i64} {
  func.func @_caco_encoders_kernel(%arg0: i32, %arg1: i32, %arg2: i32, %arg3: memref<1x8x9x256xbf16, #tpu.memory_space<vmem>>, %arg4: memref<1x128x9xbf16, #tpu.memory_space<vmem>>, %arg5: memref<1x128x1xf32, #tpu.memory_space<vmem>>, %arg6: memref<1x128x128xbf16, #tpu.memory_space<vmem>>, %arg7: memref<1x1x128xf32, #tpu.memory_space<vmem>>, %arg8: memref<1x1x128xf32, #tpu.memory_space<vmem>>, %arg9: memref<1x128x128xbf16, #tpu.memory_space<vmem>>, %arg10: memref<1x1x128xf32, #tpu.memory_space<vmem>>, %arg11: memref<1x1x128xf32, #tpu.memory_space<vmem>>, %arg12: memref<1x128x128xbf16, #tpu.memory_space<vmem>>, %arg13: memref<1x1x8x128xf32, #tpu.memory_space<vmem>>, %arg14: memref<128x8xf32, #tpu.memory_space<vmem>>) attributes {dimension_semantics = [#tpu.dimension_semantics<parallel>, #tpu.dimension_semantics<parallel>, #tpu.dimension_semantics<arbitrary>], iteration_bounds = array<i64: 2, 2, 1>, scalar_prefetch = 0 : i64, scratch_operands = 1 : i64, tpu.core_type = #tpu.core_type<tc>, window_params = [{transform_indices = @transform_0, window_bounds = array<i64: 1, 8, 9, 256>}, {transform_indices = @transform_1, window_bounds = array<i64: 1, 128, 9>}, {transform_indices = @transform_2, window_bounds = array<i64: 1, 128, 1>}, {transform_indices = @transform_3, window_bounds = array<i64: 1, 128, 128>}, {transform_indices = @transform_4, window_bounds = array<i64: 1, 1, 128>}, {transform_indices = @transform_5, window_bounds = array<i64: 1, 1, 128>}, {transform_indices = @transform_6, window_bounds = array<i64: 1, 128, 128>}, {transform_indices = @transform_7, window_bounds = array<i64: 1, 1, 128>}, {transform_indices = @transform_8, window_bounds = array<i64: 1, 1, 128>}, {transform_indices = @transform_9, window_bounds = array<i64: 1, 128, 128>}, {transform_indices = @transform_10, window_bounds = array<i64: 1, 1, 8, 128>}]} {
    %c0_i32 = arith.constant 0 : i32
    %0 = arith.cmpi eq, %arg2, %c0_i32 : i32
    %1 = arith.extui %0 : i1 to i32
    %c0_i32_0 = arith.constant 0 : i32
    %2 = arith.cmpi ne, %1, %c0_i32_0 : i32
    scf.if %2 {
      %cst_60 = arith.constant 0.000000e+00 : f32
      %86 = vector.broadcast %cst_60 : f32 to vector<128x8xf32>
      %c0_61 = arith.constant 0 : index
      %c0_62 = arith.constant 0 : index
      %87 = vector.load %arg14[%c0_61, %c0_62] : memref<128x8xf32, #tpu.memory_space<vmem>>, vector<128x8xf32>
      tpu.vector_store %arg14[%c0_61, %c0_62], %86 {strides = array<i32>} : memref<128x8xf32, #tpu.memory_space<vmem>>, vector<128x8xf32>,
    } else {
    }
    %c0 = arith.constant 0 : index
    %c0_1 = arith.constant 0 : index
    %c0_2 = arith.constant 0 : index
    %3 = vector.load %arg4[%c0, %c0_1, %c0_2] : memref<1x128x9xbf16, #tpu.memory_space<vmem>>, vector<1x128x9xbf16>
    %4 = vector.shape_cast %3 : vector<1x128x9xbf16> to vector<128x9xbf16>
    %c0_3 = arith.constant 0 : index
    %c0_4 = arith.constant 0 : index
    %c0_5 = arith.constant 0 : index
    %5 = vector.load %arg5[%c0_3, %c0_4, %c0_5] : memref<1x128x1xf32, #tpu.memory_space<vmem>>, vector<1x128x1xf32>
    %6 = vector.shape_cast %5 : vector<1x128x1xf32> to vector<128x1xf32>
    %c0_6 = arith.constant 0 : index
    %c0_7 = arith.constant 0 : index
    %c0_8 = arith.constant 0 : index
    %c0_9 = arith.constant 0 : index
    %7 = vector.load %arg3[%c0_6, %c0_7, %c0_8, %c0_9] : memref<1x8x9x256xbf16, #tpu.memory_space<vmem>>, vector<1x1x9x256xbf16>
    %8 = vector.shape_cast %7 : vector<1x1x9x256xbf16> to vector<9x256xbf16>
    %cst = arith.constant dense<0.000000e+00> : vector<128x256xf32>
    %9 = tpu.matmul %4, %8, %cst {dimension_numbers = #tpu.dot_dimension_numbers<[1], [0], [0], [1], [0, 0, 1, 1], [], []>} : vector<128x9xbf16>, vector<9x256xbf16>, vector<128x256xf32> -> vector<128x256xf32>
    %10 = vector.broadcast %6 : vector<128x1xf32> to vector<128x256xf32>
    %11 = arith.addf %9, %10 : vector<128x256xf32>
    %cst_10 = arith.constant 0.000000e+00 : f32
    %12 = vector.broadcast %cst_10 : f32 to vector<128x256xf32>
    %13 = arith.maximumf %11, %12 : vector<128x256xf32>
    %cst_11 = arith.constant dense<0.000000e+00> : vector<128xf32>
    %14 = vector.multi_reduction <add>, %13, %cst_11 [1] : vector<128x256xf32> to vector<128xf32>
    %15 = vector.shape_cast %14 : vector<128xf32> to vector<128x1xf32>
    %c0_12 = arith.constant 0 : index
    %c1 = arith.constant 1 : index
    %c0_13 = arith.constant 0 : index
    %c0_14 = arith.constant 0 : index
    %16 = vector.load %arg3[%c0_12, %c1, %c0_13, %c0_14] : memref<1x8x9x256xbf16, #tpu.memory_space<vmem>>, vector<1x1x9x256xbf16>
    %17 = vector.shape_cast %16 : vector<1x1x9x256xbf16> to vector<9x256xbf16>
    %cst_15 = arith.constant dense<0.000000e+00> : vector<128x256xf32>
    %18 = tpu.matmul %4, %17, %cst_15 {dimension_numbers = #tpu.dot_dimension_numbers<[1], [0], [0], [1], [0, 0, 1, 1], [], []>} : vector<128x9xbf16>, vector<9x256xbf16>, vector<128x256xf32> -> vector<128x256xf32>
    %19 = vector.broadcast %6 : vector<128x1xf32> to vector<128x256xf32>
    %20 = arith.addf %18, %19 : vector<128x256xf32>
    %cst_16 = arith.constant 0.000000e+00 : f32
    %21 = vector.broadcast %cst_16 : f32 to vector<128x256xf32>
    %22 = arith.maximumf %20, %21 : vector<128x256xf32>
    %cst_17 = arith.constant dense<0.000000e+00> : vector<128xf32>
    %23 = vector.multi_reduction <add>, %22, %cst_17 [1] : vector<128x256xf32> to vector<128xf32>
    %24 = vector.shape_cast %23 : vector<128xf32> to vector<128x1xf32>
    %c0_18 = arith.constant 0 : index
    %c2 = arith.constant 2 : index
    %c0_19 = arith.constant 0 : index
    %c0_20 = arith.constant 0 : index
    %25 = vector.load %arg3[%c0_18, %c2, %c0_19, %c0_20] : memref<1x8x9x256xbf16, #tpu.memory_space<vmem>>, vector<1x1x9x256xbf16>
    %26 = vector.shape_cast %25 : vector<1x1x9x256xbf16> to vector<9x256xbf16>
    %cst_21 = arith.constant dense<0.000000e+00> : vector<128x256xf32>
    %27 = tpu.matmul %4, %26, %cst_21 {dimension_numbers = #tpu.dot_dimension_numbers<[1], [0], [0], [1], [0, 0, 1, 1], [], []>} : vector<128x9xbf16>, vector<9x256xbf16>, vector<128x256xf32> -> vector<128x256xf32>
    %28 = vector.broadcast %6 : vector<128x1xf32> to vector<128x256xf32>
    %29 = arith.addf %27, %28 : vector<128x256xf32>
    %cst_22 = arith.constant 0.000000e+00 : f32
    %30 = vector.broadcast %cst_22 : f32 to vector<128x256xf32>
    %31 = arith.maximumf %29, %30 : vector<128x256xf32>
    %cst_23 = arith.constant dense<0.000000e+00> : vector<128xf32>
    %32 = vector.multi_reduction <add>, %31, %cst_23 [1] : vector<128x256xf32> to vector<128xf32>
    %33 = vector.shape_cast %32 : vector<128xf32> to vector<128x1xf32>
    %c0_24 = arith.constant 0 : index
    %c3 = arith.constant 3 : index
    %c0_25 = arith.constant 0 : index
    %c0_26 = arith.constant 0 : index
    %34 = vector.load %arg3[%c0_24, %c3, %c0_25, %c0_26] : memref<1x8x9x256xbf16, #tpu.memory_space<vmem>>, vector<1x1x9x256xbf16>
    %35 = vector.shape_cast %34 : vector<1x1x9x256xbf16> to vector<9x256xbf16>
    %cst_27 = arith.constant dense<0.000000e+00> : vector<128x256xf32>
    %36 = tpu.matmul %4, %35, %cst_27 {dimension_numbers = #tpu.dot_dimension_numbers<[1], [0], [0], [1], [0, 0, 1, 1], [], []>} : vector<128x9xbf16>, vector<9x256xbf16>, vector<128x256xf32> -> vector<128x256xf32>
    %37 = vector.broadcast %6 : vector<128x1xf32> to vector<128x256xf32>
    %38 = arith.addf %36, %37 : vector<128x256xf32>
    %cst_28 = arith.constant 0.000000e+00 : f32
    %39 = vector.broadcast %cst_28 : f32 to vector<128x256xf32>
    %40 = arith.maximumf %38, %39 : vector<128x256xf32>
    %cst_29 = arith.constant dense<0.000000e+00> : vector<128xf32>
    %41 = vector.multi_reduction <add>, %40, %cst_29 [1] : vector<128x256xf32> to vector<128xf32>
    %42 = vector.shape_cast %41 : vector<128xf32> to vector<128x1xf32>
    %c0_30 = arith.constant 0 : index
    %c4 = arith.constant 4 : index
    %c0_31 = arith.constant 0 : index
    %c0_32 = arith.constant 0 : index
    %43 = vector.load %arg3[%c0_30, %c4, %c0_31, %c0_32] : memref<1x8x9x256xbf16, #tpu.memory_space<vmem>>, vector<1x1x9x256xbf16>
    %44 = vector.shape_cast %43 : vector<1x1x9x256xbf16> to vector<9x256xbf16>
    %cst_33 = arith.constant dense<0.000000e+00> : vector<128x256xf32>
    %45 = tpu.matmul %4, %44, %cst_33 {dimension_numbers = #tpu.dot_dimension_numbers<[1], [0], [0], [1], [0, 0, 1, 1], [], []>} : vector<128x9xbf16>, vector<9x256xbf16>, vector<128x256xf32> -> vector<128x256xf32>
    %46 = vector.broadcast %6 : vector<128x1xf32> to vector<128x256xf32>
    %47 = arith.addf %45, %46 : vector<128x256xf32>
    %cst_34 = arith.constant 0.000000e+00 : f32
    %48 = vector.broadcast %cst_34 : f32 to vector<128x256xf32>
    %49 = arith.maximumf %47, %48 : vector<128x256xf32>
    %cst_35 = arith.constant dense<0.000000e+00> : vector<128xf32>
    %50 = vector.multi_reduction <add>, %49, %cst_35 [1] : vector<128x256xf32> to vector<128xf32>
    %51 = vector.shape_cast %50 : vector<128xf32> to vector<128x1xf32>
    %c0_36 = arith.constant 0 : index
    %c5 = arith.constant 5 : index
    %c0_37 = arith.constant 0 : index
    %c0_38 = arith.constant 0 : index
    %52 = vector.load %arg3[%c0_36, %c5, %c0_37, %c0_38] : memref<1x8x9x256xbf16, #tpu.memory_space<vmem>>, vector<1x1x9x256xbf16>
    %53 = vector.shape_cast %52 : vector<1x1x9x256xbf16> to vector<9x256xbf16>
    %cst_39 = arith.constant dense<0.000000e+00> : vector<128x256xf32>
    %54 = tpu.matmul %4, %53, %cst_39 {dimension_numbers = #tpu.dot_dimension_numbers<[1], [0], [0], [1], [0, 0, 1, 1], [], []>} : vector<128x9xbf16>, vector<9x256xbf16>, vector<128x256xf32> -> vector<128x256xf32>
    %55 = vector.broadcast %6 : vector<128x1xf32> to vector<128x256xf32>
    %56 = arith.addf %54, %55 : vector<128x256xf32>
    %cst_40 = arith.constant 0.000000e+00 : f32
    %57 = vector.broadcast %cst_40 : f32 to vector<128x256xf32>
    %58 = arith.maximumf %56, %57 : vector<128x256xf32>
    %cst_41 = arith.constant dense<0.000000e+00> : vector<128xf32>
    %59 = vector.multi_reduction <add>, %58, %cst_41 [1] : vector<128x256xf32> to vector<128xf32>
    %60 = vector.shape_cast %59 : vector<128xf32> to vector<128x1xf32>
    %c0_42 = arith.constant 0 : index
    %c6 = arith.constant 6 : index
    %c0_43 = arith.constant 0 : index
    %c0_44 = arith.constant 0 : index
    %61 = vector.load %arg3[%c0_42, %c6, %c0_43, %c0_44] : memref<1x8x9x256xbf16, #tpu.memory_space<vmem>>, vector<1x1x9x256xbf16>
    %62 = vector.shape_cast %61 : vector<1x1x9x256xbf16> to vector<9x256xbf16>
    %cst_45 = arith.constant dense<0.000000e+00> : vector<128x256xf32>
    %63 = tpu.matmul %4, %62, %cst_45 {dimension_numbers = #tpu.dot_dimension_numbers<[1], [0], [0], [1], [0, 0, 1, 1], [], []>} : vector<128x9xbf16>, vector<9x256xbf16>, vector<128x256xf32> -> vector<128x256xf32>
    %64 = vector.broadcast %6 : vector<128x1xf32> to vector<128x256xf32>
    %65 = arith.addf %63, %64 : vector<128x256xf32>
    %cst_46 = arith.constant 0.000000e+00 : f32
    %66 = vector.broadcast %cst_46 : f32 to vector<128x256xf32>
    %67 = arith.maximumf %65, %66 : vector<128x256xf32>
    %cst_47 = arith.constant dense<0.000000e+00> : vector<128xf32>
    %68 = vector.multi_reduction <add>, %67, %cst_47 [1] : vector<128x256xf32> to vector<128xf32>
    %69 = vector.shape_cast %68 : vector<128xf32> to vector<128x1xf32>
    %c0_48 = arith.constant 0 : index
    %c7 = arith.constant 7 : index
    %c0_49 = arith.constant 0 : index
    %c0_50 = arith.constant 0 : index
    %70 = vector.load %arg3[%c0_48, %c7, %c0_49, %c0_50] : memref<1x8x9x256xbf16, #tpu.memory_space<vmem>>, vector<1x1x9x256xbf16>
    %71 = vector.shape_cast %70 : vector<1x1x9x256xbf16> to vector<9x256xbf16>
    %cst_51 = arith.constant dense<0.000000e+00> : vector<128x256xf32>
    %72 = tpu.matmul %4, %71, %cst_51 {dimension_numbers = #tpu.dot_dimension_numbers<[1], [0], [0], [1], [0, 0, 1, 1], [], []>} : vector<128x9xbf16>, vector<9x256xbf16>, vector<128x256xf32> -> vector<128x256xf32>
    %73 = vector.broadcast %6 : vector<128x1xf32> to vector<128x256xf32>
    %74 = arith.addf %72, %73 : vector<128x256xf32>
    %cst_52 = arith.constant 0.000000e+00 : f32
    %75 = vector.broadcast %cst_52 : f32 to vector<128x256xf32>
    %76 = arith.maximumf %74, %75 : vector<128x256xf32>
    %cst_53 = arith.constant dense<0.000000e+00> : vector<128xf32>
    %77 = vector.multi_reduction <add>, %76, %cst_53 [1] : vector<128x256xf32> to vector<128xf32>
    %78 = vector.shape_cast %77 : vector<128xf32> to vector<128x1xf32>
    %c0_54 = arith.constant 0 : index
    %c0_55 = arith.constant 0 : index
    %79 = vector.load %arg14[%c0_54, %c0_55] : memref<128x8xf32, #tpu.memory_space<vmem>>, vector<128x8xf32>
    %80 = tpu.concatenate %15, %24, %33, %42, %51, %60, %69, %78 in 1 : vector<128x1xf32>, vector<128x1xf32>, vector<128x1xf32>, vector<128x1xf32>, vector<128x1xf32>, vector<128x1xf32>, vector<128x1xf32>, vector<128x1xf32> -> vector<128x8xf32>
    %81 = arith.addf %79, %80 : vector<128x8xf32>
    %c0_56 = arith.constant 0 : index
    %c0_57 = arith.constant 0 : index
    %82 = vector.load %arg14[%c0_56, %c0_57] : memref<128x8xf32, #tpu.memory_space<vmem>>, vector<128x8xf32>
    tpu.vector_store %arg14[%c0_56, %c0_57], %81 {strides = array<i32>} : memref<128x8xf32, #tpu.memory_space<vmem>>, vector<128x8xf32>,
    %c0_i32_58 = arith.constant 0 : i32
    %83 = arith.cmpi eq, %arg2, %c0_i32_58 : i32
    %84 = arith.extui %83 : i1 to i32
    %c0_i32_59 = arith.constant 0 : i32
    %85 = arith.cmpi ne, %84, %c0_i32_59 : i32
    scf.if %85 {
      %c0_60 = arith.constant 0 : index
      %c0_61 = arith.constant 0 : index
      %86 = vector.load %arg14[%c0_60, %c0_61] : memref<128x8xf32, #tpu.memory_space<vmem>>, vector<128x8xf32>
      %87 = tpu.transpose %86, [1, 0] : vector<128x8xf32> -> vector<8x128xf32>
      %cst_62 = arith.constant 3.906250e-03 : f32
      %88 = vector.broadcast %cst_62 : f32 to vector<8x128xf32>
      %89 = arith.mulf %87, %88 : vector<8x128xf32>
      %90 = arith.truncf %89 : vector<8x128xf32> to vector<8x128xbf16>
      %c0_63 = arith.constant 0 : index
      %c0_64 = arith.constant 0 : index
      %c0_65 = arith.constant 0 : index
      %91 = vector.load %arg6[%c0_63, %c0_64, %c0_65] : memref<1x128x128xbf16, #tpu.memory_space<vmem>>, vector<1x128x128xbf16>
      %92 = vector.shape_cast %91 : vector<1x128x128xbf16> to vector<128x128xbf16>
      %cst_66 = arith.constant dense<0.000000e+00> : vector<8x128xf32>
      %93 = tpu.matmul %90, %92, %cst_66 {dimension_numbers = #tpu.dot_dimension_numbers<[1], [0], [0], [1], [0, 0, 1, 1], [], []>} : vector<8x128xbf16>, vector<128x128xbf16>, vector<8x128xf32> -> vector<8x128xf32>
      %c0_67 = arith.constant 0 : index
      %c0_68 = arith.constant 0 : index
      %c0_69 = arith.constant 0 : index
      %94 = vector.load %arg7[%c0_67, %c0_68, %c0_69] : memref<1x1x128xf32, #tpu.memory_space<vmem>>, vector<1x1x128xf32>
      %95 = vector.shape_cast %94 : vector<1x1x128xf32> to vector<1x128xf32>
      %c0_70 = arith.constant 0 : index
      %c0_71 = arith.constant 0 : index
      %c0_72 = arith.constant 0 : index
      %96 = vector.load %arg8[%c0_70, %c0_71, %c0_72] : memref<1x1x128xf32, #tpu.memory_space<vmem>>, vector<1x1x128xf32>
      %97 = vector.shape_cast %96 : vector<1x1x128xf32> to vector<1x128xf32>
      %cst_73 = arith.constant dense<0.000000e+00> : vector<128xf32>
      %98 = vector.multi_reduction <add>, %93, %cst_73 [0] : vector<8x128xf32> to vector<128xf32>
      %99 = vector.shape_cast %98 : vector<128xf32> to vector<1x128xf32>
      %cst_74 = arith.constant 8.000000e+00 : f32
      %100 = vector.broadcast %cst_74 : f32 to vector<1x128xf32>
      %101 = arith.divf %99, %100 : vector<1x128xf32>
      %102 = vector.broadcast %101 : vector<1x128xf32> to vector<8x128xf32>
      %103 = arith.subf %93, %102 : vector<8x128xf32>
      %104 = arith.mulf %103, %103 : vector<8x128xf32>
      %cst_75 = arith.constant dense<0.000000e+00> : vector<128xf32>
      %105 = vector.multi_reduction <add>, %104, %cst_75 [0] : vector<8x128xf32> to vector<128xf32>
      %106 = vector.shape_cast %105 : vector<128xf32> to vector<1x128xf32>
      %cst_76 = arith.constant 8.000000e+00 : f32
      %107 = vector.broadcast %cst_76 : f32 to vector<1x128xf32>
      %108 = arith.divf %106, %107 : vector<1x128xf32>
      %cst_77 = arith.constant 9.99999974E-6 : f32
      %109 = vector.broadcast %cst_77 : f32 to vector<1x128xf32>
      %110 = arith.addf %108, %109 : vector<1x128xf32>
      %111 = math.rsqrt %110 : vector<1x128xf32>
      %112 = vector.broadcast %111 : vector<1x128xf32> to vector<8x128xf32>
      %113 = arith.mulf %103, %112 : vector<8x128xf32>
      %114 = vector.broadcast %95 : vector<1x128xf32> to vector<8x128xf32>
      %115 = arith.mulf %113, %114 : vector<8x128xf32>
      %116 = vector.broadcast %97 : vector<1x128xf32> to vector<8x128xf32>
      %117 = arith.addf %115, %116 : vector<8x128xf32>
      %cst_78 = arith.constant 0.000000e+00 : f32
      %118 = vector.broadcast %cst_78 : f32 to vector<8x128xf32>
      %119 = arith.maximumf %117, %118 : vector<8x128xf32>
      %120 = arith.truncf %119 : vector<8x128xf32> to vector<8x128xbf16>
      %c0_79 = arith.constant 0 : index
      %c0_80 = arith.constant 0 : index
      %c0_81 = arith.constant 0 : index
      %121 = vector.load %arg9[%c0_79, %c0_80, %c0_81] : memref<1x128x128xbf16, #tpu.memory_space<vmem>>, vector<1x128x128xbf16>
      %122 = vector.shape_cast %121 : vector<1x128x128xbf16> to vector<128x128xbf16>
      %cst_82 = arith.constant dense<0.000000e+00> : vector<8x128xf32>
      %123 = tpu.matmul %120, %122, %cst_82 {dimension_numbers = #tpu.dot_dimension_numbers<[1], [0], [0], [1], [0, 0, 1, 1], [], []>} : vector<8x128xbf16>, vector<128x128xbf16>, vector<8x128xf32> -> vector<8x128xf32>
      %c0_83 = arith.constant 0 : index
      %c0_84 = arith.constant 0 : index
      %c0_85 = arith.constant 0 : index
      %124 = vector.load %arg10[%c0_83, %c0_84, %c0_85] : memref<1x1x128xf32, #tpu.memory_space<vmem>>, vector<1x1x128xf32>
      %125 = vector.shape_cast %124 : vector<1x1x128xf32> to vector<1x128xf32>
      %c0_86 = arith.constant 0 : index
      %c0_87 = arith.constant 0 : index
      %c0_88 = arith.constant 0 : index
      %126 = vector.load %arg11[%c0_86, %c0_87, %c0_88] : memref<1x1x128xf32, #tpu.memory_space<vmem>>, vector<1x1x128xf32>
      %127 = vector.shape_cast %126 : vector<1x1x128xf32> to vector<1x128xf32>
      %cst_89 = arith.constant dense<0.000000e+00> : vector<128xf32>
      %128 = vector.multi_reduction <add>, %123, %cst_89 [0] : vector<8x128xf32> to vector<128xf32>
      %129 = vector.shape_cast %128 : vector<128xf32> to vector<1x128xf32>
      %cst_90 = arith.constant 8.000000e+00 : f32
      %130 = vector.broadcast %cst_90 : f32 to vector<1x128xf32>
      %131 = arith.divf %129, %130 : vector<1x128xf32>
      %132 = vector.broadcast %131 : vector<1x128xf32> to vector<8x128xf32>
      %133 = arith.subf %123, %132 : vector<8x128xf32>
      %134 = arith.mulf %133, %133 : vector<8x128xf32>
      %cst_91 = arith.constant dense<0.000000e+00> : vector<128xf32>
      %135 = vector.multi_reduction <add>, %134, %cst_91 [0] : vector<8x128xf32> to vector<128xf32>
      %136 = vector.shape_cast %135 : vector<128xf32> to vector<1x128xf32>
      %cst_92 = arith.constant 8.000000e+00 : f32
      %137 = vector.broadcast %cst_92 : f32 to vector<1x128xf32>
      %138 = arith.divf %136, %137 : vector<1x128xf32>
      %cst_93 = arith.constant 9.99999974E-6 : f32
      %139 = vector.broadcast %cst_93 : f32 to vector<1x128xf32>
      %140 = arith.addf %138, %139 : vector<1x128xf32>
      %141 = math.rsqrt %140 : vector<1x128xf32>
      %142 = vector.broadcast %141 : vector<1x128xf32> to vector<8x128xf32>
      %143 = arith.mulf %133, %142 : vector<8x128xf32>
      %144 = vector.broadcast %125 : vector<1x128xf32> to vector<8x128xf32>
      %145 = arith.mulf %143, %144 : vector<8x128xf32>
      %146 = vector.broadcast %127 : vector<1x128xf32> to vector<8x128xf32>
      %147 = arith.addf %145, %146 : vector<8x128xf32>
      %cst_94 = arith.constant 0.000000e+00 : f32
      %148 = vector.broadcast %cst_94 : f32 to vector<8x128xf32>
      %149 = arith.maximumf %147, %148 : vector<8x128xf32>
      %150 = arith.truncf %149 : vector<8x128xf32> to vector<8x128xbf16>
      %c0_95 = arith.constant 0 : index
      %c0_96 = arith.constant 0 : index
      %c0_97 = arith.constant 0 : index
      %151 = vector.load %arg12[%c0_95, %c0_96, %c0_97] : memref<1x128x128xbf16, #tpu.memory_space<vmem>>, vector<1x128x128xbf16>
      %152 = vector.shape_cast %151 : vector<1x128x128xbf16> to vector<128x128xbf16>
      %cst_98 = arith.constant dense<0.000000e+00> : vector<8x128xf32>
      %153 = tpu.matmul %150, %152, %cst_98 {dimension_numbers = #tpu.dot_dimension_numbers<[1], [0], [0], [1], [0, 0, 1, 1], [], []>} : vector<8x128xbf16>, vector<128x128xbf16>, vector<8x128xf32> -> vector<8x128xf32>
      %154 = arith.mulf %153, %153 : vector<8x128xf32>
      %cst_99 = arith.constant dense<0.000000e+00> : vector<8xf32>
      %155 = vector.multi_reduction <add>, %154, %cst_99 [1] : vector<8x128xf32> to vector<8xf32>
      %156 = vector.shape_cast %155 : vector<8xf32> to vector<8x1xf32>
      %cst_100 = arith.constant 1.000000e-24 : f32
      %157 = vector.broadcast %cst_100 : f32 to vector<8x1xf32>
      %158 = arith.maximumf %156, %157 : vector<8x1xf32>
      %159 = math.rsqrt %158 : vector<8x1xf32>
      %160 = vector.broadcast %159 : vector<8x1xf32> to vector<8x128xf32>
      %161 = arith.mulf %153, %160 : vector<8x128xf32>
      %c0_101 = arith.constant 0 : index
      %c0_102 = arith.constant 0 : index
      %c0_103 = arith.constant 0 : index
      %c0_104 = arith.constant 0 : index
      %162 = vector.load %arg13[%c0_101, %c0_102, %c0_103, %c0_104] : memref<1x1x8x128xf32, #tpu.memory_space<vmem>>, vector<1x1x8x128xf32>
      %163 = vector.shape_cast %162 : vector<1x1x8x128xf32> to vector<8x128xf32>
      %164 = vector.shape_cast %161 : vector<8x128xf32> to vector<1x1x8x128xf32>
      tpu.vector_store %arg13[%c0_101, %c0_102, %c0_103, %c0_104], %164 {strides = array<i32>} : memref<1x1x8x128xf32, #tpu.memory_space<vmem>>, vector<1x1x8x128xf32>,
    } else {
    }
    return
  }
  func.func @transform_0(%arg0: i32, %arg1: i32, %arg2: i32) -> (i32, i32, i32, i32) {
    %c0_i32 = arith.constant 0 : i32
    %c0_i32_0 = arith.constant 0 : i32
    %c0_i32_1 = arith.constant 0 : i32
    return %arg1, %c0_i32, %c0_i32_0, %arg2 : i32, i32, i32, i32
  }
  func.func @transform_1(%arg0: i32, %arg1: i32, %arg2: i32) -> (i32, i32, i32) {
    %c0_i32 = arith.constant 0 : i32
    %c0_i32_0 = arith.constant 0 : i32
    %c0_i32_1 = arith.constant 0 : i32
    return %arg0, %c0_i32, %c0_i32_0 : i32, i32, i32
  }
  func.func @transform_2(%arg0: i32, %arg1: i32, %arg2: i32) -> (i32, i32, i32) {
    %c0_i32 = arith.constant 0 : i32
    %c0_i32_0 = arith.constant 0 : i32
    %c0_i32_1 = arith.constant 0 : i32
    return %arg0, %c0_i32, %c0_i32_0 : i32, i32, i32
  }
  func.func @transform_3(%arg0: i32, %arg1: i32, %arg2: i32) -> (i32, i32, i32) {
    %c0_i32 = arith.constant 0 : i32
    %c0_i32_0 = arith.constant 0 : i32
    %c0_i32_1 = arith.constant 0 : i32
    return %arg0, %c0_i32, %c0_i32_0 : i32, i32, i32
  }
  func.func @transform_4(%arg0: i32, %arg1: i32, %arg2: i32) -> (i32, i32, i32) {
    %c0_i32 = arith.constant 0 : i32
    %c0_i32_0 = arith.constant 0 : i32
    %c0_i32_1 = arith.constant 0 : i32
    return %arg0, %c0_i32, %c0_i32_0 : i32, i32, i32
  }
  func.func @transform_5(%arg0: i32, %arg1: i32, %arg2: i32) -> (i32, i32, i32) {
    %c0_i32 = arith.constant 0 : i32
    %c0_i32_0 = arith.constant 0 : i32
    %c0_i32_1 = arith.constant 0 : i32
    return %arg0, %c0_i32, %c0_i32_0 : i32, i32, i32
  }
  func.func @transform_6(%arg0: i32, %arg1: i32, %arg2: i32) -> (i32, i32, i32) {
    %c0_i32 = arith.constant 0 : i32
    %c0_i32_0 = arith.constant 0 : i32
    %c0_i32_1 = arith.constant 0 : i32
    return %arg0, %c0_i32, %c0_i32_0 : i32, i32, i32
  }
  func.func @transform_7(%arg0: i32, %arg1: i32, %arg2: i32) -> (i32, i32, i32) {
    %c0_i32 = arith.constant 0 : i32
    %c0_i32_0 = arith.constant 0 : i32
    %c0_i32_1 = arith.constant 0 : i32
    return %arg0, %c0_i32, %c0_i32_0 : i32, i32, i32
  }
  func.func @transform_8(%arg0: i32, %arg1: i32, %arg2: i32) -> (i32, i32, i32) {
    %c0_i32 = arith.constant 0 : i32
    %c0_i32_0 = arith.constant 0 : i32
    %c0_i32_1 = arith.constant 0 : i32
    return %arg0, %c0_i32, %c0_i32_0 : i32, i32, i32
  }
  func.func @transform_9(%arg0: i32, %arg1: i32, %arg2: i32) -> (i32, i32, i32) {
    %c0_i32 = arith.constant 0 : i32
    %c0_i32_0 = arith.constant 0 : i32
    %c0_i32_1 = arith.constant 0 : i32
    return %arg0, %c0_i32, %c0_i32_0 : i32, i32, i32
  }
  func.func @transform_10(%arg0: i32, %arg1: i32, %arg2: i32) -> (i32, i32, i32, i32) {
    %c0_i32 = arith.constant 0 : i32
    %c0_i32_0 = arith.constant 0 : i32
    %c0_i32_1 = arith.constant 0 : i32
    return %arg0, %arg1, %c0_i32, %c0_i32_0 : i32, i32, i32, i32
  }
}

</mosaic_0001>

<llo_original>
// kernel: caco_forward_sym.1
$region0: #{caco_forward_sym.1}
  #allocation0 [shape = 'u32[]', space=smem, size = 0x4, offset = 0x4, fixed_abs, tag = 'smem constant byte address 0x4 - core index']
  #allocation1 [shape = 'u32[72,128]{1,0:T(1,128)}', space=vmem, size = 0x9000, scoped, tag = 'internal scratch']
  #allocation2 [shape = 'f32[128,8]{1,0:T(8,128)}', space=vmem, size = 0x10000, scoped, tag = 'scratch operand']
  %s0 = inlined_call_operand.vmem [shape: bf16[2,8,9,256], index: 0, kind: input, shape index: {}]
  %s1 = inlined_call_operand.vmem [shape: bf16[2,128,9], index: 1, kind: input, shape index: {}]
  %s2 = inlined_call_operand.vmem [shape: f32[2,128,1], index: 2, kind: input, shape index: {}]
  %s3 = inlined_call_operand.vmem [shape: bf16[2,128,128], index: 3, kind: input, shape index: {}]
  %s4 = inlined_call_operand.vmem [shape: f32[2,1,128], index: 4, kind: input, shape index: {}]
  %s5 = inlined_call_operand.vmem [shape: f32[2,1,128], index: 5, kind: input, shape index: {}]
  %s6 = inlined_call_operand.vmem [shape: bf16[2,128,128], index: 6, kind: input, shape index: {}]
  %s7 = inlined_call_operand.vmem [shape: f32[2,1,128], index: 7, kind: input, shape index: {}]
  %s8 = inlined_call_operand.vmem [shape: f32[2,1,128], index: 8, kind: input, shape index: {}]
  %s9 = inlined_call_operand.vmem [shape: bf16[2,128,128], index: 9, kind: input, shape index: {}]
  %s10 = inlined_call_operand.vmem [shape: f32[2,2,8,128], index: 10, kind: output, shape index: {}]
  %s11 = sld [smem:[#allocation0]]
  $region81: #{caco_forward_sym.1} parent=0
    _
  %s13 = ssub.s32 1, %s11
  %s14 = scalar_select 0, %s13, %s11
  loop: start=0, step=1, limit=6
  $region2: #{caco_forward_sym.1} parent=0 // loop_pre_header
    _
  $region3: #{caco_forward_sym.1} parent=0 // loop_header
    %s16 = sphi 0, %s20
    %p17 = scmp.ge.s32.totalorder %s16, 6
    %s23 = sphi 0, %s42
    %s24 = sphi 0, %s38
    %s25 = sphi 0, %s34
    %s26 = sphi 0, %s23
    %s27 = sphi 0, %s24
    %s28 = sphi 0, %s25
    %s29 = sphi 0, %s26
    %s30 = sphi 0, %s27
    %s31 = sphi 0, %s28
    %s47 = sphi 0, %s49
    %s50 = sphi 0, %s47
    %s51 = sphi 0, %s50
    %s67 = sphi 0, %s51
    %s73 = sphi 0, %s75
    %s76 = sphi 0, %s73
    %s77 = sphi 0, %s76
    %s93 = sphi 0, %s77
    %s99 = sphi 0, %s101
    %s102 = sphi 0, %s99
    %s103 = sphi 0, %s102
    %s119 = sphi 0, %s103
    %s125 = sphi 0, %s127
    %s128 = sphi 0, %s125
    %s129 = sphi 0, %s128
    %s145 = sphi 0, %s129
    %s151 = sphi 0, %s153
    %s154 = sphi 0, %s151
    %s155 = sphi 0, %s154
    %s171 = sphi 0, %s155
    %s177 = sphi 0, %s179
    %s180 = sphi 0, %s177
    %s181 = sphi 0, %s180
    %s197 = sphi 0, %s181
    %s203 = sphi 0, %s205
    %s206 = sphi 0, %s203
    %s207 = sphi 0, %s206
    %s223 = sphi 0, %s207
    %s229 = sphi 0, %s231
    %s232 = sphi 0, %s229
    %s233 = sphi 0, %s232
    %s249 = sphi 0, %s233
    %s255 = sphi 0, %s257
    %s258 = sphi 0, %s255
    %s259 = sphi 0, %s258
    %s275 = sphi 0, %s259
    %s281 = sphi 0, %s283
    %s284 = sphi 0, %s281
    %s285 = sphi 0, %s284
    %s301 = sphi 0, %s285
    %s309 = sphi 0, %s311
    %s312 = sphi 0, %s309
    %s313 = sphi 0, %s312
    %s329 = sphi 0, %s313
  $region4: #{caco_forward_sym.1} parent=0 // loop_header_branch
    %19 = sbr.rel (%p17) target = $region8
  $region5: #{caco_forward_sym.1} parent=0 // loop_body
    %s21 = ssub.s32 %s16, 1
    %s22 = ssub.s32 %s16, 2
    %s32 = sadd.s32 1, %s25
    %p33 = scmp.ge.s32.totalorder %s32, 1
    %s34 = scalar_select %p33, 0, %s32
    %s35 = sadd.s32 1, %s24
    %s36 = scalar_select %p33, %s35, %s24
    %p37 = scmp.ge.s32.totalorder %s36, 2
    %s38 = scalar_select %p37, 0, %s36
    %s39 = sadd.s32 1, %s23
    %s40 = scalar_select %p37, %s39, %s23
    %p41 = scmp.ge.s32.totalorder %s40, 2
    %s42 = scalar_select %p41, 0, %s40
    %s43 = ssub.s32 %s24, %s38
    %s44 = ssub.s32 %s25, %s34
    %s45 = sor.u32 %s43, %s44
    %p46 = scmp.eq.s32.totalorder %s45, 0
    %s48 = sadd.s32 %s47, 1
    %s49 = scalar_select %p46, %s47, %s48
    %p52 = pneg %p46
    %p53 = scmp.eq.s32.totalorder %s16, 3
    %p54 = por %p52, %p53
    %p55 = scmp.ne.s32.totalorder %s47, %s50
    %p56 = scmp.eq.s32.totalorder %s16, 0
    %p57 = por %p55, %p56
    %p58 = scmp.ne.s32.totalorder %s47, %s50
    %p59 = scmp.eq.s32.totalorder %s21, 3
    %p60 = por %p58, %p59
    %p61 = scmp.ne.s32.totalorder %s50, %s51
    %p62 = scmp.eq.s32.totalorder %s21, 0
    %p63 = por %p61, %p62
    %p64 = scmp.ne.s32.totalorder %s50, %s51
    %p65 = scmp.eq.s32.totalorder %s22, 3
    %p66 = por %p64, %p65
    %p68 = scmp.ne.s32.totalorder %s51, %s67
    %p69 = scmp.eq.s32.totalorder %s22, 0
    %p70 = por %p68, %p69
    %s71 = ssub.s32 %s23, %s42
    %p72 = scmp.eq.s32.totalorder %s71, 0
    %s74 = sadd.s32 %s73, 1
    %s75 = scalar_select %p72, %s73, %s74
    %p78 = pneg %p72
    %p79 = scmp.eq.s32.totalorder %s16, 3
    %p80 = por %p78, %p79
    %p81 = scmp.ne.s32.totalorder %s73, %s76
    %p82 = scmp.eq.s32.totalorder %s16, 0
    %p83 = por %p81, %p82
    %p84 = scmp.ne.s32.totalorder %s73, %s76
    %p85 = scmp.eq.s32.totalorder %s21, 3
    %p86 = por %p84, %p85
    %p87 = scmp.ne.s32.totalorder %s76, %s77
    %p88 = scmp.eq.s32.totalorder %s21, 0
    %p89 = por %p87, %p88
    %p90 = scmp.ne.s32.totalorder %s76, %s77
    %p91 = scmp.eq.s32.totalorder %s22, 3
    %p92 = por %p90, %p91
    %p94 = scmp.ne.s32.totalorder %s77, %s93
    %p95 = scmp.eq.s32.totalorder %s22, 0
    %p96 = por %p94, %p95
    %s97 = ssub.s32 %s23, %s42
    %p98 = scmp.eq.s32.totalorder %s97, 0
    %s100 = sadd.s32 %s99, 1
    %s101 = scalar_select %p98, %s99, %s100
    %p104 = pneg %p98
    %p105 = scmp.eq.s32.totalorder %s16, 3
    %p106 = por %p104, %p105
    %p107 = scmp.ne.s32.totalorder %s99, %s102
    %p108 = scmp.eq.s32.totalorder %s16, 0
    %p109 = por %p107, %p108
    %p110 = scmp.ne.s32.totalorder %s99, %s102
    %p111 = scmp.eq.s32.totalorder %s21, 3
    %p112 = por %p110, %p111
    %p113 = scmp.ne.s32.totalorder %s102, %s103
    %p114 = scmp.eq.s32.totalorder %s21, 0
    %p115 = por %p113, %p114
    %p116 = scmp.ne.s32.totalorder %s102, %s103
    %p117 = scmp.eq.s32.totalorder %s22, 3
    %p118 = por %p116, %p117
    %p120 = scmp.ne.s32.totalorder %s103, %s119
    %p121 = scmp.eq.s32.totalorder %s22, 0
    %p122 = por %p120, %p121
    %s123 = ssub.s32 %s23, %s42
    %p124 = scmp.eq.s32.totalorder %s123, 0
    %s126 = sadd.s32 %s125, 1
    %s127 = scalar_select %p124, %s125, %s126
    %p130 = pneg %p124
    %p131 = scmp.eq.s32.totalorder %s16, 3
    %p132 = por %p130, %p131
    %p133 = scmp.ne.s32.totalorder %s125, %s128
    %p134 = scmp.eq.s32.totalorder %s16, 0
    %p135 = por %p133, %p134
    %p136 = scmp.ne.s32.totalorder %s125, %s128
    %p137 = scmp.eq.s32.totalorder %s21, 3
    %p138 = por %p136, %p137
    %p139 = scmp.ne.s32.totalorder %s128, %s129
    %p140 = scmp.eq.s32.totalorder %s21, 0
    %p141 = por %p139, %p140
    %p142 = scmp.ne.s32.totalorder %s128, %s129
    %p143 = scmp.eq.s32.totalorder %s22, 3
    %p144 = por %p142, %p143
    %p146 = scmp.ne.s32.totalorder %s129, %s145
    %p147 = scmp.eq.s32.totalorder %s22, 0
    %p148 = por %p146, %p147
    %s149 = ssub.s32 %s23, %s42
    %p150 = scmp.eq.s32.totalorder %s149, 0
    %s152 = sadd.s32 %s151, 1
    %s153 = scalar_select %p150, %s151, %s152
    %p156 = pneg %p150
    %p157 = scmp.eq.s32.totalorder %s16, 3
    %p158 = por %p156, %p157
    %p159 = scmp.ne.s32.totalorder %s151, %s154
    %p160 = scmp.eq.s32.totalorder %s16, 0
    %p161 = por %p159, %p160
    %p162 = scmp.ne.s32.totalorder %s151, %s154
    %p163 = scmp.eq.s32.totalorder %s21, 3
    %p164 = por %p162, %p163
    %p165 = scmp.ne.s32.totalorder %s154, %s155
    %p166 = scmp.eq.s32.totalorder %s21, 0
    %p167 = por %p165, %p166
    %p168 = scmp.ne.s32.totalorder %s154, %s155
    %p169 = scmp.eq.s32.totalorder %s22, 3
    %p170 = por %p168, %p169
    %p172 = scmp.ne.s32.totalorder %s155, %s171
    %p173 = scmp.eq.s32.totalorder %s22, 0
    %p174 = por %p172, %p173
    %s175 = ssub.s32 %s23, %s42
    %p176 = scmp.eq.s32.totalorder %s175, 0
    %s178 = sadd.s32 %s177, 1
    %s179 = scalar_select %p176, %s177, %s178
    %p182 = pneg %p176
    %p183 = scmp.eq.s32.totalorder %s16, 3
    %p184 = por %p182, %p183
    %p185 = scmp.ne.s32.totalorder %s177, %s180
    %p186 = scmp.eq.s32.totalorder %s16, 0
    %p187 = por %p185, %p186
    %p188 = scmp.ne.s32.totalorder %s177, %s180
    %p189 = scmp.eq.s32.totalorder %s21, 3
    %p190 = por %p188, %p189
    %p191 = scmp.ne.s32.totalorder %s180, %s181
    %p192 = scmp.eq.s32.totalorder %s21, 0
    %p193 = por %p191, %p192
    %p194 = scmp.ne.s32.totalorder %s180, %s181
    %p195 = scmp.eq.s32.totalorder %s22, 3
    %p196 = por %p194, %p195
    %p198 = scmp.ne.s32.totalorder %s181, %s197
    %p199 = scmp.eq.s32.totalorder %s22, 0
    %p200 = por %p198, %p199
    %s201 = ssub.s32 %s23, %s42
    %p202 = scmp.eq.s32.totalorder %s201, 0
    %s204 = sadd.s32 %s203, 1
    %s205 = scalar_select %p202, %s203, %s204
    %p208 = pneg %p202
    %p209 = scmp.eq.s32.totalorder %s16, 3
    %p210 = por %p208, %p209
    %p211 = scmp.ne.s32.totalorder %s203, %s206
    %p212 = scmp.eq.s32.totalorder %s16, 0
    %p213 = por %p211, %p212
    %p214 = scmp.ne.s32.totalorder %s203, %s206
    %p215 = scmp.eq.s32.totalorder %s21, 3
    %p216 = por %p214, %p215
    %p217 = scmp.ne.s32.totalorder %s206, %s207
    %p218 = scmp.eq.s32.totalorder %s21, 0
    %p219 = por %p217, %p218
    %p220 = scmp.ne.s32.totalorder %s206, %s207
    %p221 = scmp.eq.s32.totalorder %s22, 3
    %p222 = por %p220, %p221
    %p224 = scmp.ne.s32.totalorder %s207, %s223
    %p225 = scmp.eq.s32.totalorder %s22, 0
    %p226 = por %p224, %p225
    %s227 = ssub.s32 %s23, %s42
    %p228 = scmp.eq.s32.totalorder %s227, 0
    %s230 = sadd.s32 %s229, 1
    %s231 = scalar_select %p228, %s229, %s230
    %p234 = pneg %p228
    %p235 = scmp.eq.s32.totalorder %s16, 3
    %p236 = por %p234, %p235
    %p237 = scmp.ne.s32.totalorder %s229, %s232
    %p238 = scmp.eq.s32.totalorder %s16, 0
    %p239 = por %p237, %p238
    %p240 = scmp.ne.s32.totalorder %s229, %s232
    %p241 = scmp.eq.s32.totalorder %s21, 3
    %p242 = por %p240, %p241
    %p243 = scmp.ne.s32.totalorder %s232, %s233
    %p244 = scmp.eq.s32.totalorder %s21, 0
    %p245 = por %p243, %p244
    %p246 = scmp.ne.s32.totalorder %s232, %s233
    %p247 = scmp.eq.s32.totalorder %s22, 3
    %p248 = por %p246, %p247
    %p250 = scmp.ne.s32.totalorder %s233, %s249
    %p251 = scmp.eq.s32.totalorder %s22, 0
    %p252 = por %p250, %p251
    %s253 = ssub.s32 %s23, %s42
    %p254 = scmp.eq.s32.totalorder %s253, 0
    %s256 = sadd.s32 %s255, 1
    %s257 = scalar_select %p254, %s255, %s256
    %p260 = pneg %p254
    %p261 = scmp.eq.s32.totalorder %s16, 3
    %p262 = por %p260, %p261
    %p263 = scmp.ne.s32.totalorder %s255, %s258
    %p264 = scmp.eq.s32.totalorder %s16, 0
    %p265 = por %p263, %p264
    %p266 = scmp.ne.s32.totalorder %s255, %s258
    %p267 = scmp.eq.s32.totalorder %s21, 3
    %p268 = por %p266, %p267
    %p269 = scmp.ne.s32.totalorder %s258, %s259
    %p270 = scmp.eq.s32.totalorder %s21, 0
    %p271 = por %p269, %p270
    %p272 = scmp.ne.s32.totalorder %s258, %s259
    %p273 = scmp.eq.s32.totalorder %s22, 3
    %p274 = por %p272, %p273
    %p276 = scmp.ne.s32.totalorder %s259, %s275
    %p277 = scmp.eq.s32.totalorder %s22, 0
    %p278 = por %p276, %p277
    %s279 = ssub.s32 %s23, %s42
    %p280 = scmp.eq.s32.totalorder %s279, 0
    %s282 = sadd.s32 %s281, 1
    %s283 = scalar_select %p280, %s281, %s282
    %p286 = pneg %p280
    %p287 = scmp.eq.s32.totalorder %s16, 3
    %p288 = por %p286, %p287
    %p289 = scmp.ne.s32.totalorder %s281, %s284
    %p290 = scmp.eq.s32.totalorder %s16, 0
    %p291 = por %p289, %p290
    %p292 = scmp.ne.s32.totalorder %s281, %s284
    %p293 = scmp.eq.s32.totalorder %s21, 3
    %p294 = por %p292, %p293
    %p295 = scmp.ne.s32.totalorder %s284, %s285
    %p296 = scmp.eq.s32.totalorder %s21, 0
    %p297 = por %p295, %p296
    %p298 = scmp.ne.s32.totalorder %s284, %s285
    %p299 = scmp.eq.s32.totalorder %s22, 3
    %p300 = por %p298, %p299
    %p302 = scmp.ne.s32.totalorder %s285, %s301
    %p303 = scmp.eq.s32.totalorder %s22, 0
    %p304 = por %p302, %p303
    %s305 = ssub.s32 %s23, %s42
    %s306 = ssub.s32 %s24, %s38
    %s307 = sor.u32 %s305, %s306
    %p308 = scmp.eq.s32.totalorder %s307, 0
    %s310 = sadd.s32 %s309, 1
    %s311 = scalar_select %p308, %s309, %s310
    %p314 = pneg %p308
    %p315 = scmp.eq.s32.totalorder %s16, 3
    %p316 = por %p314, %p315
    %p317 = scmp.ne.s32.totalorder %s309, %s312
    %p318 = scmp.eq.s32.totalorder %s16, 0
    %p319 = por %p317, %p318
    %p320 = scmp.ne.s32.totalorder %s309, %s312
    %p321 = scmp.eq.s32.totalorder %s21, 3
    %p322 = por %p320, %p321
    %p323 = scmp.ne.s32.totalorder %s312, %s313
    %p324 = scmp.eq.s32.totalorder %s21, 0
    %p325 = por %p323, %p324
    %p326 = scmp.ne.s32.totalorder %s312, %s313
    %p327 = scmp.eq.s32.totalorder %s22, 3
    %p328 = por %p326, %p327
    %p330 = scmp.ne.s32.totalorder %s313, %s329
    %p331 = scmp.eq.s32.totalorder %s22, 0
    %p332 = por %p330, %p331
    %p333 = scmp.le.s32.totalorder 1, %s16
    %p334 = scmp.lt.s32.totalorder %s16, 5
    %p335 = pnand %p333, %p334
    %p336 = pneg %p335
    // Predicated region
    $region9: #{caco_forward_sym.1} parent=5 // pred_check
      _
    $region10: #{caco_forward_sym.1} parent=5 // pred_check_branch
      %338 = sbr.rel (%p335) target = $region12
    $region11: #{caco_forward_sym.1} parent=5 // pred_region
      %s339 = ssub.s32 %s16, 1
    $region12: #{caco_forward_sym.1} parent=5 // pred_fallthru
      _
    %p340 = scmp.lt.s32.totalorder %s16, 4
    // Predicated region
    $region13: #{caco_forward_sym.1} parent=5 // pred_check
      %p341 = pneg %p340
    $region14: #{caco_forward_sym.1} parent=5 // pred_check_branch
      %343 = sbr.rel (%p341) target = $region16
    $region15: #{caco_forward_sym.1} parent=5 // pred_region
      // Predicated region
      $region17: #{caco_forward_sym.1} parent=15 // pred_check
        %p344 = pneg %p57
      $region18: #{caco_forward_sym.1} parent=15 // pred_check_branch
        %346 = sbr.rel (%p344) target = $region20
      $region19: #{caco_forward_sym.1} parent=15 // pred_region
        %s347 = smul.u32 2, %s25
        %p348 = scmp.lt.s32.totalorder %s24, 1
        %s349 = scalar_select %p348, %s24, 1
        %p350 = scmp.lt.s32.totalorder %s347, 1
        %s351 = scalar_select %p350, %s347, 1
        %s352 = smul.addr %s349, 32
        %s353 = sadd.s32 %s351, %s352
        %s354 = smul.addr %s353, 4
        %s355 = scalar_lea.vmem %s0, %s354
        %s356 = smul.u32 2, %s25
      $region20: #{caco_forward_sym.1} parent=15 // pred_fallthru
        _
      // Predicated region
      $region21: #{caco_forward_sym.1} parent=15 // pred_check
        %p357 = pneg %p83
      $region22: #{caco_forward_sym.1} parent=15 // pred_check_branch
        %359 = sbr.rel (%p357) target = $region24
      $region23: #{caco_forward_sym.1} parent=15 // pred_region
        %p360 = scmp.lt.s32.totalorder %s23, 1
        %s361 = scalar_select %p360, %s23, 1
        %s362 = smul.addr %s361, 16
        %s363 = smul.addr %s362, 4
        %s364 = scalar_lea.vmem %s1, %s363
      $region24: #{caco_forward_sym.1} parent=15 // pred_fallthru
        _
      // Predicated region
      $region25: #{caco_forward_sym.1} parent=15 // pred_check
        %p365 = pneg %p109
      $region26: #{caco_forward_sym.1} parent=15 // pred_check_branch
        %367 = sbr.rel (%p365) target = $region28
      $region27: #{caco_forward_sym.1} parent=15 // pred_region
        %p368 = scmp.lt.s32.totalorder %s23, 1
        %s369 = scalar_select %p368, %s23, 1
        %s370 = smul.addr %s369, 16
        %s371 = smul.addr %s370, 8
        %s372 = scalar_lea.vmem %s2, %s371
      $region28: #{caco_forward_sym.1} parent=15 // pred_fallthru
        _
      // Predicated region
      $region29: #{caco_forward_sym.1} parent=15 // pred_check
        %p373 = pneg %p135
      $region30: #{caco_forward_sym.1} parent=15 // pred_check_branch
        %375 = sbr.rel (%p373) target = $region32
      $region31: #{caco_forward_sym.1} parent=15 // pred_region
        %p376 = scmp.lt.s32.totalorder %s23, 1
        %s377 = scalar_select %p376, %s23, 1
        %s378 = smul.addr %s377, 16
        %s379 = smul.addr %s378, 4
        %s380 = scalar_lea.vmem %s3, %s379
      $region32: #{caco_forward_sym.1} parent=15 // pred_fallthru
        _
      // Predicated region
      $region33: #{caco_forward_sym.1} parent=15 // pred_check
        %p381 = pneg %p161
      $region34: #{caco_forward_sym.1} parent=15 // pred_check_branch
        %383 = sbr.rel (%p381) target = $region36
      $region35: #{caco_forward_sym.1} parent=15 // pred_region
        %p384 = scmp.lt.s32.totalorder %s23, 1
        %s385 = scalar_select %p384, %s23, 1
        %s386 = scalar_lea.vmem %s4, %s385
      $region36: #{caco_forward_sym.1} parent=15 // pred_fallthru
        _
      // Predicated region
      $region37: #{caco_forward_sym.1} parent=15 // pred_check
        %p387 = pneg %p187
      $region38: #{caco_forward_sym.1} parent=15 // pred_check_branch
        %389 = sbr.rel (%p387) target = $region40
      $region39: #{caco_forward_sym.1} parent=15 // pred_region
        %p390 = scmp.lt.s32.totalorder %s23, 1
        %s391 = scalar_select %p390, %s23, 1
        %s392 = scalar_lea.vmem %s5, %s391
      $region40: #{caco_forward_sym.1} parent=15 // pred_fallthru
        _
      // Predicated region
      $region41: #{caco_forward_sym.1} parent=15 // pred_check
        %p393 = pneg %p213
      $region42: #{caco_forward_sym.1} parent=15 // pred_check_branch
        %395 = sbr.rel (%p393) target = $region44
      $region43: #{caco_forward_sym.1} parent=15 // pred_region
        %p396 = scmp.lt.s32.totalorder %s23, 1
        %s397 = scalar_select %p396, %s23, 1
        %s398 = smul.addr %s397, 16
        %s399 = smul.addr %s398, 4
        %s400 = scalar_lea.vmem %s6, %s399
      $region44: #{caco_forward_sym.1} parent=15 // pred_fallthru
        _
      // Predicated region
      $region45: #{caco_forward_sym.1} parent=15 // pred_check
        %p401 = pneg %p239
      $region46: #{caco_forward_sym.1} parent=15 // pred_check_branch
        %403 = sbr.rel (%p401) target = $region48
      $region47: #{caco_forward_sym.1} parent=15 // pred_region
        %p404 = scmp.lt.s32.totalorder %s23, 1
        %s405 = scalar_select %p404, %s23, 1
        %s406 = scalar_lea.vmem %s7, %s405
      $region48: #{caco_forward_sym.1} parent=15 // pred_fallthru
        _
      // Predicated region
      $region49: #{caco_forward_sym.1} parent=15 // pred_check
        %p407 = pneg %p265
      $region50: #{caco_forward_sym.1} parent=15 // pred_check_branch
        %409 = sbr.rel (%p407) target = $region52
      $region51: #{caco_forward_sym.1} parent=15 // pred_region
        %p410 = scmp.lt.s32.totalorder %s23, 1
        %s411 = scalar_select %p410, %s23, 1
        %s412 = scalar_lea.vmem %s8, %s411
      $region52: #{caco_forward_sym.1} parent=15 // pred_fallthru
        _
      // Predicated region
      $region53: #{caco_forward_sym.1} parent=15 // pred_check
        %p413 = pneg %p291
      $region54: #{caco_forward_sym.1} parent=15 // pred_check_branch
        %415 = sbr.rel (%p413) target = $region56
      $region55: #{caco_forward_sym.1} parent=15 // pred_region
        %p416 = scmp.lt.s32.totalorder %s23, 1
        %s417 = scalar_select %p416, %s23, 1
        %s418 = smul.addr %s417, 16
        %s419 = smul.addr %s418, 4
        %s420 = scalar_lea.vmem %s9, %s419
      $region56: #{caco_forward_sym.1} parent=15 // pred_fallthru
        _
    $region16: #{caco_forward_sym.1} parent=5 // pred_fallthru
      _
    %p421 = scmp.le.s32.totalorder 1, %s16
    %p422 = scmp.lt.s32.totalorder %s16, 5
    %p423 = pnand %p421, %p422
    %p424 = pneg %p423
    // Predicated region
    $region57: #{caco_forward_sym.1} parent=5 // pred_check
      _
    $region58: #{caco_forward_sym.1} parent=5 // pred_check_branch
      %426 = sbr.rel (%p423) target = $region60
    $region59: #{caco_forward_sym.1} parent=5 // pred_region
      %s427 = ssub.s32 %s16, 1
      %s428 = smul.u32 2, %s28
      %p429 = scmp.lt.s32.totalorder %s27, 1
      %s430 = scalar_select %p429, %s27, 1
      %p431 = scmp.lt.s32.totalorder %s428, 1
      %s432 = scalar_select %p431, %s428, 1
      %s433 = smul.addr %s430, 32
      %s434 = sadd.s32 %s432, %s433
      %s435 = smul.addr %s434, 4
      %s436 = scalar_lea.vmem %s0, %s435
      %p437 = pneg %p63
      %p438 = pneg %p60
      %p439 = scmp.lt.s32.totalorder %s26, 1
      %s440 = scalar_select %p439, %s26, 1
      %s441 = smul.addr %s440, 16
      %s442 = smul.addr %s441, 4
      %s443 = scalar_lea.vmem %s1, %s442
      %p444 = pneg %p89
      %p445 = pneg %p86
      %p446 = scmp.lt.s32.totalorder %s26, 1
      %s447 = scalar_select %p446, %s26, 1
      %s448 = smul.addr %s447, 16
      %s449 = smul.addr %s448, 8
      %s450 = scalar_lea.vmem %s2, %s449
      %p451 = pneg %p115
      %p452 = pneg %p112
      %p453 = scmp.lt.s32.totalorder %s26, 1
      %s454 = scalar_select %p453, %s26, 1
      %s455 = smul.addr %s454, 16
      %s456 = smul.addr %s455, 4
      %s457 = scalar_lea.vmem %s3, %s456
      %p458 = pneg %p141
      %p459 = pneg %p138
      %p460 = scmp.lt.s32.totalorder %s26, 1
      %s461 = scalar_select %p460, %s26, 1
      %s462 = scalar_lea.vmem %s4, %s461
      %p463 = pneg %p167
      %p464 = pneg %p164
      %p465 = scmp.lt.s32.totalorder %s26, 1
      %s466 = scalar_select %p465, %s26, 1
      %s467 = scalar_lea.vmem %s5, %s466
      %p468 = pneg %p193
      %p469 = pneg %p190
      %p470 = scmp.lt.s32.totalorder %s26, 1
      %s471 = scalar_select %p470, %s26, 1
      %s472 = smul.addr %s471, 16
      %s473 = smul.addr %s472, 4
      %s474 = scalar_lea.vmem %s6, %s473
      %p475 = pneg %p219
      %p476 = pneg %p216
      %p477 = scmp.lt.s32.totalorder %s26, 1
      %s478 = scalar_select %p477, %s26, 1
      %s479 = scalar_lea.vmem %s7, %s478
      %p480 = pneg %p245
      %p481 = pneg %p242
      %p482 = scmp.lt.s32.totalorder %s26, 1
      %s483 = scalar_select %p482, %s26, 1
      %s484 = scalar_lea.vmem %s8, %s483
      %p485 = pneg %p271
      %p486 = pneg %p268
      %p487 = scmp.lt.s32.totalorder %s26, 1
      %s488 = scalar_select %p487, %s26, 1
      %s489 = smul.addr %s488, 16
      %s490 = smul.addr %s489, 4
      %s491 = scalar_lea.vmem %s9, %s490
      %p492 = pneg %p297
      %p493 = pneg %p294
      %p494 = pneg %p325
      %p495 = pneg %p322
      %p496 = scmp.lt.s32.totalorder %s26, 1
      %s497 = scalar_select %p496, %s26, 1
      %p498 = scmp.lt.s32.totalorder %s27, 1
      %s499 = scalar_select %p498, %s27, 1
      %s500 = smul.addr %s497, 2
      %s501 = sadd.s32 %s499, %s500
      %s502 = smul.addr %s501, 8
      %s503 = scalar_lea.vmem %s10, %s502
      %s504 = smul.u32 2, %s28
      %p505 = scmp.lt.s32.totalorder %s27, 1
      %s506 = scalar_select %p505, %s27, 1
      %p507 = scmp.lt.s32.totalorder %s504, 1
      %s508 = scalar_select %p507, %s504, 1
      %s509 = smul.addr %s506, 32
      %s510 = sadd.s32 %s508, %s509
      %s511 = smul.addr %s510, 4
      %s512 = scalar_lea.vmem %s0, %s511
      %s513 = smul.u32 2, %s28
      %p514 = scmp.lt.s32.totalorder %s26, 1
      %s515 = scalar_select %p514, %s26, 1
      %s516 = smul.addr %s515, 16
      %s517 = smul.addr %s516, 4
      %s518 = scalar_lea.vmem %s1, %s517
      %p519 = scmp.lt.s32.totalorder %s26, 1
      %s520 = scalar_select %p519, %s26, 1
      %s521 = smul.addr %s520, 16
      %s522 = smul.addr %s521, 8
      %s523 = scalar_lea.vmem %s2, %s522
      %p524 = scmp.lt.s32.totalorder %s26, 1
      %s525 = scalar_select %p524, %s26, 1
      %s526 = smul.addr %s525, 16
      %s527 = smul.addr %s526, 4
      %s528 = scalar_lea.vmem %s3, %s527
      %p529 = scmp.lt.s32.totalorder %s26, 1
      %s530 = scalar_select %p529, %s26, 1
      %s531 = scalar_lea.vmem %s4, %s530
      %p532 = scmp.lt.s32.totalorder %s26, 1
      %s533 = scalar_select %p532, %s26, 1
      %s534 = scalar_lea.vmem %s5, %s533
      %p535 = scmp.lt.s32.totalorder %s26, 1
      %s536 = scalar_select %p535, %s26, 1
      %s537 = smul.addr %s536, 16
      %s538 = smul.addr %s537, 4
      %s539 = scalar_lea.vmem %s6, %s538
      %p540 = scmp.lt.s32.totalorder %s26, 1
      %s541 = scalar_select %p540, %s26, 1
      %s542 = scalar_lea.vmem %s7, %s541
      %p543 = scmp.lt.s32.totalorder %s26, 1
      %s544 = scalar_select %p543, %s26, 1
      %s545 = scalar_lea.vmem %s8, %s544
      %p546 = scmp.lt.s32.totalorder %s26, 1
      %s547 = scalar_select %p546, %s26, 1
      %s548 = smul.addr %s547, 16
      %s549 = smul.addr %s548, 4
      %s550 = scalar_lea.vmem %s9, %s549
      %p551 = scmp.lt.s32.totalorder %s26, 1
      %s552 = scalar_select %p551, %s26, 1
      %p553 = scmp.lt.s32.totalorder %s27, 1
      %s554 = scalar_select %p553, %s27, 1
      %s555 = smul.addr %s552, 2
      %s556 = sadd.s32 %s554, %s555
      %s557 = smul.addr %s556, 8
      %s558 = scalar_lea.vmem %s10, %s557
      %p560 = scmp.eq.s32.totalorder %s28, 0
      // Predicated region
      $region61: #{caco_forward_sym.1} parent=59 // pred_check
        %p561 = pneg %p560
      $region62: #{caco_forward_sym.1} parent=59 // pred_check_branch
        %563 = sbr.rel (%p561) target = $region64
      $region63: #{caco_forward_sym.1} parent=59 // pred_region
        %vm564 = vcmask 64512
        %565 = vst.msk [vmem:[#allocation2] sm:$0xff] %vm564, 0.0
        %566 = vst.msk [vmem:[#allocation2 + $0x8] sm:$0xff] %vm564, 0.0
        %567 = vst.msk [vmem:[#allocation2 + $0x10] sm:$0xff] %vm564, 0.0
        %568 = vst.msk [vmem:[#allocation2 + $0x18] sm:$0xff] %vm564, 0.0
        %569 = vst.msk [vmem:[#allocation2 + $0x20] sm:$0xff] %vm564, 0.0
        %570 = vst.msk [vmem:[#allocation2 + $0x28] sm:$0xff] %vm564, 0.0
        %571 = vst.msk [vmem:[#allocation2 + $0x30] sm:$0xff] %vm564, 0.0
        %572 = vst.msk [vmem:[#allocation2 + $0x38] sm:$0xff] %vm564, 0.0
        %573 = vst.msk [vmem:[#allocation2 + $0x40] sm:$0xff] %vm564, 0.0
        %574 = vst.msk [vmem:[#allocation2 + $0x48] sm:$0xff] %vm564, 0.0
        %575 = vst.msk [vmem:[#allocation2 + $0x50] sm:$0xff] %vm564, 0.0
        %576 = vst.msk [vmem:[#allocation2 + $0x58] sm:$0xff] %vm564, 0.0
        %577 = vst.msk [vmem:[#allocation2 + $0x60] sm:$0xff] %vm564, 0.0
        %578 = vst.msk [vmem:[#allocation2 + $0x68] sm:$0xff] %vm564, 0.0
        %579 = vst.msk [vmem:[#allocation2 + $0x70] sm:$0xff] %vm564, 0.0
        %580 = vst.msk [vmem:[#allocation2 + $0x78] sm:$0xff] %vm564, 0.0
      $region64: #{caco_forward_sym.1} parent=59 // pred_fallthru
        _
      %v581 = vld [vmem:[%s518] sm:$0xf]
      %v582 = vld [vmem:[%s518 + $0x4] sm:$0xf]
      %v583 = vld [vmem:[%s518 + $0x8] sm:$0xf]
      %v584 = vld [vmem:[%s518 + $0xc] sm:$0xf]
      %v585 = vld [vmem:[%s518 + $0x10] sm:$0xf]
      %v586 = vld [vmem:[%s518 + $0x14] sm:$0xf]
      %v587 = vld [vmem:[%s518 + $0x18] sm:$0xf]
      %v588 = vld [vmem:[%s518 + $0x1c] sm:$0xf]
      %v589 = vld [vmem:[%s518 + $0x20] sm:$0xf]
      %v590 = vld [vmem:[%s518 + $0x24] sm:$0xf]
      %v591 = vld [vmem:[%s518 + $0x28] sm:$0xf]
      %v592 = vld [vmem:[%s518 + $0x2c] sm:$0xf]
      %v593 = vld [vmem:[%s518 + $0x30] sm:$0xf]
      %v594 = vld [vmem:[%s518 + $0x34] sm:$0xf]
      %v595 = vld [vmem:[%s518 + $0x38] sm:$0xf]
      %v596 = vld [vmem:[%s518 + $0x3c] sm:$0xf]
      %v597 = vld [vmem:[%s523] sm:$0xff]
      %v598 = vld [vmem:[%s523 + $0x8] sm:$0xff]
      %v599 = vld [vmem:[%s523 + $0x10] sm:$0xff]
      %v600 = vld [vmem:[%s523 + $0x18] sm:$0xff]
      %v601 = vld [vmem:[%s523 + $0x20] sm:$0xff]
      %v602 = vld [vmem:[%s523 + $0x28] sm:$0xff]
      %v603 = vld [vmem:[%s523 + $0x30] sm:$0xff]
      %v604 = vld [vmem:[%s523 + $0x38] sm:$0xff]
      %v605 = vld [vmem:[%s523 + $0x40] sm:$0xff]
      %v606 = vld [vmem:[%s523 + $0x48] sm:$0xff]
      %v607 = vld [vmem:[%s523 + $0x50] sm:$0xff]
      %v608 = vld [vmem:[%s523 + $0x58] sm:$0xff]
      %v609 = vld [vmem:[%s523 + $0x60] sm:$0xff]
      %v610 = vld [vmem:[%s523 + $0x68] sm:$0xff]
      %v611 = vld [vmem:[%s523 + $0x70] sm:$0xff]
      %v612 = vld [vmem:[%s523 + $0x78] sm:$0xff]
      %v613 = vld [vmem:[%s512] sm:$0xff]
      %v614 = vld [vmem:[%s512 + $0x8] sm:$0x11]
      %616 = vset.pattern.permute.xlu0 0
      %617 = vperm.xlu0 %616, %v597
      %v618 = vpop.permute.xlu0 %617
      %621 = vset.pattern.permute.xlu0 0
      %622 = vperm.xlu0 %621, %v598
      %v623 = vpop.permute.xlu0 %622
      %626 = vset.pattern.permute.xlu0 0
      %627 = vperm.xlu0 %626, %v599
      %v628 = vpop.permute.xlu0 %627
      %631 = vset.pattern.permute.xlu0 0
      %632 = vperm.xlu0 %631, %v600
      %v633 = vpop.permute.xlu0 %632
      %636 = vset.pattern.permute.xlu0 0
      %637 = vperm.xlu0 %636, %v601
      %v638 = vpop.permute.xlu0 %637
      %641 = vset.pattern.permute.xlu0 0
      %642 = vperm.xlu0 %641, %v602
      %v643 = vpop.permute.xlu0 %642
      %646 = vset.pattern.permute.xlu0 0
      %647 = vperm.xlu0 %646, %v603
      %v648 = vpop.permute.xlu0 %647
      %651 = vset.pattern.permute.xlu0 0
      %652 = vperm.xlu0 %651, %v604
      %v653 = vpop.permute.xlu0 %652
      %656 = vset.pattern.permute.xlu0 0
      %657 = vperm.xlu0 %656, %v605
      %v658 = vpop.permute.xlu0 %657
      %661 = vset.pattern.permute.xlu0 0
      %662 = vperm.xlu0 %661, %v606
      %v663 = vpop.permute.xlu0 %662
      %666 = vset.pattern.permute.xlu0 0
      %667 = vperm.xlu0 %666, %v607
      %v668 = vpop.permute.xlu0 %667
      %671 = vset.pattern.permute.xlu0 0
      %672 = vperm.xlu0 %671, %v608
      %v673 = vpop.permute.xlu0 %672
      %676 = vset.pattern.permute.xlu0 0
      %677 = vperm.xlu0 %676, %v609
      %v678 = vpop.permute.xlu0 %677
      %681 = vset.pattern.permute.xlu0 0
      %682 = vperm.xlu0 %681, %v610
      %v683 = vpop.permute.xlu0 %682
      %686 = vset.pattern.permute.xlu0 0
      %687 = vperm.xlu0 %686, %v611
      %v688 = vpop.permute.xlu0 %687
      %691 = vset.pattern.permute.xlu0 0
      %692 = vperm.xlu0 %691, %v612
      %v693 = vpop.permute.xlu0 %692
      %v711 = vunpack.c.l.b16 %v581
      %v712 = vunpack.c.l.b16 %v582
      %v713 = vunpack.c.l.b16 %v583
      %v714 = vunpack.c.l.b16 %v584
      %v715 = vunpack.c.l.b16 %v585
      %v716 = vunpack.c.l.b16 %v586
      %v717 = vunpack.c.l.b16 %v587
      %v718 = vunpack.c.l.b16 %v588
      %v719 = vunpack.c.l.b16 %v589
      %v720 = vunpack.c.l.b16 %v590
      %v721 = vunpack.c.l.b16 %v591
      %v722 = vunpack.c.l.b16 %v592
      %v723 = vunpack.c.l.b16 %v593
      %v724 = vunpack.c.l.b16 %v594
      %v725 = vunpack.c.l.b16 %v595
      %v726 = vunpack.c.l.b16 %v596
      %v727 = vpack.c.b16 %v712, %v711
      %v728 = vpack.c.b16 %v714, %v713
      %v729 = vpack.c.b16 %v716, %v715
      %v730 = vpack.c.b16 %v718, %v717
      %v731 = vpack.c.b16 %v720, %v719
      %v732 = vpack.c.b16 %v722, %v721
      %v733 = vpack.c.b16 %v724, %v723
      %v734 = vpack.c.b16 %v726, %v725
      %v737 = vunpack.c.l.b16 %v613
      %v738 = vunpack.c.h.b16 %v613
      %v739 = vunpack.c.l.b16 %v614
      %v740 = vunpack.c.h.b16 %v614
      %v741 = vpack.c.b16 %v739, %v737
      %v742 = vpack.c.b16 %v740, %v738
      %vm743 = vcmask 72704
      %v745 = vsel %vm743, %v727, 0
      %v748 = vsel %vm743, %v728, 0
      %v751 = vsel %vm743, %v729, 0
      %v754 = vsel %vm743, %v730, 0
      %v757 = vsel %vm743, %v731, 0
      %v760 = vsel %vm743, %v732, 0
      %v763 = vsel %vm743, %v733, 0
      %v766 = vsel %vm743, %v734, 0
      %vm768 = vcmask 1043456
      %vm769 = vcmask 1044480
      %v770 = vsel %vm768, 4294967295, 65535
      %v771 = vsel %vm769, %v770, 0
      %v773 = vand.u32 %v741, %v771
      %v776 = vand.u32 %v742, %v771
      %778 = vmatpush.bf16.msra.mxu0 0
      %779 = vmatpush.bf16.msra.mxu0 0
      %780 = vmatpush.bf16.msra.mxu0 0
      %781 = vmatpush.bf16.msra.mxu0 0
      %782 = vmatpush.bf16.msra.mxu0 0
      %783 = vmatpush.bf16.msra.mxu0 0
      %784 = vmatpush.bf16.msra.mxu0 0
      %785 = vmatpush.bf16.msra.mxu0 %v773
      %786 = vmatmul.bf16.gmra.mxu0 %v745
      %v787 = vpop.f32.mrf.mxu0
      %v788 = vadd.f32 %v618, %v787
      %v789 = vpop.f32.mrf.mxu0
      %v790 = vadd.f32 %v623, %v789
      %791 = vmatmul.bf16.gmra.mxu0 %v748
      %v792 = vpop.f32.mrf.mxu0
      %v793 = vadd.f32 %v628, %v792
      %v794 = vpop.f32.mrf.mxu0
      %v795 = vadd.f32 %v633, %v794
      %796 = vmatmul.bf16.gmra.mxu0 %v751
      %v797 = vpop.f32.mrf.mxu0
      %v798 = vadd.f32 %v638, %v797
      %v799 = vpop.f32.mrf.mxu0
      %v800 = vadd.f32 %v643, %v799
      %801 = vmatmul.bf16.gmra.mxu0 %v754
      %v802 = vpop.f32.mrf.mxu0
      %v803 = vadd.f32 %v648, %v802
      %v804 = vpop.f32.mrf.mxu0
      %v805 = vadd.f32 %v653, %v804
      %806 = vmatmul.bf16.gmra.mxu0 %v757
      %v807 = vpop.f32.mrf.mxu0
      %v808 = vadd.f32 %v658, %v807
      %v809 = vpop.f32.mrf.mxu0
      %v810 = vadd.f32 %v663, %v809
      %811 = vmatmul.bf16.gmra.mxu0 %v760
      %v812 = vpop.f32.mrf.mxu0
      %v813 = vadd.f32 %v668, %v812
      %v814 = vpop.f32.mrf.mxu0
      %v815 = vadd.f32 %v673, %v814
      %816 = vmatmul.bf16.gmra.mxu0 %v763
      %v817 = vpop.f32.mrf.mxu0
      %v818 = vadd.f32 %v678, %v817
      %v819 = vpop.f32.mrf.mxu0
      %v820 = vadd.f32 %v683, %v819
      %821 = vmatmul.bf16.gmra.mxu0 %v766
      %v822 = vpop.f32.mrf.mxu0
      %v823 = vadd.f32 %v688, %v822
      %v824 = vpop.f32.mrf.mxu0
      %v825 = vadd.f32 %v693, %v824
      %826 = vdwg.mxu0
      %827 = vmatpush.bf16.msra.mxu0 0
      %828 = vmatpush.bf16.msra.mxu0 0
      %829 = vmatpush.bf16.msra.mxu0 0
      %830 = vmatpush.bf16.msra.mxu0 0
      %831 = vmatpush.bf16.msra.mxu0 0
      %832 = vmatpush.bf16.msra.mxu0 0
      %833 = vmatpush.bf16.msra.mxu0 0
      %834 = vmatpush.bf16.msra.mxu0 %v776
      %835 = vmatmul.bf16.gmra.mxu0 %v745
      %v836 = vpop.f32.mrf.mxu0
      %v837 = vadd.f32 %v618, %v836
      %v838 = vpop.f32.mrf.mxu0
      %v839 = vadd.f32 %v623, %v838
      %840 = vmatmul.bf16.gmra.mxu0 %v748
      %v841 = vpop.f32.mrf.mxu0
      %v842 = vadd.f32 %v628, %v841
      %v843 = vpop.f32.mrf.mxu0
      %v844 = vadd.f32 %v633, %v843
      %845 = vmatmul.bf16.gmra.mxu0 %v751
      %v846 = vpop.f32.mrf.mxu0
      %v847 = vadd.f32 %v638, %v846
      %v848 = vpop.f32.mrf.mxu0
      %v849 = vadd.f32 %v643, %v848
      %850 = vmatmul.bf16.gmra.mxu0 %v754
      %v851 = vpop.f32.mrf.mxu0
      %v852 = vadd.f32 %v648, %v851
      %v853 = vpop.f32.mrf.mxu0
      %v854 = vadd.f32 %v653, %v853
      %855 = vmatmul.bf16.gmra.mxu0 %v757
      %v856 = vpop.f32.mrf.mxu0
      %v857 = vadd.f32 %v658, %v856
      %v858 = vpop.f32.mrf.mxu0
      %v859 = vadd.f32 %v663, %v858
      %860 = vmatmul.bf16.gmra.mxu0 %v760
      %v861 = vpop.f32.mrf.mxu0
      %v862 = vadd.f32 %v668, %v861
      %v863 = vpop.f32.mrf.mxu0
      %v864 = vadd.f32 %v673, %v863
      %865 = vmatmul.bf16.gmra.mxu0 %v763
      %v866 = vpop.f32.mrf.mxu0
      %v867 = vadd.f32 %v678, %v866
      %v868 = vpop.f32.mrf.mxu0
      %v869 = vadd.f32 %v683, %v868
      %870 = vmatmul.bf16.gmra.mxu0 %v766
      %v871 = vpop.f32.mrf.mxu0
      %v872 = vadd.f32 %v688, %v871
      %v873 = vpop.f32.mrf.mxu0
      %v874 = vadd.f32 %v693, %v873
      %875 = vdwg.mxu0
      %v876 = vmax.f32 %v788, 0.0
      %v877 = vmax.f32 %v837, 0.0
      %v878 = vmax.f32 %v790, 0.0
      %v879 = vmax.f32 %v839, 0.0
      %v880 = vmax.f32 %v793, 0.0
      %v881 = vmax.f32 %v842, 0.0
      %v882 = vmax.f32 %v795, 0.0
      %v883 = vmax.f32 %v844, 0.0
      %v884 = vmax.f32 %v798, 0.0
      %v885 = vmax.f32 %v847, 0.0
      %v886 = vmax.f32 %v800, 0.0
      %v887 = vmax.f32 %v849, 0.0
      %v888 = vmax.f32 %v803, 0.0
      %v889 = vmax.f32 %v852, 0.0
      %v890 = vmax.f32 %v805, 0.0
      %v891 = vmax.f32 %v854, 0.0
      %v892 = vmax.f32 %v808, 0.0
      %v893 = vmax.f32 %v857, 0.0
      %v894 = vmax.f32 %v810, 0.0
      %v895 = vmax.f32 %v859, 0.0
      %v896 = vmax.f32 %v813, 0.0
      %v897 = vmax.f32 %v862, 0.0
      %v898 = vmax.f32 %v815, 0.0
      %v899 = vmax.f32 %v864, 0.0
      %v900 = vmax.f32 %v818, 0.0
      %v901 = vmax.f32 %v867, 0.0
      %v902 = vmax.f32 %v820, 0.0
      %v903 = vmax.f32 %v869, 0.0
      %v904 = vmax.f32 %v823, 0.0
      %v905 = vmax.f32 %v872, 0.0
      %v906 = vmax.f32 %v825, 0.0
      %v907 = vmax.f32 %v874, 0.0
      %v908 = vadd.f32 %v876, %v877
      %909 = vadd.xlane.f32.xlu0 %v908
      %v910 = vpop.xlane.xlu0 %909
      %v911 = vadd.f32 %v878, %v879
      %912 = vadd.xlane.f32.xlu0 %v911
      %v913 = vpop.xlane.xlu0 %912
      %v914 = vadd.f32 %v880, %v881
      %915 = vadd.xlane.f32.xlu0 %v914
      %v916 = vpop.xlane.xlu0 %915
      %v917 = vadd.f32 %v882, %v883
      %918 = vadd.xlane.f32.xlu0 %v917
      %v919 = vpop.xlane.xlu0 %918
      %v920 = vadd.f32 %v884, %v885
      %921 = vadd.xlane.f32.xlu0 %v920
      %v922 = vpop.xlane.xlu0 %921
      %v923 = vadd.f32 %v886, %v887
      %924 = vadd.xlane.f32.xlu0 %v923
      %v925 = vpop.xlane.xlu0 %924
      %v926 = vadd.f32 %v888, %v889
      %927 = vadd.xlane.f32.xlu0 %v926
      %v928 = vpop.xlane.xlu0 %927
      %v929 = vadd.f32 %v890, %v891
      %930 = vadd.xlane.f32.xlu0 %v929
      %v931 = vpop.xlane.xlu0 %930
      %v932 = vadd.f32 %v892, %v893
      %933 = vadd.xlane.f32.xlu0 %v932
      %v934 = vpop.xlane.xlu0 %933
      %v935 = vadd.f32 %v894, %v895
      %936 = vadd.xlane.f32.xlu0 %v935
      %v937 = vpop.xlane.xlu0 %936
      %v938 = vadd.f32 %v896, %v897
      %939 = vadd.xlane.f32.xlu0 %v938
      %v940 = vpop.xlane.xlu0 %939
      %v941 = vadd.f32 %v898, %v899
      %942 = vadd.xlane.f32.xlu0 %v941
      %v943 = vpop.xlane.xlu0 %942
      %v944 = vadd.f32 %v900, %v901
      %945 = vadd.xlane.f32.xlu0 %v944
      %v946 = vpop.xlane.xlu0 %945
      %v947 = vadd.f32 %v902, %v903
      %948 = vadd.xlane.f32.xlu0 %v947
      %v949 = vpop.xlane.xlu0 %948
      %v950 = vadd.f32 %v904, %v905
      %951 = vadd.xlane.f32.xlu0 %v950
      %v952 = vpop.xlane.xlu0 %951
      %v953 = vadd.f32 %v906, %v907
      %954 = vadd.xlane.f32.xlu0 %v953
      %v955 = vpop.xlane.xlu0 %954
      %s956 = scalar_lea.vmem %s512, 16
      %v957 = vld [vmem:[%s956] sm:$0xff]
      %v958 = vld [vmem:[%s956 + $0x8] sm:$0x11]
      %v961 = vunpack.c.l.b16 %v957
      %v962 = vunpack.c.h.b16 %v957
      %v963 = vunpack.c.l.b16 %v958
      %v964 = vunpack.c.h.b16 %v958
      %v965 = vpack.c.b16 %v963, %v961
      %v966 = vpack.c.b16 %v964, %v962
      %v968 = vand.u32 %v965, %v771
      %v971 = vand.u32 %v966, %v771
      %973 = vmatpush.bf16.msra.mxu0 0
      %974 = vmatpush.bf16.msra.mxu0 0
      %975 = vmatpush.bf16.msra.mxu0 0
      %976 = vmatpush.bf16.msra.mxu0 0
      %977 = vmatpush.bf16.msra.mxu0 0
      %978 = vmatpush.bf16.msra.mxu0 0
      %979 = vmatpush.bf16.msra.mxu0 0
      %980 = vmatpush.bf16.msra.mxu0 %v968
      %981 = vmatmul.bf16.gmra.mxu0 %v745
      %v982 = vpop.f32.mrf.mxu0
      %v983 = vadd.f32 %v618, %v982
      %v984 = vpop.f32.mrf.mxu0
      %v985 = vadd.f32 %v623, %v984
      %986 = vmatmul.bf16.gmra.mxu0 %v748
      %v987 = vpop.f32.mrf.mxu0
      %v988 = vadd.f32 %v628, %v987
      %v989 = vpop.f32.mrf.mxu0
      %v990 = vadd.f32 %v633, %v989
      %991 = vmatmul.bf16.gmra.mxu0 %v751
      %v992 = vpop.f32.mrf.mxu0
      %v993 = vadd.f32 %v638, %v992
      %v994 = vpop.f32.mrf.mxu0
      %v995 = vadd.f32 %v643, %v994
      %996 = vmatmul.bf16.gmra.mxu0 %v754
      %v997 = vpop.f32.mrf.mxu0
      %v998 = vadd.f32 %v648, %v997
      %v999 = vpop.f32.mrf.mxu0
      %v1000 = vadd.f32 %v653, %v999
      %1001 = vmatmul.bf16.gmra.mxu0 %v757
      %v1002 = vpop.f32.mrf.mxu0
      %v1003 = vadd.f32 %v658, %v1002
      %v1004 = vpop.f32.mrf.mxu0
      %v1005 = vadd.f32 %v663, %v1004
      %1006 = vmatmul.bf16.gmra.mxu0 %v760
      %v1007 = vpop.f32.mrf.mxu0
      %v1008 = vadd.f32 %v668, %v1007
      %v1009 = vpop.f32.mrf.mxu0
      %v1010 = vadd.f32 %v673, %v1009
      %1011 = vmatmul.bf16.gmra.mxu0 %v763
      %v1012 = vpop.f32.mrf.mxu0
      %v1013 = vadd.f32 %v678, %v1012
      %v1014 = vpop.f32.mrf.mxu0
      %v1015 = vadd.f32 %v683, %v1014
      %1016 = vmatmul.bf16.gmra.mxu0 %v766
      %v1017 = vpop.f32.mrf.mxu0
      %v1018 = vadd.f32 %v688, %v1017
      %v1019 = vpop.f32.mrf.mxu0
      %v1020 = vadd.f32 %v693, %v1019
      %1021 = vdwg.mxu0
      %1022 = vmatpush.bf16.msra.mxu0 0
      %1023 = vmatpush.bf16.msra.mxu0 0
      %1024 = vmatpush.bf16.msra.mxu0 0
      %1025 = vmatpush.bf16.msra.mxu0 0
      %1026 = vmatpush.bf16.msra.mxu0 0
      %1027 = vmatpush.bf16.msra.mxu0 0
      %1028 = vmatpush.bf16.msra.mxu0 0
      %1029 = vmatpush.bf16.msra.mxu0 %v971
      %1030 = vmatmul.bf16.gmra.mxu0 %v745
      %v1031 = vpop.f32.mrf.mxu0
      %v1032 = vadd.f32 %v618, %v1031
      %v1033 = vpop.f32.mrf.mxu0
      %v1034 = vadd.f32 %v623, %v1033
      %1035 = vmatmul.bf16.gmra.mxu0 %v748
      %v1036 = vpop.f32.mrf.mxu0
      %v1037 = vadd.f32 %v628, %v1036
      %v1038 = vpop.f32.mrf.mxu0
      %v1039 = vadd.f32 %v633, %v1038
      %1040 = vmatmul.bf16.gmra.mxu0 %v751
      %v1041 = vpop.f32.mrf.mxu0
      %v1042 = vadd.f32 %v638, %v1041
      %v1043 = vpop.f32.mrf.mxu0
      %v1044 = vadd.f32 %v643, %v1043
      %1045 = vmatmul.bf16.gmra.mxu0 %v754
      %v1046 = vpop.f32.mrf.mxu0
      %v1047 = vadd.f32 %v648, %v1046
      %v1048 = vpop.f32.mrf.mxu0
      %v1049 = vadd.f32 %v653, %v1048
      %1050 = vmatmul.bf16.gmra.mxu0 %v757
      %v1051 = vpop.f32.mrf.mxu0
      %v1052 = vadd.f32 %v658, %v1051
      %v1053 = vpop.f32.mrf.mxu0
      %v1054 = vadd.f32 %v663, %v1053
      %1055 = vmatmul.bf16.gmra.mxu0 %v760
      %v1056 = vpop.f32.mrf.mxu0
      %v1057 = vadd.f32 %v668, %v1056
      %v1058 = vpop.f32.mrf.mxu0
      %v1059 = vadd.f32 %v673, %v1058
      %1060 = vmatmul.bf16.gmra.mxu0 %v763
      %v1061 = vpop.f32.mrf.mxu0
      %v1062 = vadd.f32 %v678, %v1061
      %v1063 = vpop.f32.mrf.mxu0
      %v1064 = vadd.f32 %v683, %v1063
      %1065 = vmatmul.bf16.gmra.mxu0 %v766
      %v1066 = vpop.f32.mrf.mxu0
      %v1067 = vadd.f32 %v688, %v1066
      %v1068 = vpop.f32.mrf.mxu0
      %v1069 = vadd.f32 %v693, %v1068
      %1070 = vdwg.mxu0
      %v1071 = vmax.f32 %v983, 0.0
      %v1072 = vmax.f32 %v1032, 0.0
      %v1073 = vmax.f32 %v985, 0.0
      %v1074 = vmax.f32 %v1034, 0.0
      %v1075 = vmax.f32 %v988, 0.0
      %v1076 = vmax.f32 %v1037, 0.0
      %v1077 = vmax.f32 %v990, 0.0
      %v1078 = vmax.f32 %v1039, 0.0
      %v1079 = vmax.f32 %v993, 0.0
      %v1080 = vmax.f32 %v1042, 0.0
      %v1081 = vmax.f32 %v995, 0.0
      %v1082 = vmax.f32 %v1044, 0.0
      %v1083 = vmax.f32 %v998, 0.0
      %v1084 = vmax.f32 %v1047, 0.0
      %v1085 = vmax.f32 %v1000, 0.0
      %v1086 = vmax.f32 %v1049, 0.0
      %v1087 = vmax.f32 %v1003, 0.0
      %v1088 = vmax.f32 %v1052, 0.0
      %v1089 = vmax.f32 %v1005, 0.0
      %v1090 = vmax.f32 %v1054, 0.0
      %v1091 = vmax.f32 %v1008, 0.0
      %v1092 = vmax.f32 %v1057, 0.0
      %v1093 = vmax.f32 %v1010, 0.0
      %v1094 = vmax.f32 %v1059, 0.0
      %v1095 = vmax.f32 %v1013, 0.0
      %v1096 = vmax.f32 %v1062, 0.0
      %v1097 = vmax.f32 %v1015, 0.0
      %v1098 = vmax.f32 %v1064, 0.0
      %v1099 = vmax.f32 %v1018, 0.0
      %v1100 = vmax.f32 %v1067, 0.0
      %v1101 = vmax.f32 %v1020, 0.0
      %v1102 = vmax.f32 %v1069, 0.0
      %v1103 = vadd.f32 %v1071, %v1072
      %1104 = vadd.xlane.f32.xlu0 %v1103
      %v1105 = vpop.xlane.xlu0 %1104
      %v1106 = vadd.f32 %v1073, %v1074
      %1107 = vadd.xlane.f32.xlu0 %v1106
      %v1108 = vpop.xlane.xlu0 %1107
      %v1109 = vadd.f32 %v1075, %v1076
      %1110 = vadd.xlane.f32.xlu0 %v1109
      %v1111 = vpop.xlane.xlu0 %1110
      %v1112 = vadd.f32 %v1077, %v1078
      %1113 = vadd.xlane.f32.xlu0 %v1112
      %v1114 = vpop.xlane.xlu0 %1113
      %v1115 = vadd.f32 %v1079, %v1080
      %1116 = vadd.xlane.f32.xlu0 %v1115
      %v1117 = vpop.xlane.xlu0 %1116
      %v1118 = vadd.f32 %v1081, %v1082
      %1119 = vadd.xlane.f32.xlu0 %v1118
      %v1120 = vpop.xlane.xlu0 %1119
      %v1121 = vadd.f32 %v1083, %v1084
      %1122 = vadd.xlane.f32.xlu0 %v1121
      %v1123 = vpop.xlane.xlu0 %1122
      %v1124 = vadd.f32 %v1085, %v1086
      %1125 = vadd.xlane.f32.xlu0 %v1124
      %v1126 = vpop.xlane.xlu0 %1125
      %v1127 = vadd.f32 %v1087, %v1088
      %1128 = vadd.xlane.f32.xlu0 %v1127
      %v1129 = vpop.xlane.xlu0 %1128
      %v1130 = vadd.f32 %v1089, %v1090
      %1131 = vadd.xlane.f32.xlu0 %v1130
      %v1132 = vpop.xlane.xlu0 %1131
      %v1133 = vadd.f32 %v1091, %v1092
      %1134 = vadd.xlane.f32.xlu0 %v1133
      %v1135 = vpop.xlane.xlu0 %1134
      %v1136 = vadd.f32 %v1093, %v1094
      %1137 = vadd.xlane.f32.xlu0 %v1136
      %v1138 = vpop.xlane.xlu0 %1137
      %v1139 = vadd.f32 %v1095, %v1096
      %1140 = vadd.xlane.f32.xlu0 %v1139
      %v1141 = vpop.xlane.xlu0 %1140
      %v1142 = vadd.f32 %v1097, %v1098
      %1143 = vadd.xlane.f32.xlu0 %v1142
      %v1144 = vpop.xlane.xlu0 %1143
      %v1145 = vadd.f32 %v1099, %v1100
      %1146 = vadd.xlane.f32.xlu0 %v1145
      %v1147 = vpop.xlane.xlu0 %1146
      %v1148 = vadd.f32 %v1101, %v1102
      %1149 = vadd.xlane.f32.xlu0 %v1148
      %v1150 = vpop.xlane.xlu0 %1149
      %s1151 = scalar_lea.vmem %s512, 32
      %v1152 = vld [vmem:[%s1151] sm:$0xff]
      %v1153 = vld [vmem:[%s1151 + $0x8] sm:$0x11]
      %v1156 = vunpack.c.l.b16 %v1152
      %v1157 = vunpack.c.h.b16 %v1152
      %v1158 = vunpack.c.l.b16 %v1153
      %v1159 = vunpack.c.h.b16 %v1153
      %v1160 = vpack.c.b16 %v1158, %v1156
      %v1161 = vpack.c.b16 %v1159, %v1157
      %v1163 = vand.u32 %v1160, %v771
      %v1166 = vand.u32 %v1161, %v771
      %1168 = vmatpush.bf16.msra.mxu0 0
      %1169 = vmatpush.bf16.msra.mxu0 0
      %1170 = vmatpush.bf16.msra.mxu0 0
      %1171 = vmatpush.bf16.msra.mxu0 0
      %1172 = vmatpush.bf16.msra.mxu0 0
      %1173 = vmatpush.bf16.msra.mxu0 0
      %1174 = vmatpush.bf16.msra.mxu0 0
      %1175 = vmatpush.bf16.msra.mxu0 %v1163
      %1176 = vmatmul.bf16.gmra.mxu0 %v745
      %v1177 = vpop.f32.mrf.mxu0
      %v1178 = vadd.f32 %v618, %v1177
      %v1179 = vpop.f32.mrf.mxu0
      %v1180 = vadd.f32 %v623, %v1179
      %1181 = vmatmul.bf16.gmra.mxu0 %v748
      %v1182 = vpop.f32.mrf.mxu0
      %v1183 = vadd.f32 %v628, %v1182
      %v1184 = vpop.f32.mrf.mxu0
      %v1185 = vadd.f32 %v633, %v1184
      %1186 = vmatmul.bf16.gmra.mxu0 %v751
      %v1187 = vpop.f32.mrf.mxu0
      %v1188 = vadd.f32 %v638, %v1187
      %v1189 = vpop.f32.mrf.mxu0
      %v1190 = vadd.f32 %v643, %v1189
      %1191 = vmatmul.bf16.gmra.mxu0 %v754
      %v1192 = vpop.f32.mrf.mxu0
      %v1193 = vadd.f32 %v648, %v1192
      %v1194 = vpop.f32.mrf.mxu0
      %v1195 = vadd.f32 %v653, %v1194
      %1196 = vmatmul.bf16.gmra.mxu0 %v757
      %v1197 = vpop.f32.mrf.mxu0
      %v1198 = vadd.f32 %v658, %v1197
      %v1199 = vpop.f32.mrf.mxu0
      %v1200 = vadd.f32 %v663, %v1199
      %1201 = vmatmul.bf16.gmra.mxu0 %v760
      %v1202 = vpop.f32.mrf.mxu0
      %v1203 = vadd.f32 %v668, %v1202
      %v1204 = vpop.f32.mrf.mxu0
      %v1205 = vadd.f32 %v673, %v1204
      %1206 = vmatmul.bf16.gmra.mxu0 %v763
      %v1207 = vpop.f32.mrf.mxu0
      %v1208 = vadd.f32 %v678, %v1207
      %v1209 = vpop.f32.mrf.mxu0
      %v1210 = vadd.f32 %v683, %v1209
      %1211 = vmatmul.bf16.gmra.mxu0 %v766
      %v1212 = vpop.f32.mrf.mxu0
      %v1213 = vadd.f32 %v688, %v1212
      %v1214 = vpop.f32.mrf.mxu0
      %v1215 = vadd.f32 %v693, %v1214
      %1216 = vdwg.mxu0
      %1217 = vmatpush.bf16.msra.mxu0 0
      %1218 = vmatpush.bf16.msra.mxu0 0
      %1219 = vmatpush.bf16.msra.mxu0 0
      %1220 = vmatpush.bf16.msra.mxu0 0
      %1221 = vmatpush.bf16.msra.mxu0 0
      %1222 = vmatpush.bf16.msra.mxu0 0
      %1223 = vmatpush.bf16.msra.mxu0 0
      %1224 = vmatpush.bf16.msra.mxu0 %v1166
      %1225 = vmatmul.bf16.gmra.mxu0 %v745
      %v1226 = vpop.f32.mrf.mxu0
      %v1227 = vadd.f32 %v618, %v1226
      %v1228 = vpop.f32.mrf.mxu0
      %v1229 = vadd.f32 %v623, %v1228
      %1230 = vmatmul.bf16.gmra.mxu0 %v748
      %v1231 = vpop.f32.mrf.mxu0
      %v1232 = vadd.f32 %v628, %v1231
      %v1233 = vpop.f32.mrf.mxu0
      %v1234 = vadd.f32 %v633, %v1233
      %1235 = vmatmul.bf16.gmra.mxu0 %v751
      %v1236 = vpop.f32.mrf.mxu0
      %v1237 = vadd.f32 %v638, %v1236
      %v1238 = vpop.f32.mrf.mxu0
      %v1239 = vadd.f32 %v643, %v1238
      %1240 = vmatmul.bf16.gmra.mxu0 %v754
      %v1241 = vpop.f32.mrf.mxu0
      %v1242 = vadd.f32 %v648, %v1241
      %v1243 = vpop.f32.mrf.mxu0
      %v1244 = vadd.f32 %v653, %v1243
      %1245 = vmatmul.bf16.gmra.mxu0 %v757
      %v1246 = vpop.f32.mrf.mxu0
      %v1247 = vadd.f32 %v658, %v1246
      %v1248 = vpop.f32.mrf.mxu0
      %v1249 = vadd.f32 %v663, %v1248
      %1250 = vmatmul.bf16.gmra.mxu0 %v760
      %v1251 = vpop.f32.mrf.mxu0
      %v1252 = vadd.f32 %v668, %v1251
      %v1253 = vpop.f32.mrf.mxu0
      %v1254 = vadd.f32 %v673, %v1253
      %1255 = vmatmul.bf16.gmra.mxu0 %v763
      %v1256 = vpop.f32.mrf.mxu0
      %v1257 = vadd.f32 %v678, %v1256
      %v1258 = vpop.f32.mrf.mxu0
      %v1259 = vadd.f32 %v683, %v1258
      %1260 = vmatmul.bf16.gmra.mxu0 %v766
      %v1261 = vpop.f32.mrf.mxu0
      %v1262 = vadd.f32 %v688, %v1261
      %v1263 = vpop.f32.mrf.mxu0
      %v1264 = vadd.f32 %v693, %v1263
      %1265 = vdwg.mxu0
      %v1266 = vmax.f32 %v1178, 0.0
      %v1267 = vmax.f32 %v1227, 0.0
      %v1268 = vmax.f32 %v1180, 0.0
      %v1269 = vmax.f32 %v1229, 0.0
      %v1270 = vmax.f32 %v1183, 0.0
      %v1271 = vmax.f32 %v1232, 0.0
      %v1272 = vmax.f32 %v1185, 0.0
      %v1273 = vmax.f32 %v1234, 0.0
      %v1274 = vmax.f32 %v1188, 0.0
      %v1275 = vmax.f32 %v1237, 0.0
      %v1276 = vmax.f32 %v1190, 0.0
      %v1277 = vmax.f32 %v1239, 0.0
      %v1278 = vmax.f32 %v1193, 0.0
      %v1279 = vmax.f32 %v1242, 0.0
      %v1280 = vmax.f32 %v1195, 0.0
      %v1281 = vmax.f32 %v1244, 0.0
      %v1282 = vmax.f32 %v1198, 0.0
      %v1283 = vmax.f32 %v1247, 0.0
      %v1284 = vmax.f32 %v1200, 0.0
      %v1285 = vmax.f32 %v1249, 0.0
      %v1286 = vmax.f32 %v1203, 0.0
      %v1287 = vmax.f32 %v1252, 0.0
      %v1288 = vmax.f32 %v1205, 0.0
      %v1289 = vmax.f32 %v1254, 0.0
      %v1290 = vmax.f32 %v1208, 0.0
      %v1291 = vmax.f32 %v1257, 0.0
      %v1292 = vmax.f32 %v1210, 0.0
      %v1293 = vmax.f32 %v1259, 0.0
      %v1294 = vmax.f32 %v1213, 0.0
      %v1295 = vmax.f32 %v1262, 0.0
      %v1296 = vmax.f32 %v1215, 0.0
      %v1297 = vmax.f32 %v1264, 0.0
      %v1298 = vadd.f32 %v1266, %v1267
      %1299 = vadd.xlane.f32.xlu0 %v1298
      %v1300 = vpop.xlane.xlu0 %1299
      %v1301 = vadd.f32 %v1268, %v1269
      %1302 = vadd.xlane.f32.xlu0 %v1301
      %v1303 = vpop.xlane.xlu0 %1302
      %v1304 = vadd.f32 %v1270, %v1271
      %1305 = vadd.xlane.f32.xlu0 %v1304
      %v1306 = vpop.xlane.xlu0 %1305
      %v1307 = vadd.f32 %v1272, %v1273
      %1308 = vadd.xlane.f32.xlu0 %v1307
      %v1309 = vpop.xlane.xlu0 %1308
      %v1310 = vadd.f32 %v1274, %v1275
      %1311 = vadd.xlane.f32.xlu0 %v1310
      %v1312 = vpop.xlane.xlu0 %1311
      %v1313 = vadd.f32 %v1276, %v1277
      %1314 = vadd.xlane.f32.xlu0 %v1313
      %v1315 = vpop.xlane.xlu0 %1314
      %v1316 = vadd.f32 %v1278, %v1279
      %1317 = vadd.xlane.f32.xlu0 %v1316
      %v1318 = vpop.xlane.xlu0 %1317
      %v1319 = vadd.f32 %v1280, %v1281
      %1320 = vadd.xlane.f32.xlu0 %v1319
      %v1321 = vpop.xlane.xlu0 %1320
      %v1322 = vadd.f32 %v1282, %v1283
      %1323 = vadd.xlane.f32.xlu0 %v1322
      %v1324 = vpop.xlane.xlu0 %1323
      %v1325 = vadd.f32 %v1284, %v1285
      %1326 = vadd.xlane.f32.xlu0 %v1325
      %v1327 = vpop.xlane.xlu0 %1326
      %v1328 = vadd.f32 %v1286, %v1287
      %1329 = vadd.xlane.f32.xlu0 %v1328
      %v1330 = vpop.xlane.xlu0 %1329
      %v1331 = vadd.f32 %v1288, %v1289
      %1332 = vadd.xlane.f32.xlu0 %v1331
      %v1333 = vpop.xlane.xlu0 %1332
      %v1334 = vadd.f32 %v1290, %v1291
      %1335 = vadd.xlane.f32.xlu0 %v1334
      %v1336 = vpop.xlane.xlu0 %1335
      %v1337 = vadd.f32 %v1292, %v1293
      %1338 = vadd.xlane.f32.xlu0 %v1337
      %v1339 = vpop.xlane.xlu0 %1338
      %v1340 = vadd.f32 %v1294, %v1295
      %1341 = vadd.xlane.f32.xlu0 %v1340
      %v1342 = vpop.xlane.xlu0 %1341
      %v1343 = vadd.f32 %v1296, %v1297
      %1344 = vadd.xlane.f32.xlu0 %v1343
      %v1345 = vpop.xlane.xlu0 %1344
      %s1346 = scalar_lea.vmem %s512, 48
      %v1347 = vld [vmem:[%s1346] sm:$0xff]
      %v1348 = vld [vmem:[%s1346 + $0x8] sm:$0x11]
      %v1351 = vunpack.c.l.b16 %v1347
      %v1352 = vunpack.c.h.b16 %v1347
      %v1353 = vunpack.c.l.b16 %v1348
      %v1354 = vunpack.c.h.b16 %v1348
      %v1355 = vpack.c.b16 %v1353, %v1351
      %v1356 = vpack.c.b16 %v1354, %v1352
      %v1358 = vand.u32 %v1355, %v771
      %v1361 = vand.u32 %v1356, %v771
      %1363 = vmatpush.bf16.msra.mxu0 0
      %1364 = vmatpush.bf16.msra.mxu0 0
      %1365 = vmatpush.bf16.msra.mxu0 0
      %1366 = vmatpush.bf16.msra.mxu0 0
      %1367 = vmatpush.bf16.msra.mxu0 0
      %1368 = vmatpush.bf16.msra.mxu0 0
      %1369 = vmatpush.bf16.msra.mxu0 0
      %1370 = vmatpush.bf16.msra.mxu0 %v1358
      %1371 = vmatmul.bf16.gmra.mxu0 %v745
      %v1372 = vpop.f32.mrf.mxu0
      %v1373 = vadd.f32 %v618, %v1372
      %v1374 = vpop.f32.mrf.mxu0
      %v1375 = vadd.f32 %v623, %v1374
      %1376 = vmatmul.bf16.gmra.mxu0 %v748
      %v1377 = vpop.f32.mrf.mxu0
      %v1378 = vadd.f32 %v628, %v1377
      %v1379 = vpop.f32.mrf.mxu0
      %v1380 = vadd.f32 %v633, %v1379
      %1381 = vmatmul.bf16.gmra.mxu0 %v751
      %v1382 = vpop.f32.mrf.mxu0
      %v1383 = vadd.f32 %v638, %v1382
      %v1384 = vpop.f32.mrf.mxu0
      %v1385 = vadd.f32 %v643, %v1384
      %1386 = vmatmul.bf16.gmra.mxu0 %v754
      %v1387 = vpop.f32.mrf.mxu0
      %v1388 = vadd.f32 %v648, %v1387
      %v1389 = vpop.f32.mrf.mxu0
      %v1390 = vadd.f32 %v653, %v1389
      %1391 = vmatmul.bf16.gmra.mxu0 %v757
      %v1392 = vpop.f32.mrf.mxu0
      %v1393 = vadd.f32 %v658, %v1392
      %v1394 = vpop.f32.mrf.mxu0
      %v1395 = vadd.f32 %v663, %v1394
      %1396 = vmatmul.bf16.gmra.mxu0 %v760
      %v1397 = vpop.f32.mrf.mxu0
      %v1398 = vadd.f32 %v668, %v1397
      %v1399 = vpop.f32.mrf.mxu0
      %v1400 = vadd.f32 %v673, %v1399
      %1401 = vmatmul.bf16.gmra.mxu0 %v763
      %v1402 = vpop.f32.mrf.mxu0
      %v1403 = vadd.f32 %v678, %v1402
      %v1404 = vpop.f32.mrf.mxu0
      %v1405 = vadd.f32 %v683, %v1404
      %1406 = vmatmul.bf16.gmra.mxu0 %v766
      %v1407 = vpop.f32.mrf.mxu0
      %v1408 = vadd.f32 %v688, %v1407
      %v1409 = vpop.f32.mrf.mxu0
      %v1410 = vadd.f32 %v693, %v1409
      %1411 = vdwg.mxu0
      %1412 = vmatpush.bf16.msra.mxu0 0
      %1413 = vmatpush.bf16.msra.mxu0 0
      %1414 = vmatpush.bf16.msra.mxu0 0
      %1415 = vmatpush.bf16.msra.mxu0 0
      %1416 = vmatpush.bf16.msra.mxu0 0
      %1417 = vmatpush.bf16.msra.mxu0 0
      %1418 = vmatpush.bf16.msra.mxu0 0
      %1419 = vmatpush.bf16.msra.mxu0 %v1361
      %1420 = vmatmul.bf16.gmra.mxu0 %v745
      %v1421 = vpop.f32.mrf.mxu0
      %v1422 = vadd.f32 %v618, %v1421
      %v1423 = vpop.f32.mrf.mxu0
      %v1424 = vadd.f32 %v623, %v1423
      %1425 = vmatmul.bf16.gmra.mxu0 %v748
      %v1426 = vpop.f32.mrf.mxu0
      %v1427 = vadd.f32 %v628, %v1426
      %v1428 = vpop.f32.mrf.mxu0
      %v1429 = vadd.f32 %v633, %v1428
      %1430 = vmatmul.bf16.gmra.mxu0 %v751
      %v1431 = vpop.f32.mrf.mxu0
      %v1432 = vadd.f32 %v638, %v1431
      %v1433 = vpop.f32.mrf.mxu0
      %v1434 = vadd.f32 %v643, %v1433
      %1435 = vmatmul.bf16.gmra.mxu0 %v754
      %v1436 = vpop.f32.mrf.mxu0
      %v1437 = vadd.f32 %v648, %v1436
      %v1438 = vpop.f32.mrf.mxu0
      %v1439 = vadd.f32 %v653, %v1438
      %1440 = vmatmul.bf16.gmra.mxu0 %v757
      %v1441 = vpop.f32.mrf.mxu0
      %v1442 = vadd.f32 %v658, %v1441
      %v1443 = vpop.f32.mrf.mxu0
      %v1444 = vadd.f32 %v663, %v1443
      %1445 = vmatmul.bf16.gmra.mxu0 %v760
      %v1446 = vpop.f32.mrf.mxu0
      %v1447 = vadd.f32 %v668, %v1446
      %v1448 = vpop.f32.mrf.mxu0
      %v1449 = vadd.f32 %v673, %v1448
      %1450 = vmatmul.bf16.gmra.mxu0 %v763
      %v1451 = vpop.f32.mrf.mxu0
      %v1452 = vadd.f32 %v678, %v1451
      %v1453 = vpop.f32.mrf.mxu0
      %v1454 = vadd.f32 %v683, %v1453
      %1455 = vmatmul.bf16.gmra.mxu0 %v766
      %v1456 = vpop.f32.mrf.mxu0
      %v1457 = vadd.f32 %v688, %v1456
      %v1458 = vpop.f32.mrf.mxu0
      %v1459 = vadd.f32 %v693, %v1458
      %1460 = vdwg.mxu0
      %v1461 = vmax.f32 %v1373, 0.0
      %v1462 = vmax.f32 %v1422, 0.0
      %v1463 = vmax.f32 %v1375, 0.0
      %v1464 = vmax.f32 %v1424, 0.0
      %v1465 = vmax.f32 %v1378, 0.0
      %v1466 = vmax.f32 %v1427, 0.0
      %v1467 = vmax.f32 %v1380, 0.0
      %v1468 = vmax.f32 %v1429, 0.0
      %v1469 = vmax.f32 %v1383, 0.0
      %v1470 = vmax.f32 %v1432, 0.0
      %v1471 = vmax.f32 %v1385, 0.0
      %v1472 = vmax.f32 %v1434, 0.0
      %v1473 = vmax.f32 %v1388, 0.0
      %v1474 = vmax.f32 %v1437, 0.0
      %v1475 = vmax.f32 %v1390, 0.0
      %v1476 = vmax.f32 %v1439, 0.0
      %v1477 = vmax.f32 %v1393, 0.0
      %v1478 = vmax.f32 %v1442, 0.0
      %v1479 = vmax.f32 %v1395, 0.0
      %v1480 = vmax.f32 %v1444, 0.0
      %v1481 = vmax.f32 %v1398, 0.0
      %v1482 = vmax.f32 %v1447, 0.0
      %v1483 = vmax.f32 %v1400, 0.0
      %v1484 = vmax.f32 %v1449, 0.0
      %v1485 = vmax.f32 %v1403, 0.0
      %v1486 = vmax.f32 %v1452, 0.0
      %v1487 = vmax.f32 %v1405, 0.0
      %v1488 = vmax.f32 %v1454, 0.0
      %v1489 = vmax.f32 %v1408, 0.0
      %v1490 = vmax.f32 %v1457, 0.0
      %v1491 = vmax.f32 %v1410, 0.0
      %v1492 = vmax.f32 %v1459, 0.0
      %v1493 = vadd.f32 %v1461, %v1462
      %1494 = vadd.xlane.f32.xlu0 %v1493
      %v1495 = vpop.xlane.xlu0 %1494
      %v1496 = vadd.f32 %v1463, %v1464
      %1497 = vadd.xlane.f32.xlu0 %v1496
      %v1498 = vpop.xlane.xlu0 %1497
      %v1499 = vadd.f32 %v1465, %v1466
      %1500 = vadd.xlane.f32.xlu0 %v1499
      %v1501 = vpop.xlane.xlu0 %1500
      %v1502 = vadd.f32 %v1467, %v1468
      %1503 = vadd.xlane.f32.xlu0 %v1502
      %v1504 = vpop.xlane.xlu0 %1503
      %v1505 = vadd.f32 %v1469, %v1470
      %1506 = vadd.xlane.f32.xlu0 %v1505
      %v1507 = vpop.xlane.xlu0 %1506
      %v1508 = vadd.f32 %v1471, %v1472
      %1509 = vadd.xlane.f32.xlu0 %v1508
      %v1510 = vpop.xlane.xlu0 %1509
      %v1511 = vadd.f32 %v1473, %v1474
      %1512 = vadd.xlane.f32.xlu0 %v1511
      %v1513 = vpop.xlane.xlu0 %1512
      %v1514 = vadd.f32 %v1475, %v1476
      %1515 = vadd.xlane.f32.xlu0 %v1514
      %v1516 = vpop.xlane.xlu0 %1515
      %v1517 = vadd.f32 %v1477, %v1478
      %1518 = vadd.xlane.f32.xlu0 %v1517
      %v1519 = vpop.xlane.xlu0 %1518
      %v1520 = vadd.f32 %v1479, %v1480
      %1521 = vadd.xlane.f32.xlu0 %v1520
      %v1522 = vpop.xlane.xlu0 %1521
      %v1523 = vadd.f32 %v1481, %v1482
      %1524 = vadd.xlane.f32.xlu0 %v1523
      %v1525 = vpop.xlane.xlu0 %1524
      %v1526 = vadd.f32 %v1483, %v1484
      %1527 = vadd.xlane.f32.xlu0 %v1526
      %v1528 = vpop.xlane.xlu0 %1527
      %v1529 = vadd.f32 %v1485, %v1486
      %1530 = vadd.xlane.f32.xlu0 %v1529
      %v1531 = vpop.xlane.xlu0 %1530
      %v1532 = vadd.f32 %v1487, %v1488
      %1533 = vadd.xlane.f32.xlu0 %v1532
      %v1534 = vpop.xlane.xlu0 %1533
      %v1535 = vadd.f32 %v1489, %v1490
      %1536 = vadd.xlane.f32.xlu0 %v1535
      %v1537 = vpop.xlane.xlu0 %1536
      %v1538 = vadd.f32 %v1491, %v1492
      %1539 = vadd.xlane.f32.xlu0 %v1538
      %v1540 = vpop.xlane.xlu0 %1539
      %s1541 = scalar_lea.vmem %s512, 64
      %v1542 = vld [vmem:[%s1541] sm:$0xff]
      %v1543 = vld [vmem:[%s1541 + $0x8] sm:$0x11]
      %v1546 = vunpack.c.l.b16 %v1542
      %v1547 = vunpack.c.h.b16 %v1542
      %v1548 = vunpack.c.l.b16 %v1543
      %v1549 = vunpack.c.h.b16 %v1543
      %v1550 = vpack.c.b16 %v1548, %v1546
      %v1551 = vpack.c.b16 %v1549, %v1547
      %v1553 = vand.u32 %v1550, %v771
      %v1556 = vand.u32 %v1551, %v771
      %1558 = vmatpush.bf16.msra.mxu0 0
      %1559 = vmatpush.bf16.msra.mxu0 0
      %1560 = vmatpush.bf16.msra.mxu0 0
      %1561 = vmatpush.bf16.msra.mxu0 0
      %1562 = vmatpush.bf16.msra.mxu0 0
      %1563 = vmatpush.bf16.msra.mxu0 0
      %1564 = vmatpush.bf16.msra.mxu0 0
      %1565 = vmatpush.bf16.msra.mxu0 %v1553
      %1566 = vmatmul.bf16.gmra.mxu0 %v745
      %v1567 = vpop.f32.mrf.mxu0
      %v1568 = vadd.f32 %v618, %v1567
      %v1569 = vpop.f32.mrf.mxu0
      %v1570 = vadd.f32 %v623, %v1569
      %1571 = vmatmul.bf16.gmra.mxu0 %v748
      %v1572 = vpop.f32.mrf.mxu0
      %v1573 = vadd.f32 %v628, %v1572
      %v1574 = vpop.f32.mrf.mxu0
      %v1575 = vadd.f32 %v633, %v1574
      %1576 = vmatmul.bf16.gmra.mxu0 %v751
      %v1577 = vpop.f32.mrf.mxu0
      %v1578 = vadd.f32 %v638, %v1577
      %v1579 = vpop.f32.mrf.mxu0
      %v1580 = vadd.f32 %v643, %v1579
      %1581 = vmatmul.bf16.gmra.mxu0 %v754
      %v1582 = vpop.f32.mrf.mxu0
      %v1583 = vadd.f32 %v648, %v1582
      %v1584 = vpop.f32.mrf.mxu0
      %v1585 = vadd.f32 %v653, %v1584
      %1586 = vmatmul.bf16.gmra.mxu0 %v757
      %v1587 = vpop.f32.mrf.mxu0
      %v1588 = vadd.f32 %v658, %v1587
      %v1589 = vpop.f32.mrf.mxu0
      %v1590 = vadd.f32 %v663, %v1589
      %1591 = vmatmul.bf16.gmra.mxu0 %v760
      %v1592 = vpop.f32.mrf.mxu0
      %v1593 = vadd.f32 %v668, %v1592
      %v1594 = vpop.f32.mrf.mxu0
      %v1595 = vadd.f32 %v673, %v1594
      %1596 = vmatmul.bf16.gmra.mxu0 %v763
      %v1597 = vpop.f32.mrf.mxu0
      %v1598 = vadd.f32 %v678, %v1597
      %v1599 = vpop.f32.mrf.mxu0
      %v1600 = vadd.f32 %v683, %v1599
      %1601 = vmatmul.bf16.gmra.mxu0 %v766
      %v1602 = vpop.f32.mrf.mxu0
      %v1603 = vadd.f32 %v688, %v1602
      %v1604 = vpop.f32.mrf.mxu0
      %v1605 = vadd.f32 %v693, %v1604
      %1606 = vdwg.mxu0
      %1607 = vmatpush.bf16.msra.mxu0 0
      %1608 = vmatpush.bf16.msra.mxu0 0
      %1609 = vmatpush.bf16.msra.mxu0 0
      %1610 = vmatpush.bf16.msra.mxu0 0
      %1611 = vmatpush.bf16.msra.mxu0 0
      %1612 = vmatpush.bf16.msra.mxu0 0
      %1613 = vmatpush.bf16.msra.mxu0 0
      %1614 = vmatpush.bf16.msra.mxu0 %v1556
      %1615 = vmatmul.bf16.gmra.mxu0 %v745
      %v1616 = vpop.f32.mrf.mxu0
      %v1617 = vadd.f32 %v618, %v1616
      %v1618 = vpop.f32.mrf.mxu0
      %v1619 = vadd.f32 %v623, %v1618
      %1620 = vmatmul.bf16.gmra.mxu0 %v748
      %v1621 = vpop.f32.mrf.mxu0
      %v1622 = vadd.f32 %v628, %v1621
      %v1623 = vpop.f32.mrf.mxu0
      %v1624 = vadd.f32 %v633, %v1623
      %1625 = vmatmul.bf16.gmra.mxu0 %v751
      %v1626 = vpop.f32.mrf.mxu0
      %v1627 = vadd.f32 %v638, %v1626
      %v1628 = vpop.f32.mrf.mxu0
      %v1629 = vadd.f32 %v643, %v1628
      %1630 = vmatmul.bf16.gmra.mxu0 %v754
      %v1631 = vpop.f32.mrf.mxu0
      %v1632 = vadd.f32 %v648, %v1631
      %v1633 = vpop.f32.mrf.mxu0
      %v1634 = vadd.f32 %v653, %v1633
      %1635 = vmatmul.bf16.gmra.mxu0 %v757
      %v1636 = vpop.f32.mrf.mxu0
      %v1637 = vadd.f32 %v658, %v1636
      %v1638 = vpop.f32.mrf.mxu0
      %v1639 = vadd.f32 %v663, %v1638
      %1640 = vmatmul.bf16.gmra.mxu0 %v760
      %v1641 = vpop.f32.mrf.mxu0
      %v1642 = vadd.f32 %v668, %v1641
      %v1643 = vpop.f32.mrf.mxu0
      %v1644 = vadd.f32 %v673, %v1643
      %1645 = vmatmul.bf16.gmra.mxu0 %v763
      %v1646 = vpop.f32.mrf.mxu0
      %v1647 = vadd.f32 %v678, %v1646
      %v1648 = vpop.f32.mrf.mxu0
      %v1649 = vadd.f32 %v683, %v1648
      %1650 = vmatmul.bf16.gmra.mxu0 %v766
      %v1651 = vpop.f32.mrf.mxu0
      %v1652 = vadd.f32 %v688, %v1651
      %v1653 = vpop.f32.mrf.mxu0
      %v1654 = vadd.f32 %v693, %v1653
      %1655 = vdwg.mxu0
      %v1656 = vmax.f32 %v1568, 0.0
      %v1657 = vmax.f32 %v1617, 0.0
      %v1658 = vmax.f32 %v1570, 0.0
      %v1659 = vmax.f32 %v1619, 0.0
      %v1660 = vmax.f32 %v1573, 0.0
      %v1661 = vmax.f32 %v1622, 0.0
      %v1662 = vmax.f32 %v1575, 0.0
      %v1663 = vmax.f32 %v1624, 0.0
      %v1664 = vmax.f32 %v1578, 0.0
      %v1665 = vmax.f32 %v1627, 0.0
      %v1666 = vmax.f32 %v1580, 0.0
      %v1667 = vmax.f32 %v1629, 0.0
      %v1668 = vmax.f32 %v1583, 0.0
      %v1669 = vmax.f32 %v1632, 0.0
      %v1670 = vmax.f32 %v1585, 0.0
      %v1671 = vmax.f32 %v1634, 0.0
      %v1672 = vmax.f32 %v1588, 0.0
      %v1673 = vmax.f32 %v1637, 0.0
      %v1674 = vmax.f32 %v1590, 0.0
      %v1675 = vmax.f32 %v1639, 0.0
      %v1676 = vmax.f32 %v1593, 0.0
      %v1677 = vmax.f32 %v1642, 0.0
      %v1678 = vmax.f32 %v1595, 0.0
      %v1679 = vmax.f32 %v1644, 0.0
      %v1680 = vmax.f32 %v1598, 0.0
      %v1681 = vmax.f32 %v1647, 0.0
      %v1682 = vmax.f32 %v1600, 0.0
      %v1683 = vmax.f32 %v1649, 0.0
      %v1684 = vmax.f32 %v1603, 0.0
      %v1685 = vmax.f32 %v1652, 0.0
      %v1686 = vmax.f32 %v1605, 0.0
      %v1687 = vmax.f32 %v1654, 0.0
      %v1688 = vadd.f32 %v1656, %v1657
      %1689 = vadd.xlane.f32.xlu0 %v1688
      %v1690 = vpop.xlane.xlu0 %1689
      %v1691 = vadd.f32 %v1658, %v1659
      %1692 = vadd.xlane.f32.xlu0 %v1691
      %v1693 = vpop.xlane.xlu0 %1692
      %v1694 = vadd.f32 %v1660, %v1661
      %1695 = vadd.xlane.f32.xlu0 %v1694
      %v1696 = vpop.xlane.xlu0 %1695
      %v1697 = vadd.f32 %v1662, %v1663
      %1698 = vadd.xlane.f32.xlu0 %v1697
      %v1699 = vpop.xlane.xlu0 %1698
      %v1700 = vadd.f32 %v1664, %v1665
      %1701 = vadd.xlane.f32.xlu0 %v1700
      %v1702 = vpop.xlane.xlu0 %1701
      %v1703 = vadd.f32 %v1666, %v1667
      %1704 = vadd.xlane.f32.xlu0 %v1703
      %v1705 = vpop.xlane.xlu0 %1704
      %v1706 = vadd.f32 %v1668, %v1669
      %1707 = vadd.xlane.f32.xlu0 %v1706
      %v1708 = vpop.xlane.xlu0 %1707
      %v1709 = vadd.f32 %v1670, %v1671
      %1710 = vadd.xlane.f32.xlu0 %v1709
      %v1711 = vpop.xlane.xlu0 %1710
      %v1712 = vadd.f32 %v1672, %v1673
      %1713 = vadd.xlane.f32.xlu0 %v1712
      %v1714 = vpop.xlane.xlu0 %1713
      %v1715 = vadd.f32 %v1674, %v1675
      %1716 = vadd.xlane.f32.xlu0 %v1715
      %v1717 = vpop.xlane.xlu0 %1716
      %v1718 = vadd.f32 %v1676, %v1677
      %1719 = vadd.xlane.f32.xlu0 %v1718
      %v1720 = vpop.xlane.xlu0 %1719
      %v1721 = vadd.f32 %v1678, %v1679
      %1722 = vadd.xlane.f32.xlu0 %v1721
      %v1723 = vpop.xlane.xlu0 %1722
      %v1724 = vadd.f32 %v1680, %v1681
      %1725 = vadd.xlane.f32.xlu0 %v1724
      %v1726 = vpop.xlane.xlu0 %1725
      %v1727 = vadd.f32 %v1682, %v1683
      %1728 = vadd.xlane.f32.xlu0 %v1727
      %v1729 = vpop.xlane.xlu0 %1728
      %v1730 = vadd.f32 %v1684, %v1685
      %1731 = vadd.xlane.f32.xlu0 %v1730
      %v1732 = vpop.xlane.xlu0 %1731
      %v1733 = vadd.f32 %v1686, %v1687
      %1734 = vadd.xlane.f32.xlu0 %v1733
      %v1735 = vpop.xlane.xlu0 %1734
      %s1736 = scalar_lea.vmem %s512, 80
      %v1737 = vld [vmem:[%s1736] sm:$0xff]
      %v1738 = vld [vmem:[%s1736 + $0x8] sm:$0x11]
      %v1741 = vunpack.c.l.b16 %v1737
      %v1742 = vunpack.c.h.b16 %v1737
      %v1743 = vunpack.c.l.b16 %v1738
      %v1744 = vunpack.c.h.b16 %v1738
      %v1745 = vpack.c.b16 %v1743, %v1741
      %v1746 = vpack.c.b16 %v1744, %v1742
      %v1748 = vand.u32 %v1745, %v771
      %v1751 = vand.u32 %v1746, %v771
      %1753 = vmatpush.bf16.msra.mxu0 0
      %1754 = vmatpush.bf16.msra.mxu0 0
      %1755 = vmatpush.bf16.msra.mxu0 0
      %1756 = vmatpush.bf16.msra.mxu0 0
      %1757 = vmatpush.bf16.msra.mxu0 0
      %1758 = vmatpush.bf16.msra.mxu0 0
      %1759 = vmatpush.bf16.msra.mxu0 0
      %1760 = vmatpush.bf16.msra.mxu0 %v1748
      %1761 = vmatmul.bf16.gmra.mxu0 %v745
      %v1762 = vpop.f32.mrf.mxu0
      %v1763 = vadd.f32 %v618, %v1762
      %v1764 = vpop.f32.mrf.mxu0
      %v1765 = vadd.f32 %v623, %v1764
      %1766 = vmatmul.bf16.gmra.mxu0 %v748
      %v1767 = vpop.f32.mrf.mxu0
      %v1768 = vadd.f32 %v628, %v1767
      %v1769 = vpop.f32.mrf.mxu0
      %v1770 = vadd.f32 %v633, %v1769
      %1771 = vmatmul.bf16.gmra.mxu0 %v751
      %v1772 = vpop.f32.mrf.mxu0
      %v1773 = vadd.f32 %v638, %v1772
      %v1774 = vpop.f32.mrf.mxu0
      %v1775 = vadd.f32 %v643, %v1774
      %1776 = vmatmul.bf16.gmra.mxu0 %v754
      %v1777 = vpop.f32.mrf.mxu0
      %v1778 = vadd.f32 %v648, %v1777
      %v1779 = vpop.f32.mrf.mxu0
      %v1780 = vadd.f32 %v653, %v1779
      %1781 = vmatmul.bf16.gmra.mxu0 %v757
      %v1782 = vpop.f32.mrf.mxu0
      %v1783 = vadd.f32 %v658, %v1782
      %v1784 = vpop.f32.mrf.mxu0
      %v1785 = vadd.f32 %v663, %v1784
      %1786 = vmatmul.bf16.gmra.mxu0 %v760
      %v1787 = vpop.f32.mrf.mxu0
      %v1788 = vadd.f32 %v668, %v1787
      %v1789 = vpop.f32.mrf.mxu0
      %v1790 = vadd.f32 %v673, %v1789
      %1791 = vmatmul.bf16.gmra.mxu0 %v763
      %v1792 = vpop.f32.mrf.mxu0
      %v1793 = vadd.f32 %v678, %v1792
      %v1794 = vpop.f32.mrf.mxu0
      %v1795 = vadd.f32 %v683, %v1794
      %1796 = vmatmul.bf16.gmra.mxu0 %v766
      %v1797 = vpop.f32.mrf.mxu0
      %v1798 = vadd.f32 %v688, %v1797
      %v1799 = vpop.f32.mrf.mxu0
      %v1800 = vadd.f32 %v693, %v1799
      %1801 = vdwg.mxu0
      %1802 = vmatpush.bf16.msra.mxu0 0
      %1803 = vmatpush.bf16.msra.mxu0 0
      %1804 = vmatpush.bf16.msra.mxu0 0
      %1805 = vmatpush.bf16.msra.mxu0 0
      %1806 = vmatpush.bf16.msra.mxu0 0
      %1807 = vmatpush.bf16.msra.mxu0 0
      %1808 = vmatpush.bf16.msra.mxu0 0
      %1809 = vmatpush.bf16.msra.mxu0 %v1751
      %1810 = vmatmul.bf16.gmra.mxu0 %v745
      %v1811 = vpop.f32.mrf.mxu0
      %v1812 = vadd.f32 %v618, %v1811
      %v1813 = vpop.f32.mrf.mxu0
      %v1814 = vadd.f32 %v623, %v1813
      %1815 = vmatmul.bf16.gmra.mxu0 %v748
      %v1816 = vpop.f32.mrf.mxu0
      %v1817 = vadd.f32 %v628, %v1816
      %v1818 = vpop.f32.mrf.mxu0
      %v1819 = vadd.f32 %v633, %v1818
      %1820 = vmatmul.bf16.gmra.mxu0 %v751
      %v1821 = vpop.f32.mrf.mxu0
      %v1822 = vadd.f32 %v638, %v1821
      %v1823 = vpop.f32.mrf.mxu0
      %v1824 = vadd.f32 %v643, %v1823
      %1825 = vmatmul.bf16.gmra.mxu0 %v754
      %v1826 = vpop.f32.mrf.mxu0
      %v1827 = vadd.f32 %v648, %v1826
      %v1828 = vpop.f32.mrf.mxu0
      %v1829 = vadd.f32 %v653, %v1828
      %1830 = vmatmul.bf16.gmra.mxu0 %v757
      %v1831 = vpop.f32.mrf.mxu0
      %v1832 = vadd.f32 %v658, %v1831
      %v1833 = vpop.f32.mrf.mxu0
      %v1834 = vadd.f32 %v663, %v1833
      %1835 = vmatmul.bf16.gmra.mxu0 %v760
      %v1836 = vpop.f32.mrf.mxu0
      %v1837 = vadd.f32 %v668, %v1836
      %v1838 = vpop.f32.mrf.mxu0
      %v1839 = vadd.f32 %v673, %v1838
      %1840 = vmatmul.bf16.gmra.mxu0 %v763
      %v1841 = vpop.f32.mrf.mxu0
      %v1842 = vadd.f32 %v678, %v1841
      %v1843 = vpop.f32.mrf.mxu0
      %v1844 = vadd.f32 %v683, %v1843
      %1845 = vmatmul.bf16.gmra.mxu0 %v766
      %v1846 = vpop.f32.mrf.mxu0
      %v1847 = vadd.f32 %v688, %v1846
      %v1848 = vpop.f32.mrf.mxu0
      %v1849 = vadd.f32 %v693, %v1848
      %1850 = vdwg.mxu0
      %v1851 = vmax.f32 %v1763, 0.0
      %v1852 = vmax.f32 %v1812, 0.0
      %v1853 = vmax.f32 %v1765, 0.0
      %v1854 = vmax.f32 %v1814, 0.0
      %v1855 = vmax.f32 %v1768, 0.0
      %v1856 = vmax.f32 %v1817, 0.0
      %v1857 = vmax.f32 %v1770, 0.0
      %v1858 = vmax.f32 %v1819, 0.0
      %v1859 = vmax.f32 %v1773, 0.0
      %v1860 = vmax.f32 %v1822, 0.0
      %v1861 = vmax.f32 %v1775, 0.0
      %v1862 = vmax.f32 %v1824, 0.0
      %v1863 = vmax.f32 %v1778, 0.0
      %v1864 = vmax.f32 %v1827, 0.0
      %v1865 = vmax.f32 %v1780, 0.0
      %v1866 = vmax.f32 %v1829, 0.0
      %v1867 = vmax.f32 %v1783, 0.0
      %v1868 = vmax.f32 %v1832, 0.0
      %v1869 = vmax.f32 %v1785, 0.0
      %v1870 = vmax.f32 %v1834, 0.0
      %v1871 = vmax.f32 %v1788, 0.0
      %v1872 = vmax.f32 %v1837, 0.0
      %v1873 = vmax.f32 %v1790, 0.0
      %v1874 = vmax.f32 %v1839, 0.0
      %v1875 = vmax.f32 %v1793, 0.0
      %v1876 = vmax.f32 %v1842, 0.0
      %v1877 = vmax.f32 %v1795, 0.0
      %v1878 = vmax.f32 %v1844, 0.0
      %v1879 = vmax.f32 %v1798, 0.0
      %v1880 = vmax.f32 %v1847, 0.0
      %v1881 = vmax.f32 %v1800, 0.0
      %v1882 = vmax.f32 %v1849, 0.0
      %v1883 = vadd.f32 %v1851, %v1852
      %1884 = vadd.xlane.f32.xlu0 %v1883
      %v1885 = vpop.xlane.xlu0 %1884
      %v1886 = vadd.f32 %v1853, %v1854
      %1887 = vadd.xlane.f32.xlu0 %v1886
      %v1888 = vpop.xlane.xlu0 %1887
      %v1889 = vadd.f32 %v1855, %v1856
      %1890 = vadd.xlane.f32.xlu0 %v1889
      %v1891 = vpop.xlane.xlu0 %1890
      %v1892 = vadd.f32 %v1857, %v1858
      %1893 = vadd.xlane.f32.xlu0 %v1892
      %v1894 = vpop.xlane.xlu0 %1893
      %v1895 = vadd.f32 %v1859, %v1860
      %1896 = vadd.xlane.f32.xlu0 %v1895
      %v1897 = vpop.xlane.xlu0 %1896
      %v1898 = vadd.f32 %v1861, %v1862
      %1899 = vadd.xlane.f32.xlu0 %v1898
      %v1900 = vpop.xlane.xlu0 %1899
      %v1901 = vadd.f32 %v1863, %v1864
      %1902 = vadd.xlane.f32.xlu0 %v1901
      %v1903 = vpop.xlane.xlu0 %1902
      %v1904 = vadd.f32 %v1865, %v1866
      %1905 = vadd.xlane.f32.xlu0 %v1904
      %v1906 = vpop.xlane.xlu0 %1905
      %v1907 = vadd.f32 %v1867, %v1868
      %1908 = vadd.xlane.f32.xlu0 %v1907
      %v1909 = vpop.xlane.xlu0 %1908
      %v1910 = vadd.f32 %v1869, %v1870
      %1911 = vadd.xlane.f32.xlu0 %v1910
      %v1912 = vpop.xlane.xlu0 %1911
      %v1913 = vadd.f32 %v1871, %v1872
      %1914 = vadd.xlane.f32.xlu0 %v1913
      %v1915 = vpop.xlane.xlu0 %1914
      %v1916 = vadd.f32 %v1873, %v1874
      %1917 = vadd.xlane.f32.xlu0 %v1916
      %v1918 = vpop.xlane.xlu0 %1917
      %v1919 = vadd.f32 %v1875, %v1876
      %1920 = vadd.xlane.f32.xlu0 %v1919
      %v1921 = vpop.xlane.xlu0 %1920
      %v1922 = vadd.f32 %v1877, %v1878
      %1923 = vadd.xlane.f32.xlu0 %v1922
      %v1924 = vpop.xlane.xlu0 %1923
      %v1925 = vadd.f32 %v1879, %v1880
      %1926 = vadd.xlane.f32.xlu0 %v1925
      %v1927 = vpop.xlane.xlu0 %1926
      %v1928 = vadd.f32 %v1881, %v1882
      %1929 = vadd.xlane.f32.xlu0 %v1928
      %v1930 = vpop.xlane.xlu0 %1929
      %s1931 = scalar_lea.vmem %s512, 96
      %v1932 = vld [vmem:[%s1931] sm:$0xff]
      %v1933 = vld [vmem:[%s1931 + $0x8] sm:$0x11]
      %v1936 = vunpack.c.l.b16 %v1932
      %v1937 = vunpack.c.h.b16 %v1932
      %v1938 = vunpack.c.l.b16 %v1933
      %v1939 = vunpack.c.h.b16 %v1933
      %v1940 = vpack.c.b16 %v1938, %v1936
      %v1941 = vpack.c.b16 %v1939, %v1937
      %v1943 = vand.u32 %v1940, %v771
      %v1946 = vand.u32 %v1941, %v771
      %1948 = vmatpush.bf16.msra.mxu0 0
      %1949 = vmatpush.bf16.msra.mxu0 0
      %1950 = vmatpush.bf16.msra.mxu0 0
      %1951 = vmatpush.bf16.msra.mxu0 0
      %1952 = vmatpush.bf16.msra.mxu0 0
      %1953 = vmatpush.bf16.msra.mxu0 0
      %1954 = vmatpush.bf16.msra.mxu0 0
      %1955 = vmatpush.bf16.msra.mxu0 %v1943
      %1956 = vmatmul.bf16.gmra.mxu0 %v745
      %v1957 = vpop.f32.mrf.mxu0
      %v1958 = vadd.f32 %v618, %v1957
      %v1959 = vpop.f32.mrf.mxu0
      %v1960 = vadd.f32 %v623, %v1959
      %1961 = vmatmul.bf16.gmra.mxu0 %v748
      %v1962 = vpop.f32.mrf.mxu0
      %v1963 = vadd.f32 %v628, %v1962
      %v1964 = vpop.f32.mrf.mxu0
      %v1965 = vadd.f32 %v633, %v1964
      %1966 = vmatmul.bf16.gmra.mxu0 %v751
      %v1967 = vpop.f32.mrf.mxu0
      %v1968 = vadd.f32 %v638, %v1967
      %v1969 = vpop.f32.mrf.mxu0
      %v1970 = vadd.f32 %v643, %v1969
      %1971 = vmatmul.bf16.gmra.mxu0 %v754
      %v1972 = vpop.f32.mrf.mxu0
      %v1973 = vadd.f32 %v648, %v1972
      %v1974 = vpop.f32.mrf.mxu0
      %v1975 = vadd.f32 %v653, %v1974
      %1976 = vmatmul.bf16.gmra.mxu0 %v757
      %v1977 = vpop.f32.mrf.mxu0
      %v1978 = vadd.f32 %v658, %v1977
      %v1979 = vpop.f32.mrf.mxu0
      %v1980 = vadd.f32 %v663, %v1979
      %1981 = vmatmul.bf16.gmra.mxu0 %v760
      %v1982 = vpop.f32.mrf.mxu0
      %v1983 = vadd.f32 %v668, %v1982
      %v1984 = vpop.f32.mrf.mxu0
      %v1985 = vadd.f32 %v673, %v1984
      %1986 = vmatmul.bf16.gmra.mxu0 %v763
      %v1987 = vpop.f32.mrf.mxu0
      %v1988 = vadd.f32 %v678, %v1987
      %v1989 = vpop.f32.mrf.mxu0
      %v1990 = vadd.f32 %v683, %v1989
      %1991 = vmatmul.bf16.gmra.mxu0 %v766
      %v1992 = vpop.f32.mrf.mxu0
      %v1993 = vadd.f32 %v688, %v1992
      %v1994 = vpop.f32.mrf.mxu0
      %v1995 = vadd.f32 %v693, %v1994
      %1996 = vdwg.mxu0
      %1997 = vmatpush.bf16.msra.mxu0 0
      %1998 = vmatpush.bf16.msra.mxu0 0
      %1999 = vmatpush.bf16.msra.mxu0 0
      %2000 = vmatpush.bf16.msra.mxu0 0
      %2001 = vmatpush.bf16.msra.mxu0 0
      %2002 = vmatpush.bf16.msra.mxu0 0
      %2003 = vmatpush.bf16.msra.mxu0 0
      %2004 = vmatpush.bf16.msra.mxu0 %v1946
      %2005 = vmatmul.bf16.gmra.mxu0 %v745
      %v2006 = vpop.f32.mrf.mxu0
      %v2007 = vadd.f32 %v618, %v2006
      %v2008 = vpop.f32.mrf.mxu0
      %v2009 = vadd.f32 %v623, %v2008
      %2010 = vmatmul.bf16.gmra.mxu0 %v748
      %v2011 = vpop.f32.mrf.mxu0
      %v2012 = vadd.f32 %v628, %v2011
      %v2013 = vpop.f32.mrf.mxu0
      %v2014 = vadd.f32 %v633, %v2013
      %2015 = vmatmul.bf16.gmra.mxu0 %v751
      %v2016 = vpop.f32.mrf.mxu0
      %v2017 = vadd.f32 %v638, %v2016
      %v2018 = vpop.f32.mrf.mxu0
      %v2019 = vadd.f32 %v643, %v2018
      %2020 = vmatmul.bf16.gmra.mxu0 %v754
      %v2021 = vpop.f32.mrf.mxu0
      %v2022 = vadd.f32 %v648, %v2021
      %v2023 = vpop.f32.mrf.mxu0
      %v2024 = vadd.f32 %v653, %v2023
      %2025 = vmatmul.bf16.gmra.mxu0 %v757
      %v2026 = vpop.f32.mrf.mxu0
      %v2027 = vadd.f32 %v658, %v2026
      %v2028 = vpop.f32.mrf.mxu0
      %v2029 = vadd.f32 %v663, %v2028
      %2030 = vmatmul.bf16.gmra.mxu0 %v760
      %v2031 = vpop.f32.mrf.mxu0
      %v2032 = vadd.f32 %v668, %v2031
      %v2033 = vpop.f32.mrf.mxu0
      %v2034 = vadd.f32 %v673, %v2033
      %2035 = vmatmul.bf16.gmra.mxu0 %v763
      %v2036 = vpop.f32.mrf.mxu0
      %v2037 = vadd.f32 %v678, %v2036
      %v2038 = vpop.f32.mrf.mxu0
      %v2039 = vadd.f32 %v683, %v2038
      %2040 = vmatmul.bf16.gmra.mxu0 %v766
      %v2041 = vpop.f32.mrf.mxu0
      %v2042 = vadd.f32 %v688, %v2041
      %v2043 = vpop.f32.mrf.mxu0
      %v2044 = vadd.f32 %v693, %v2043
      %2045 = vdwg.mxu0
      %v2046 = vmax.f32 %v1958, 0.0
      %v2047 = vmax.f32 %v2007, 0.0
      %v2048 = vmax.f32 %v1960, 0.0
      %v2049 = vmax.f32 %v2009, 0.0
      %v2050 = vmax.f32 %v1963, 0.0
      %v2051 = vmax.f32 %v2012, 0.0
      %v2052 = vmax.f32 %v1965, 0.0
      %v2053 = vmax.f32 %v2014, 0.0
      %v2054 = vmax.f32 %v1968, 0.0
      %v2055 = vmax.f32 %v2017, 0.0
      %v2056 = vmax.f32 %v1970, 0.0
      %v2057 = vmax.f32 %v2019, 0.0
      %v2058 = vmax.f32 %v1973, 0.0
      %v2059 = vmax.f32 %v2022, 0.0
      %v2060 = vmax.f32 %v1975, 0.0
      %v2061 = vmax.f32 %v2024, 0.0
      %v2062 = vmax.f32 %v1978, 0.0
      %v2063 = vmax.f32 %v2027, 0.0
      %v2064 = vmax.f32 %v1980, 0.0
      %v2065 = vmax.f32 %v2029, 0.0
      %v2066 = vmax.f32 %v1983, 0.0
      %v2067 = vmax.f32 %v2032, 0.0
      %v2068 = vmax.f32 %v1985, 0.0
      %v2069 = vmax.f32 %v2034, 0.0
      %v2070 = vmax.f32 %v1988, 0.0
      %v2071 = vmax.f32 %v2037, 0.0
      %v2072 = vmax.f32 %v1990, 0.0
      %v2073 = vmax.f32 %v2039, 0.0
      %v2074 = vmax.f32 %v1993, 0.0
      %v2075 = vmax.f32 %v2042, 0.0
      %v2076 = vmax.f32 %v1995, 0.0
      %v2077 = vmax.f32 %v2044, 0.0
      %v2078 = vadd.f32 %v2046, %v2047
      %2079 = vadd.xlane.f32.xlu0 %v2078
      %v2080 = vpop.xlane.xlu0 %2079
      %v2081 = vadd.f32 %v2048, %v2049
      %2082 = vadd.xlane.f32.xlu0 %v2081
      %v2083 = vpop.xlane.xlu0 %2082
      %v2084 = vadd.f32 %v2050, %v2051
      %2085 = vadd.xlane.f32.xlu0 %v2084
      %v2086 = vpop.xlane.xlu0 %2085
      %v2087 = vadd.f32 %v2052, %v2053
      %2088 = vadd.xlane.f32.xlu0 %v2087
      %v2089 = vpop.xlane.xlu0 %2088
      %v2090 = vadd.f32 %v2054, %v2055
      %2091 = vadd.xlane.f32.xlu0 %v2090
      %v2092 = vpop.xlane.xlu0 %2091
      %v2093 = vadd.f32 %v2056, %v2057
      %2094 = vadd.xlane.f32.xlu0 %v2093
      %v2095 = vpop.xlane.xlu0 %2094
      %v2096 = vadd.f32 %v2058, %v2059
      %2097 = vadd.xlane.f32.xlu0 %v2096
      %v2098 = vpop.xlane.xlu0 %2097
      %v2099 = vadd.f32 %v2060, %v2061
      %2100 = vadd.xlane.f32.xlu0 %v2099
      %v2101 = vpop.xlane.xlu0 %2100
      %v2102 = vadd.f32 %v2062, %v2063
      %2103 = vadd.xlane.f32.xlu0 %v2102
      %v2104 = vpop.xlane.xlu0 %2103
      %v2105 = vadd.f32 %v2064, %v2065
      %2106 = vadd.xlane.f32.xlu0 %v2105
      %v2107 = vpop.xlane.xlu0 %2106
      %v2108 = vadd.f32 %v2066, %v2067
      %2109 = vadd.xlane.f32.xlu0 %v2108
      %v2110 = vpop.xlane.xlu0 %2109
      %v2111 = vadd.f32 %v2068, %v2069
      %2112 = vadd.xlane.f32.xlu0 %v2111
      %v2113 = vpop.xlane.xlu0 %2112
      %v2114 = vadd.f32 %v2070, %v2071
      %2115 = vadd.xlane.f32.xlu0 %v2114
      %v2116 = vpop.xlane.xlu0 %2115
      %v2117 = vadd.f32 %v2072, %v2073
      %2118 = vadd.xlane.f32.xlu0 %v2117
      %v2119 = vpop.xlane.xlu0 %2118
      %v2120 = vadd.f32 %v2074, %v2075
      %2121 = vadd.xlane.f32.xlu0 %v2120
      %v2122 = vpop.xlane.xlu0 %2121
      %v2123 = vadd.f32 %v2076, %v2077
      %2124 = vadd.xlane.f32.xlu0 %v2123
      %v2125 = vpop.xlane.xlu0 %2124
      %s2126 = scalar_lea.vmem %s512, 112
      %v2127 = vld [vmem:[%s2126] sm:$0xff]
      %v2128 = vld [vmem:[%s2126 + $0x8] sm:$0x11]
      %v2131 = vunpack.c.l.b16 %v2127
      %v2132 = vunpack.c.h.b16 %v2127
      %v2133 = vunpack.c.l.b16 %v2128
      %v2134 = vunpack.c.h.b16 %v2128
      %v2135 = vpack.c.b16 %v2133, %v2131
      %v2136 = vpack.c.b16 %v2134, %v2132
      %v2138 = vand.u32 %v2135, %v771
      %v2141 = vand.u32 %v2136, %v771
      %2143 = vmatpush.bf16.msra.mxu0 0
      %2144 = vmatpush.bf16.msra.mxu0 0
      %2145 = vmatpush.bf16.msra.mxu0 0
      %2146 = vmatpush.bf16.msra.mxu0 0
      %2147 = vmatpush.bf16.msra.mxu0 0
      %2148 = vmatpush.bf16.msra.mxu0 0
      %2149 = vmatpush.bf16.msra.mxu0 0
      %2150 = vmatpush.bf16.msra.mxu0 %v2138
      %2151 = vmatmul.bf16.gmra.mxu0 %v745
      %v2152 = vpop.f32.mrf.mxu0
      %v2153 = vadd.f32 %v618, %v2152
      %v2154 = vpop.f32.mrf.mxu0
      %v2155 = vadd.f32 %v623, %v2154
      %2156 = vmatmul.bf16.gmra.mxu0 %v748
      %v2157 = vpop.f32.mrf.mxu0
      %v2158 = vadd.f32 %v628, %v2157
      %v2159 = vpop.f32.mrf.mxu0
      %v2160 = vadd.f32 %v633, %v2159
      %2161 = vmatmul.bf16.gmra.mxu0 %v751
      %v2162 = vpop.f32.mrf.mxu0
      %v2163 = vadd.f32 %v638, %v2162
      %v2164 = vpop.f32.mrf.mxu0
      %v2165 = vadd.f32 %v643, %v2164
      %2166 = vmatmul.bf16.gmra.mxu0 %v754
      %v2167 = vpop.f32.mrf.mxu0
      %v2168 = vadd.f32 %v648, %v2167
      %v2169 = vpop.f32.mrf.mxu0
      %v2170 = vadd.f32 %v653, %v2169
      %2171 = vmatmul.bf16.gmra.mxu0 %v757
      %v2172 = vpop.f32.mrf.mxu0
      %v2173 = vadd.f32 %v658, %v2172
      %v2174 = vpop.f32.mrf.mxu0
      %v2175 = vadd.f32 %v663, %v2174
      %2176 = vmatmul.bf16.gmra.mxu0 %v760
      %v2177 = vpop.f32.mrf.mxu0
      %v2178 = vadd.f32 %v668, %v2177
      %v2179 = vpop.f32.mrf.mxu0
      %v2180 = vadd.f32 %v673, %v2179
      %2181 = vmatmul.bf16.gmra.mxu0 %v763
      %v2182 = vpop.f32.mrf.mxu0
      %v2183 = vadd.f32 %v678, %v2182
      %v2184 = vpop.f32.mrf.mxu0
      %v2185 = vadd.f32 %v683, %v2184
      %2186 = vmatmul.bf16.gmra.mxu0 %v766
      %v2187 = vpop.f32.mrf.mxu0
      %v2188 = vadd.f32 %v688, %v2187
      %v2189 = vpop.f32.mrf.mxu0
      %v2190 = vadd.f32 %v693, %v2189
      %2191 = vdwg.mxu0
      %2192 = vmatpush.bf16.msra.mxu0 0
      %2193 = vmatpush.bf16.msra.mxu0 0
      %2194 = vmatpush.bf16.msra.mxu0 0
      %2195 = vmatpush.bf16.msra.mxu0 0
      %2196 = vmatpush.bf16.msra.mxu0 0
      %2197 = vmatpush.bf16.msra.mxu0 0
      %2198 = vmatpush.bf16.msra.mxu0 0
      %2199 = vmatpush.bf16.msra.mxu0 %v2141
      %2200 = vmatmul.bf16.gmra.mxu0 %v745
      %v2201 = vpop.f32.mrf.mxu0
      %v2202 = vadd.f32 %v618, %v2201
      %v2203 = vpop.f32.mrf.mxu0
      %v2204 = vadd.f32 %v623, %v2203
      %2205 = vmatmul.bf16.gmra.mxu0 %v748
      %v2206 = vpop.f32.mrf.mxu0
      %v2207 = vadd.f32 %v628, %v2206
      %v2208 = vpop.f32.mrf.mxu0
      %v2209 = vadd.f32 %v633, %v2208
      %2210 = vmatmul.bf16.gmra.mxu0 %v751
      %v2211 = vpop.f32.mrf.mxu0
      %v2212 = vadd.f32 %v638, %v2211
      %v2213 = vpop.f32.mrf.mxu0
      %v2214 = vadd.f32 %v643, %v2213
      %2215 = vmatmul.bf16.gmra.mxu0 %v754
      %v2216 = vpop.f32.mrf.mxu0
      %v2217 = vadd.f32 %v648, %v2216
      %v2218 = vpop.f32.mrf.mxu0
      %v2219 = vadd.f32 %v653, %v2218
      %2220 = vmatmul.bf16.gmra.mxu0 %v757
      %v2221 = vpop.f32.mrf.mxu0
      %v2222 = vadd.f32 %v658, %v2221
      %v2223 = vpop.f32.mrf.mxu0
      %v2224 = vadd.f32 %v663, %v2223
      %2225 = vmatmul.bf16.gmra.mxu0 %v760
      %v2226 = vpop.f32.mrf.mxu0
      %v2227 = vadd.f32 %v668, %v2226
      %v2228 = vpop.f32.mrf.mxu0
      %v2229 = vadd.f32 %v673, %v2228
      %2230 = vmatmul.bf16.gmra.mxu0 %v763
      %v2231 = vpop.f32.mrf.mxu0
      %v2232 = vadd.f32 %v678, %v2231
      %v2233 = vpop.f32.mrf.mxu0
      %v2234 = vadd.f32 %v683, %v2233
      %2235 = vmatmul.bf16.gmra.mxu0 %v766
      %v2236 = vpop.f32.mrf.mxu0
      %v2237 = vadd.f32 %v688, %v2236
      %v2238 = vpop.f32.mrf.mxu0
      %v2239 = vadd.f32 %v693, %v2238
      %2240 = vdwg.mxu0
      %v2241 = vmax.f32 %v2153, 0.0
      %v2242 = vmax.f32 %v2202, 0.0
      %v2243 = vmax.f32 %v2155, 0.0
      %v2244 = vmax.f32 %v2204, 0.0
      %v2245 = vmax.f32 %v2158, 0.0
      %v2246 = vmax.f32 %v2207, 0.0
      %v2247 = vmax.f32 %v2160, 0.0
      %v2248 = vmax.f32 %v2209, 0.0
      %v2249 = vmax.f32 %v2163, 0.0
      %v2250 = vmax.f32 %v2212, 0.0
      %v2251 = vmax.f32 %v2165, 0.0
      %v2252 = vmax.f32 %v2214, 0.0
      %v2253 = vmax.f32 %v2168, 0.0
      %v2254 = vmax.f32 %v2217, 0.0
      %v2255 = vmax.f32 %v2170, 0.0
      %v2256 = vmax.f32 %v2219, 0.0
      %v2257 = vmax.f32 %v2173, 0.0
      %v2258 = vmax.f32 %v2222, 0.0
      %v2259 = vmax.f32 %v2175, 0.0
      %v2260 = vmax.f32 %v2224, 0.0
      %v2261 = vmax.f32 %v2178, 0.0
      %v2262 = vmax.f32 %v2227, 0.0
      %v2263 = vmax.f32 %v2180, 0.0
      %v2264 = vmax.f32 %v2229, 0.0
      %v2265 = vmax.f32 %v2183, 0.0
      %v2266 = vmax.f32 %v2232, 0.0
      %v2267 = vmax.f32 %v2185, 0.0
      %v2268 = vmax.f32 %v2234, 0.0
      %v2269 = vmax.f32 %v2188, 0.0
      %v2270 = vmax.f32 %v2237, 0.0
      %v2271 = vmax.f32 %v2190, 0.0
      %v2272 = vmax.f32 %v2239, 0.0
      %v2273 = vadd.f32 %v2241, %v2242
      %2274 = vadd.xlane.f32.xlu0 %v2273
      %v2275 = vpop.xlane.xlu0 %2274
      %v2276 = vadd.f32 %v2243, %v2244
      %2277 = vadd.xlane.f32.xlu0 %v2276
      %v2278 = vpop.xlane.xlu0 %2277
      %v2279 = vadd.f32 %v2245, %v2246
      %2280 = vadd.xlane.f32.xlu0 %v2279
      %v2281 = vpop.xlane.xlu0 %2280
      %v2282 = vadd.f32 %v2247, %v2248
      %2283 = vadd.xlane.f32.xlu0 %v2282
      %v2284 = vpop.xlane.xlu0 %2283
      %v2285 = vadd.f32 %v2249, %v2250
      %2286 = vadd.xlane.f32.xlu0 %v2285
      %v2287 = vpop.xlane.xlu0 %2286
      %v2288 = vadd.f32 %v2251, %v2252
      %2289 = vadd.xlane.f32.xlu0 %v2288
      %v2290 = vpop.xlane.xlu0 %2289
      %v2291 = vadd.f32 %v2253, %v2254
      %2292 = vadd.xlane.f32.xlu0 %v2291
      %v2293 = vpop.xlane.xlu0 %2292
      %v2294 = vadd.f32 %v2255, %v2256
      %2295 = vadd.xlane.f32.xlu0 %v2294
      %v2296 = vpop.xlane.xlu0 %2295
      %v2297 = vadd.f32 %v2257, %v2258
      %2298 = vadd.xlane.f32.xlu0 %v2297
      %v2299 = vpop.xlane.xlu0 %2298
      %v2300 = vadd.f32 %v2259, %v2260
      %2301 = vadd.xlane.f32.xlu0 %v2300
      %v2302 = vpop.xlane.xlu0 %2301
      %v2303 = vadd.f32 %v2261, %v2262
      %2304 = vadd.xlane.f32.xlu0 %v2303
      %v2305 = vpop.xlane.xlu0 %2304
      %v2306 = vadd.f32 %v2263, %v2264
      %2307 = vadd.xlane.f32.xlu0 %v2306
      %v2308 = vpop.xlane.xlu0 %2307
      %v2309 = vadd.f32 %v2265, %v2266
      %2310 = vadd.xlane.f32.xlu0 %v2309
      %v2311 = vpop.xlane.xlu0 %2310
      %v2312 = vadd.f32 %v2267, %v2268
      %2313 = vadd.xlane.f32.xlu0 %v2312
      %v2314 = vpop.xlane.xlu0 %2313
      %v2315 = vadd.f32 %v2269, %v2270
      %2316 = vadd.xlane.f32.xlu0 %v2315
      %v2317 = vpop.xlane.xlu0 %2316
      %v2318 = vadd.f32 %v2271, %v2272
      %2319 = vadd.xlane.f32.xlu0 %v2318
      %v2320 = vpop.xlane.xlu0 %2319
      %v2321 = vld [vmem:[#allocation2] sm:$0xff]
      %v2322 = vld [vmem:[#allocation2 + $0x8] sm:$0xff]
      %v2323 = vld [vmem:[#allocation2 + $0x10] sm:$0xff]
      %v2324 = vld [vmem:[#allocation2 + $0x18] sm:$0xff]
      %v2325 = vld [vmem:[#allocation2 + $0x20] sm:$0xff]
      %v2326 = vld [vmem:[#allocation2 + $0x28] sm:$0xff]
      %v2327 = vld [vmem:[#allocation2 + $0x30] sm:$0xff]
      %v2328 = vld [vmem:[#allocation2 + $0x38] sm:$0xff]
      %v2329 = vld [vmem:[#allocation2 + $0x40] sm:$0xff]
      %v2330 = vld [vmem:[#allocation2 + $0x48] sm:$0xff]
      %v2331 = vld [vmem:[#allocation2 + $0x50] sm:$0xff]
      %v2332 = vld [vmem:[#allocation2 + $0x58] sm:$0xff]
      %v2333 = vld [vmem:[#allocation2 + $0x60] sm:$0xff]
      %v2334 = vld [vmem:[#allocation2 + $0x68] sm:$0xff]
      %v2335 = vld [vmem:[#allocation2 + $0x70] sm:$0xff]
      %v2336 = vld [vmem:[#allocation2 + $0x78] sm:$0xff]
      %vm2337 = vcmask 7168
      %v2338 = vsel %vm2337, %v910, %v1105
      %v2339 = vsel %vm2337, %v913, %v1108
      %v2340 = vsel %vm2337, %v916, %v1111
      %v2341 = vsel %vm2337, %v919, %v1114
      %v2342 = vsel %vm2337, %v922, %v1117
      %v2343 = vsel %vm2337, %v925, %v1120
      %v2344 = vsel %vm2337, %v928, %v1123
      %v2345 = vsel %vm2337, %v931, %v1126
      %v2346 = vsel %vm2337, %v934, %v1129
      %v2347 = vsel %vm2337, %v937, %v1132
      %v2348 = vsel %vm2337, %v940, %v1135
      %v2349 = vsel %vm2337, %v943, %v1138
      %v2350 = vsel %vm2337, %v946, %v1141
      %v2351 = vsel %vm2337, %v949, %v1144
      %v2352 = vsel %vm2337, %v952, %v1147
      %v2353 = vsel %vm2337, %v955, %v1150
      %vm2354 = vcmask 15360
      %v2355 = vsel %vm2354, %v2338, %v1300
      %v2356 = vsel %vm2354, %v2339, %v1303
      %v2357 = vsel %vm2354, %v2340, %v1306
      %v2358 = vsel %vm2354, %v2341, %v1309
      %v2359 = vsel %vm2354, %v2342, %v1312
      %v2360 = vsel %vm2354, %v2343, %v1315
      %v2361 = vsel %vm2354, %v2344, %v1318
      %v2362 = vsel %vm2354, %v2345, %v1321
      %v2363 = vsel %vm2354, %v2346, %v1324
      %v2364 = vsel %vm2354, %v2347, %v1327
      %v2365 = vsel %vm2354, %v2348, %v1330
      %v2366 = vsel %vm2354, %v2349, %v1333
      %v2367 = vsel %vm2354, %v2350, %v1336
      %v2368 = vsel %vm2354, %v2351, %v1339
      %v2369 = vsel %vm2354, %v2352, %v1342
      %v2370 = vsel %vm2354, %v2353, %v1345
      %vm2371 = vcmask 23552
      %v2372 = vsel %vm2371, %v2355, %v1495
      %v2373 = vsel %vm2371, %v2356, %v1498
      %v2374 = vsel %vm2371, %v2357, %v1501
      %v2375 = vsel %vm2371, %v2358, %v1504
      %v2376 = vsel %vm2371, %v2359, %v1507
      %v2377 = vsel %vm2371, %v2360, %v1510
      %v2378 = vsel %vm2371, %v2361, %v1513
      %v2379 = vsel %vm2371, %v2362, %v1516
      %v2380 = vsel %vm2371, %v2363, %v1519
      %v2381 = vsel %vm2371, %v2364, %v1522
      %v2382 = vsel %vm2371, %v2365, %v1525
      %v2383 = vsel %vm2371, %v2366, %v1528
      %v2384 = vsel %vm2371, %v2367, %v1531
      %v2385 = vsel %vm2371, %v2368, %v1534
      %v2386 = vsel %vm2371, %v2369, %v1537
      %v2387 = vsel %vm2371, %v2370, %v1540
      %vm2388 = vcmask 31744
      %v2389 = vsel %vm2388, %v2372, %v1690
      %v2390 = vsel %vm2388, %v2373, %v1693
      %v2391 = vsel %vm2388, %v2374, %v1696
      %v2392 = vsel %vm2388, %v2375, %v1699
      %v2393 = vsel %vm2388, %v2376, %v1702
      %v2394 = vsel %vm2388, %v2377, %v1705
      %v2395 = vsel %vm2388, %v2378, %v1708
      %v2396 = vsel %vm2388, %v2379, %v1711
      %v2397 = vsel %vm2388, %v2380, %v1714
      %v2398 = vsel %vm2388, %v2381, %v1717
      %v2399 = vsel %vm2388, %v2382, %v1720
      %v2400 = vsel %vm2388, %v2383, %v1723
      %v2401 = vsel %vm2388, %v2384, %v1726
      %v2402 = vsel %vm2388, %v2385, %v1729
      %v2403 = vsel %vm2388, %v2386, %v1732
      %v2404 = vsel %vm2388, %v2387, %v1735
      %vm2405 = vcmask 39936
      %v2406 = vsel %vm2405, %v2389, %v1885
      %v2407 = vsel %vm2405, %v2390, %v1888
      %v2408 = vsel %vm2405, %v2391, %v1891
      %v2409 = vsel %vm2405, %v2392, %v1894
      %v2410 = vsel %vm2405, %v2393, %v1897
      %v2411 = vsel %vm2405, %v2394, %v1900
      %v2412 = vsel %vm2405, %v2395, %v1903
      %v2413 = vsel %vm2405, %v2396, %v1906
      %v2414 = vsel %vm2405, %v2397, %v1909
      %v2415 = vsel %vm2405, %v2398, %v1912
      %v2416 = vsel %vm2405, %v2399, %v1915
      %v2417 = vsel %vm2405, %v2400, %v1918
      %v2418 = vsel %vm2405, %v2401, %v1921
      %v2419 = vsel %vm2405, %v2402, %v1924
      %v2420 = vsel %vm2405, %v2403, %v1927
      %v2421 = vsel %vm2405, %v2404, %v1930
      %vm2422 = vcmask 48128
      %v2423 = vsel %vm2422, %v2406, %v2080
      %v2424 = vsel %vm2422, %v2407, %v2083
      %v2425 = vsel %vm2422, %v2408, %v2086
      %v2426 = vsel %vm2422, %v2409, %v2089
      %v2427 = vsel %vm2422, %v2410, %v2092
      %v2428 = vsel %vm2422, %v2411, %v2095
      %v2429 = vsel %vm2422, %v2412, %v2098
      %v2430 = vsel %vm2422, %v2413, %v2101
      %v2431 = vsel %vm2422, %v2414, %v2104
      %v2432 = vsel %vm2422, %v2415, %v2107
      %v2433 = vsel %vm2422, %v2416, %v2110
      %v2434 = vsel %vm2422, %v2417, %v2113
      %v2435 = vsel %vm2422, %v2418, %v2116
      %v2436 = vsel %vm2422, %v2419, %v2119
      %v2437 = vsel %vm2422, %v2420, %v2122
      %v2438 = vsel %vm2422, %v2421, %v2125
      %vm2439 = vcmask 56320
      %v2440 = vsel %vm2439, %v2423, %v2275
      %v2441 = vsel %vm2439, %v2424, %v2278
      %v2442 = vsel %vm2439, %v2425, %v2281
      %v2443 = vsel %vm2439, %v2426, %v2284
      %v2444 = vsel %vm2439, %v2427, %v2287
      %v2445 = vsel %vm2439, %v2428, %v2290
      %v2446 = vsel %vm2439, %v2429, %v2293
      %v2447 = vsel %vm2439, %v2430, %v2296
      %v2448 = vsel %vm2439, %v2431, %v2299
      %v2449 = vsel %vm2439, %v2432, %v2302
      %v2450 = vsel %vm2439, %v2433, %v2305
      %v2451 = vsel %vm2439, %v2434, %v2308
      %v2452 = vsel %vm2439, %v2435, %v2311
      %v2453 = vsel %vm2439, %v2436, %v2314
      %v2454 = vsel %vm2439, %v2437, %v2317
      %v2455 = vsel %vm2439, %v2438, %v2320
      %v2456 = vadd.f32 %v2321, %v2440
      %v2457 = vadd.f32 %v2322, %v2441
      %v2458 = vadd.f32 %v2323, %v2442
      %v2459 = vadd.f32 %v2324, %v2443
      %v2460 = vadd.f32 %v2325, %v2444
      %v2461 = vadd.f32 %v2326, %v2445
      %v2462 = vadd.f32 %v2327, %v2446
      %v2463 = vadd.f32 %v2328, %v2447
      %v2464 = vadd.f32 %v2329, %v2448
      %v2465 = vadd.f32 %v2330, %v2449
      %v2466 = vadd.f32 %v2331, %v2450
      %v2467 = vadd.f32 %v2332, %v2451
      %v2468 = vadd.f32 %v2333, %v2452
      %v2469 = vadd.f32 %v2334, %v2453
      %v2470 = vadd.f32 %v2335, %v2454
      %v2471 = vadd.f32 %v2336, %v2455
      %vm2472 = vcmask 64512
      %2473 = vst.msk [vmem:[#allocation2] sm:$0xff] %vm2472, %v2456
      %2474 = vst.msk [vmem:[#allocation2 + $0x8] sm:$0xff] %vm2472, %v2457
      %2475 = vst.msk [vmem:[#allocation2 + $0x10] sm:$0xff] %vm2472, %v2458
      %2476 = vst.msk [vmem:[#allocation2 + $0x18] sm:$0xff] %vm2472, %v2459
      %2477 = vst.msk [vmem:[#allocation2 + $0x20] sm:$0xff] %vm2472, %v2460
      %2478 = vst.msk [vmem:[#allocation2 + $0x28] sm:$0xff] %vm2472, %v2461
      %2479 = vst.msk [vmem:[#allocation2 + $0x30] sm:$0xff] %vm2472, %v2462
      %2480 = vst.msk [vmem:[#allocation2 + $0x38] sm:$0xff] %vm2472, %v2463
      %2481 = vst.msk [vmem:[#allocation2 + $0x40] sm:$0xff] %vm2472, %v2464
      %2482 = vst.msk [vmem:[#allocation2 + $0x48] sm:$0xff] %vm2472, %v2465
      %2483 = vst.msk [vmem:[#allocation2 + $0x50] sm:$0xff] %vm2472, %v2466
      %2484 = vst.msk [vmem:[#allocation2 + $0x58] sm:$0xff] %vm2472, %v2467
      %2485 = vst.msk [vmem:[#allocation2 + $0x60] sm:$0xff] %vm2472, %v2468
      %2486 = vst.msk [vmem:[#allocation2 + $0x68] sm:$0xff] %vm2472, %v2469
      %2487 = vst.msk [vmem:[#allocation2 + $0x70] sm:$0xff] %vm2472, %v2470
      %2488 = vst.msk [vmem:[#allocation2 + $0x78] sm:$0xff] %vm2472, %v2471
      // Predicated region
      $region65: #{caco_forward_sym.1} parent=59 // pred_check
        %p2489 = pneg %p560
      $region66: #{caco_forward_sym.1} parent=59 // pred_check_branch
        %2491 = sbr.rel (%p2489) target = $region68
      $region67: #{caco_forward_sym.1} parent=59 // pred_region
        %v2492 = vld [vmem:[#allocation2] sm:$0xff]
        %v2493 = vld [vmem:[#allocation2 + $0x8] sm:$0xff]
        %v2494 = vld [vmem:[#allocation2 + $0x10] sm:$0xff]
        %v2495 = vld [vmem:[#allocation2 + $0x18] sm:$0xff]
        %v2496 = vld [vmem:[#allocation2 + $0x20] sm:$0xff]
        %v2497 = vld [vmem:[#allocation2 + $0x28] sm:$0xff]
        %v2498 = vld [vmem:[#allocation2 + $0x30] sm:$0xff]
        %v2499 = vld [vmem:[#allocation2 + $0x38] sm:$0xff]
        %v2500 = vld [vmem:[#allocation2 + $0x40] sm:$0xff]
        %v2501 = vld [vmem:[#allocation2 + $0x48] sm:$0xff]
        %v2502 = vld [vmem:[#allocation2 + $0x50] sm:$0xff]
        %v2503 = vld [vmem:[#allocation2 + $0x58] sm:$0xff]
        %v2504 = vld [vmem:[#allocation2 + $0x60] sm:$0xff]
        %v2505 = vld [vmem:[#allocation2 + $0x68] sm:$0xff]
        %v2506 = vld [vmem:[#allocation2 + $0x70] sm:$0xff]
        %v2507 = vld [vmem:[#allocation2 + $0x78] sm:$0xff]
        %2508 = vxpose.xlu0.b32.start [1/16] %v2492, 128
        %2509 = vxpose.xlu0.b32.cont [2/16] %v2493, 128
        %2510 = vxpose.xlu0.b32.cont [3/16] %v2494, 128
        %2511 = vxpose.xlu0.b32.cont [4/16] %v2495, 128
        %2512 = vxpose.xlu0.b32.cont [5/16] %v2496, 128
        %2513 = vxpose.xlu0.b32.cont [6/16] %v2497, 128
        %2514 = vxpose.xlu0.b32.cont [7/16] %v2498, 128
        %2515 = vxpose.xlu0.b32.cont [8/16] %v2499, 128
        %2516 = vxpose.xlu0.b32.cont [9/16] %v2500, 128
        %2517 = vxpose.xlu0.b32.cont [10/16] %v2501, 128
        %2518 = vxpose.xlu0.b32.cont [11/16] %v2502, 128
        %2519 = vxpose.xlu0.b32.cont [12/16] %v2503, 128
        %2520 = vxpose.xlu0.b32.cont [13/16] %v2504, 128
        %2521 = vxpose.xlu0.b32.cont [14/16] %v2505, 128
        %2522 = vxpose.xlu0.b32.cont [15/16] %v2506, 128
        %2523 = vxpose.xlu0.b32.end [16/16] %v2507, 128
        %v2524 = vpop.trf.xlu0
        %v2525 = vpop.trf.xlu0
        %v2526 = vpop.trf.xlu0
        %v2527 = vpop.trf.xlu0
        %v2528 = vpop.trf.xlu0
        %v2529 = vpop.trf.xlu0
        %v2530 = vpop.trf.xlu0
        %v2531 = vpop.trf.xlu0
        %v2532 = vpop.trf.xlu0
        %v2533 = vpop.trf.xlu0
        %v2534 = vpop.trf.xlu0
        %v2535 = vpop.trf.xlu0
        %v2536 = vpop.trf.xlu0
        %v2537 = vpop.trf.xlu0
        %v2538 = vpop.trf.xlu0
        %v2539 = vpop.trf.xlu0
        %v2540 = vmul.f32 %v2524, 0.00390625
        %v2541 = vpack.c.bf16 %v2540, %v2540
        %v2542 = vld [vmem:[%s528] sm:$0xf]
        %v2543 = vld [vmem:[%s528 + $0x4] sm:$0xf]
        %v2544 = vld [vmem:[%s528 + $0x8] sm:$0xf]
        %v2545 = vld [vmem:[%s528 + $0xc] sm:$0xf]
        %v2546 = vld [vmem:[%s528 + $0x10] sm:$0xf]
        %v2547 = vld [vmem:[%s528 + $0x14] sm:$0xf]
        %v2548 = vld [vmem:[%s528 + $0x18] sm:$0xf]
        %v2549 = vld [vmem:[%s528 + $0x1c] sm:$0xf]
        %v2550 = vld [vmem:[%s528 + $0x20] sm:$0xf]
        %v2551 = vld [vmem:[%s528 + $0x24] sm:$0xf]
        %v2552 = vld [vmem:[%s528 + $0x28] sm:$0xf]
        %v2553 = vld [vmem:[%s528 + $0x2c] sm:$0xf]
        %v2554 = vld [vmem:[%s528 + $0x30] sm:$0xf]
        %v2555 = vld [vmem:[%s528 + $0x34] sm:$0xf]
        %v2556 = vld [vmem:[%s528 + $0x38] sm:$0xf]
        %v2557 = vld [vmem:[%s528 + $0x3c] sm:$0xf]
        %v2574 = vunpack.c.l.b16 %v2542
        %v2575 = vunpack.c.l.b16 %v2543
        %v2576 = vunpack.c.l.b16 %v2544
        %v2577 = vunpack.c.l.b16 %v2545
        %v2578 = vunpack.c.l.b16 %v2546
        %v2579 = vunpack.c.l.b16 %v2547
        %v2580 = vunpack.c.l.b16 %v2548
        %v2581 = vunpack.c.l.b16 %v2549
        %v2582 = vunpack.c.l.b16 %v2550
        %v2583 = vunpack.c.l.b16 %v2551
        %v2584 = vunpack.c.l.b16 %v2552
        %v2585 = vunpack.c.l.b16 %v2553
        %v2586 = vunpack.c.l.b16 %v2554
        %v2587 = vunpack.c.l.b16 %v2555
        %v2588 = vunpack.c.l.b16 %v2556
        %v2589 = vunpack.c.l.b16 %v2557
        %v2590 = vpack.c.b16 %v2575, %v2574
        %v2591 = vpack.c.b16 %v2577, %v2576
        %v2592 = vpack.c.b16 %v2579, %v2578
        %v2593 = vpack.c.b16 %v2581, %v2580
        %v2594 = vpack.c.b16 %v2583, %v2582
        %v2595 = vpack.c.b16 %v2585, %v2584
        %v2596 = vpack.c.b16 %v2587, %v2586
        %v2597 = vpack.c.b16 %v2589, %v2588
        %2606 = vmatpush.bf16.msra.mxu0 %v2597
        %2607 = vmatpush.bf16.msra.mxu0 %v2596
        %2608 = vmatpush.bf16.msra.mxu0 %v2595
        %2609 = vmatpush.bf16.msra.mxu0 %v2594
        %2610 = vmatpush.bf16.msra.mxu0 %v2593
        %2611 = vmatpush.bf16.msra.mxu0 %v2592
        %2612 = vmatpush.bf16.msra.mxu0 %v2591
        %2613 = vmatpush.bf16.msra.mxu0 %v2590
        %2614 = vmatmul.bf16.gmra.mxu0 %v2541
        %v2615 = vpop.f32.mrf.mxu0
        %v2616 = vadd.f32 0.0, %v2615
        %v2617 = vpop.f32.mrf.mxu0
        %2618 = vdwg.mxu0
        %v2619 = vld [vmem:[%s531] sm:$0x1]
        %v2620 = vld [vmem:[%s534] sm:$0x1]
        %v2621 = vrot.slane %v2616, 4
        %v2622 = vadd.f32 %v2616, %v2621
        %v2623 = vrot.slane %v2622, 2
        %v2624 = vadd.f32 %v2622, %v2623
        %v2625 = vrot.slane %v2624, 1
        %v2626 = vadd.f32 %v2624, %v2625
        %v2627 = vrcp.pop 8.0
        %v2628 = vmul.f32 8.0, %v2627
        %v2629 = vsub.f32 1.0, %v2628
        %v2630 = vmul.f32 %v2627, %v2629
        %v2631 = vadd.f32 %v2627, %v2630
        %vm2632 = vweird.f32 %v2627
        %v2633 = vsel %vm2632, %v2627, %v2631
        %v2634 = vmul.f32 %v2626, %v2633
        %v2635 = vsub.f32 %v2616, %v2634
        %v2636 = vmul.f32 %v2635, %v2635
        %v2637 = vrot.slane %v2636, 4
        %v2638 = vadd.f32 %v2636, %v2637
        %v2639 = vrot.slane %v2638, 2
        %v2640 = vadd.f32 %v2638, %v2639
        %v2641 = vrot.slane %v2640, 1
        %v2642 = vadd.f32 %v2640, %v2641
        %v2643 = vmul.f32 %v2642, %v2633
        %v2644 = vadd.f32 %v2643, 1e-05
        %v2645 = vrsqrt.pop %v2644
        %v2646 = vmul.f32 %v2645, %v2644
        %v2647 = vmul.f32 %v2646, %v2645
        %v2648 = vmul.f32 0.5, %v2647
        %v2649 = vsub.f32 1.5, %v2648
        %v2650 = vmul.f32 %v2645, %v2649
        %vm2651 = vweird.f32 %v2644
        %vm2652 = vweird.f32 %v2645
        %vm2653 = vmor %vm2651, %vm2652
        %v2654 = vsel %vm2653, %v2645, %v2650
        %v2655 = vmul.f32 %v2635, %v2654
        %v2657 = vperm.slane %v2619, 0
        %v2659 = vmul.f32 %v2655, %v2657
        %v2661 = vperm.slane %v2620, 0
        %v2663 = vadd.f32 %v2659, %v2661
        %v2664 = vmax.f32 %v2663, 0.0
        %v2665 = vpack.c.bf16 %v2664, %v2664
        %v2666 = vld [vmem:[%s539] sm:$0xf]
        %v2667 = vld [vmem:[%s539 + $0x4] sm:$0xf]
        %v2668 = vld [vmem:[%s539 + $0x8] sm:$0xf]
        %v2669 = vld [vmem:[%s539 + $0xc] sm:$0xf]
        %v2670 = vld [vmem:[%s539 + $0x10] sm:$0xf]
        %v2671 = vld [vmem:[%s539 + $0x14] sm:$0xf]
        %v2672 = vld [vmem:[%s539 + $0x18] sm:$0xf]
        %v2673 = vld [vmem:[%s539 + $0x1c] sm:$0xf]
        %v2674 = vld [vmem:[%s539 + $0x20] sm:$0xf]
        %v2675 = vld [vmem:[%s539 + $0x24] sm:$0xf]
        %v2676 = vld [vmem:[%s539 + $0x28] sm:$0xf]
        %v2677 = vld [vmem:[%s539 + $0x2c] sm:$0xf]
        %v2678 = vld [vmem:[%s539 + $0x30] sm:$0xf]
        %v2679 = vld [vmem:[%s539 + $0x34] sm:$0xf]
        %v2680 = vld [vmem:[%s539 + $0x38] sm:$0xf]
        %v2681 = vld [vmem:[%s539 + $0x3c] sm:$0xf]
        %v2698 = vunpack.c.l.b16 %v2666
        %v2699 = vunpack.c.l.b16 %v2667
        %v2700 = vunpack.c.l.b16 %v2668
        %v2701 = vunpack.c.l.b16 %v2669
        %v2702 = vunpack.c.l.b16 %v2670
        %v2703 = vunpack.c.l.b16 %v2671
        %v2704 = vunpack.c.l.b16 %v2672
        %v2705 = vunpack.c.l.b16 %v2673
        %v2706 = vunpack.c.l.b16 %v2674
        %v2707 = vunpack.c.l.b16 %v2675
        %v2708 = vunpack.c.l.b16 %v2676
        %v2709 = vunpack.c.l.b16 %v2677
        %v2710 = vunpack.c.l.b16 %v2678
        %v2711 = vunpack.c.l.b16 %v2679
        %v2712 = vunpack.c.l.b16 %v2680
        %v2713 = vunpack.c.l.b16 %v2681
        %v2714 = vpack.c.b16 %v2699, %v2698
        %v2715 = vpack.c.b16 %v2701, %v2700
        %v2716 = vpack.c.b16 %v2703, %v2702
        %v2717 = vpack.c.b16 %v2705, %v2704
        %v2718 = vpack.c.b16 %v2707, %v2706
        %v2719 = vpack.c.b16 %v2709, %v2708
        %v2720 = vpack.c.b16 %v2711, %v2710
        %v2721 = vpack.c.b16 %v2713, %v2712
        %2730 = vmatpush.bf16.msra.mxu0 %v2721
        %2731 = vmatpush.bf16.msra.mxu0 %v2720
        %2732 = vmatpush.bf16.msra.mxu0 %v2719
        %2733 = vmatpush.bf16.msra.mxu0 %v2718
        %2734 = vmatpush.bf16.msra.mxu0 %v2717
        %2735 = vmatpush.bf16.msra.mxu0 %v2716
        %2736 = vmatpush.bf16.msra.mxu0 %v2715
        %2737 = vmatpush.bf16.msra.mxu0 %v2714
        %2738 = vmatmul.bf16.gmra.mxu0 %v2665
        %v2739 = vpop.f32.mrf.mxu0
        %v2740 = vadd.f32 0.0, %v2739
        %v2741 = vpop.f32.mrf.mxu0
        %2742 = vdwg.mxu0
        %v2743 = vld [vmem:[%s542] sm:$0x1]
        %v2744 = vld [vmem:[%s545] sm:$0x1]
        %v2745 = vrot.slane %v2740, 4
        %v2746 = vadd.f32 %v2740, %v2745
        %v2747 = vrot.slane %v2746, 2
        %v2748 = vadd.f32 %v2746, %v2747
        %v2749 = vrot.slane %v2748, 1
        %v2750 = vadd.f32 %v2748, %v2749
        %v2751 = vmul.f32 %v2750, %v2633
        %v2752 = vsub.f32 %v2740, %v2751
        %v2753 = vmul.f32 %v2752, %v2752
        %v2754 = vrot.slane %v2753, 4
        %v2755 = vadd.f32 %v2753, %v2754
        %v2756 = vrot.slane %v2755, 2
        %v2757 = vadd.f32 %v2755, %v2756
        %v2758 = vrot.slane %v2757, 1
        %v2759 = vadd.f32 %v2757, %v2758
        %v2760 = vmul.f32 %v2759, %v2633
        %v2761 = vadd.f32 %v2760, 1e-05
        %v2762 = vrsqrt.pop %v2761
        %v2763 = vmul.f32 %v2762, %v2761
        %v2764 = vmul.f32 %v2763, %v2762
        %v2765 = vmul.f32 0.5, %v2764
        %v2766 = vsub.f32 1.5, %v2765
        %v2767 = vmul.f32 %v2762, %v2766
        %vm2768 = vweird.f32 %v2761
        %vm2769 = vweird.f32 %v2762
        %vm2770 = vmor %vm2768, %vm2769
        %v2771 = vsel %vm2770, %v2762, %v2767
        %v2772 = vmul.f32 %v2752, %v2771
        %v2774 = vperm.slane %v2743, 0
        %v2776 = vmul.f32 %v2772, %v2774
        %v2778 = vperm.slane %v2744, 0
        %v2780 = vadd.f32 %v2776, %v2778
        %v2781 = vmax.f32 %v2780, 0.0
        %v2782 = vpack.c.bf16 %v2781, %v2781
        %v2783 = vld [vmem:[%s550] sm:$0xf]
        %v2784 = vld [vmem:[%s550 + $0x4] sm:$0xf]
        %v2785 = vld [vmem:[%s550 + $0x8] sm:$0xf]
        %v2786 = vld [vmem:[%s550 + $0xc] sm:$0xf]
        %v2787 = vld [vmem:[%s550 + $0x10] sm:$0xf]
        %v2788 = vld [vmem:[%s550 + $0x14] sm:$0xf]
        %v2789 = vld [vmem:[%s550 + $0x18] sm:$0xf]
        %v2790 = vld [vmem:[%s550 + $0x1c] sm:$0xf]
        %v2791 = vld [vmem:[%s550 + $0x20] sm:$0xf]
        %v2792 = vld [vmem:[%s550 + $0x24] sm:$0xf]
        %v2793 = vld [vmem:[%s550 + $0x28] sm:$0xf]
        %v2794 = vld [vmem:[%s550 + $0x2c] sm:$0xf]
        %v2795 = vld [vmem:[%s550 + $0x30] sm:$0xf]
        %v2796 = vld [vmem:[%s550 + $0x34] sm:$0xf]
        %v2797 = vld [vmem:[%s550 + $0x38] sm:$0xf]
        %v2798 = vld [vmem:[%s550 + $0x3c] sm:$0xf]
        %v2815 = vunpack.c.l.b16 %v2783
        %v2816 = vunpack.c.l.b16 %v2784
        %v2817 = vunpack.c.l.b16 %v2785
        %v2818 = vunpack.c.l.b16 %v2786
        %v2819 = vunpack.c.l.b16 %v2787
        %v2820 = vunpack.c.l.b16 %v2788
        %v2821 = vunpack.c.l.b16 %v2789
        %v2822 = vunpack.c.l.b16 %v2790
        %v2823 = vunpack.c.l.b16 %v2791
        %v2824 = vunpack.c.l.b16 %v2792
        %v2825 = vunpack.c.l.b16 %v2793
        %v2826 = vunpack.c.l.b16 %v2794
        %v2827 = vunpack.c.l.b16 %v2795
        %v2828 = vunpack.c.l.b16 %v2796
        %v2829 = vunpack.c.l.b16 %v2797
        %v2830 = vunpack.c.l.b16 %v2798
        %v2831 = vpack.c.b16 %v2816, %v2815
        %v2832 = vpack.c.b16 %v2818, %v2817
        %v2833 = vpack.c.b16 %v2820, %v2819
        %v2834 = vpack.c.b16 %v2822, %v2821
        %v2835 = vpack.c.b16 %v2824, %v2823
        %v2836 = vpack.c.b16 %v2826, %v2825
        %v2837 = vpack.c.b16 %v2828, %v2827
        %v2838 = vpack.c.b16 %v2830, %v2829
        %2847 = vmatpush.bf16.msra.mxu0 %v2838
        %2848 = vmatpush.bf16.msra.mxu0 %v2837
        %2849 = vmatpush.bf16.msra.mxu0 %v2836
        %2850 = vmatpush.bf16.msra.mxu0 %v2835
        %2851 = vmatpush.bf16.msra.mxu0 %v2834
        %2852 = vmatpush.bf16.msra.mxu0 %v2833
        %2853 = vmatpush.bf16.msra.mxu0 %v2832
        %2854 = vmatpush.bf16.msra.mxu0 %v2831
        %2855 = vmatmul.bf16.gmra.mxu0 %v2782
        %v2856 = vpop.f32.mrf.mxu0
        %v2857 = vadd.f32 0.0, %v2856
        %v2858 = vpop.f32.mrf.mxu0
        %2859 = vdwg.mxu0
        %v2860 = vmul.f32 %v2857, %v2857
        %2861 = vadd.xlane.f32.xlu0 %v2860
        %v2862 = vpop.xlane.xlu0 %2861
        %v2863 = vmax.f32 %v2862, 1e-24
        %v2864 = vrsqrt.pop %v2863
        %v2865 = vmul.f32 %v2864, %v2863
        %v2866 = vmul.f32 %v2865, %v2864
        %v2867 = vmul.f32 0.5, %v2866
        %v2868 = vsub.f32 1.5, %v2867
        %v2869 = vmul.f32 %v2864, %v2868
        %vm2870 = vweird.f32 %v2863
        %vm2871 = vweird.f32 %v2864
        %vm2872 = vmor %vm2870, %vm2871
        %v2873 = vsel %vm2872, %v2864, %v2869
        %v2874 = vmul.f32 %v2857, %v2873
        %2875 = vst [vmem:[%s558] sm:$0xff] %v2874
      $region68: #{caco_forward_sym.1} parent=59 // pred_fallthru
        _
      %p2876 = scmp.lt.s32.totalorder %s26, 1
      %s2877 = scalar_select %p2876, %s26, 1
      %p2878 = scmp.lt.s32.totalorder %s27, 1
      %s2879 = scalar_select %p2878, %s27, 1
      %s2880 = smul.addr %s2877, 2
      %s2881 = sadd.s32 %s2879, %s2880
      %s2882 = smul.addr %s2881, 8
      %s2883 = scalar_lea.vmem %s10, %s2882
      // Predicated region
      $region69: #{caco_forward_sym.1} parent=59 // pred_check
        %p2884 = pneg %p322
      $region70: #{caco_forward_sym.1} parent=59 // pred_check_branch
        %2886 = sbr.rel (%p2884) target = $region72
      $region71: #{caco_forward_sym.1} parent=59 // pred_region
        _
      $region72: #{caco_forward_sym.1} parent=59 // pred_fallthru
        _
    $region60: #{caco_forward_sym.1} parent=5 // pred_fallthru
      _
    %p2887 = scmp.le.s32.totalorder 2, %s16
    // Predicated region
    $region73: #{caco_forward_sym.1} parent=5 // pred_check
      %p2888 = pneg %p2887
    $region74: #{caco_forward_sym.1} parent=5 // pred_check_branch
      %2890 = sbr.rel (%p2888) target = $region76
    $region75: #{caco_forward_sym.1} parent=5 // pred_region
      %s2891 = ssub.s32 %s16, 2
      // Predicated region
      $region77: #{caco_forward_sym.1} parent=75 // pred_check
        %p2892 = pneg %p328
      $region78: #{caco_forward_sym.1} parent=75 // pred_check_branch
        %2894 = sbr.rel (%p2892) target = $region80
      $region79: #{caco_forward_sym.1} parent=75 // pred_region
        %p2895 = scmp.lt.s32.totalorder %s29, 1
        %s2896 = scalar_select %p2895, %s29, 1
        %p2897 = scmp.lt.s32.totalorder %s30, 1
        %s2898 = scalar_select %p2897, %s30, 1
        %s2899 = smul.addr %s2896, 2
        %s2900 = sadd.s32 %s2898, %s2899
        %s2901 = smul.addr %s2900, 8
        %s2902 = scalar_lea.vmem %s10, %s2901
      $region80: #{caco_forward_sym.1} parent=75 // pred_fallthru
        _
    $region76: #{caco_forward_sym.1} parent=5 // pred_fallthru
      _
  $region6: #{caco_forward_sym.1} parent=0 // loop_footer
    %s20 = sadd.s32 1, %s16
  $region7: #{caco_forward_sym.1} parent=0 // loop_footer_branch
    %15 = sbr.rel target = $region3
  $region8: #{caco_forward_sym.1} parent=0 // loop_exit
    _

</llo_original>
